<compile_context>
chip_gen: v7x
topology: tpu7x:2x2x1
jax: 0.10.0
libtpu: 0.0.40
codegen_flags: <defaults>
</compile_context>

<pallas_src>
import functools
import math

import jax
import jax.numpy as jnp
from jax.experimental import pallas as pl
from jax.experimental.pallas import tpu as pltpu


# ----------------------------- tiling targets --------------------------------
# v6e/v7x friendly defaults.  On v5e prefer TN_TARGET=128 / TK_TARGET=256 (same code).
TM_TARGET = 1024            # maximize rows per block -> weights cross HBM ~once per call
TN_TARGET = 256
TK_TARGET = 512
TQ_TARGET = 256             # attention query tile
TKV_TARGET = 512            # attention kv tile
VMEM_TILE_BUDGET = 20 * 1024 * 1024     # keep tiles well inside the scoped VMEM limit
VMEM_LIMIT = 32 * 1024 * 1024           # explicit scoped VMEM (also lifts v5e's 16 MiB default)
ACT_DTYPE = jnp.bfloat16    # inter-kernel activation dtype


def _pick_tile(dim, cap, granule):
    """Largest divisor of `dim` that is <= cap and a multiple of `granule`.
    Falls back to the full dimension (always a legal block) only if none exists."""
    cap = max(1, min(cap, dim))
    for t in range(cap, 0, -1):
        if dim % t == 0 and t % granule == 0:
            return t
    return dim


def _pick_m_tile(m, tile_bytes_fn, want_two_blocks=False):
    """Largest row tile that divides `m`, fits the VMEM tile budget, and (optionally)
    leaves >=2 row blocks so v7x's second TensorCore has work when the feature axis
    cannot be split."""
    tm = _pick_tile(m, TM_TARGET, 8)
    while tm > 8 and tile_bytes_fn(tm) > VMEM_TILE_BUDGET:
        smaller = _pick_tile(m, tm // 2, 8)
        if smaller >= tm:
            break
        tm = smaller
    if want_two_blocks and m // tm < 2 and m >= 256:
        smaller = _pick_tile(m, tm // 2, 8)
        if smaller < tm and m % smaller == 0:
            tm = smaller
    return tm


# ----------------------------- Pallas kernels --------------------------------

def _linear_kernel(x_ref, w_ref, b_ref, o_ref, acc_ref, *, activation):
    """Tiled matmul with K-accumulation; epilogue = bias (+ optional ReLU) + bf16 cast."""
    @pl.when(pl.program_id(2) == 0)
    def _():
        acc_ref[...] = jnp.zeros_like(acc_ref)

    acc_ref[...] += jnp.dot(x_ref[...].astype(jnp.bfloat16), w_ref[...],
                            preferred_element_type=jnp.float32)

    @pl.when(pl.program_id(2) == pl.num_programs(2) - 1)
    def _():
        y = acc_ref[...] + b_ref[...]
        if activation == "relu":
            y = jnp.maximum(y, 0.0)
        o_ref[...] = y.astype(o_ref.dtype)


def _linear_res_ln_kernel(x_ref, w_ref, b_ref, r_ref, g_ref, bb_ref,
                          o_ref, acc_ref, *, eps):
    """Tiled matmul with fused residual-add + LayerNorm epilogue (post-LN)."""
    @pl.when(pl.program_id(2) == 0)
    def _():
        acc_ref[...] = jnp.zeros_like(acc_ref)

    acc_ref[...] += jnp.dot(x_ref[...].astype(jnp.bfloat16), w_ref[...],
                            preferred_element_type=jnp.float32)

    @pl.when(pl.program_id(2) == pl.num_programs(2) - 1)
    def _():
        h = acc_ref[...] + b_ref[...] + r_ref[...].astype(jnp.float32)
        mean = jnp.mean(h, axis=-1, keepdims=True)
        cen = h - mean
        var = jnp.mean(cen * cen, axis=-1, keepdims=True)
        y = cen * jax.lax.rsqrt(var + eps) * g_ref[...] + bb_ref[...]
        o_ref[...] = y.astype(o_ref.dtype)


def _embed_pe_kernel(x_ref, w_ref, b_ref, pe_ref, o_ref, acc_ref):
    """Embedding matmul with fused positional-encoding add (no broadcast PE in HBM)."""
    @pl.when(pl.program_id(2) == 0)
    def _():
        acc_ref[...] = jnp.zeros_like(acc_ref)

    acc_ref[...] += jnp.dot(x_ref[0].astype(jnp.bfloat16), w_ref[...],
                            preferred_element_type=jnp.float32)

    @pl.when(pl.program_id(2) == pl.num_programs(2) - 1)
    def _():
        o_ref[0] = (acc_ref[...] + b_ref[...] + pe_ref[...]).astype(o_ref.dtype)


def _ffn_kernel(h_ref, w1_ref, b1_ref, w2_ref, b2_ref, g_ref, bb_ref,
                o_ref, acc_ref, *, eps):
    """Fused ff1 + ReLU + ff2 accumulation over dim_ff tiles, plus residual + LayerNorm.
    The [tm, tf] intermediate lives only in VMEM/registers."""
    f = pl.program_id(1)

    @pl.when(f == 0)
    def _():
        acc_ref[...] = jnp.zeros_like(acc_ref)

    t = jnp.dot(h_ref[...], w1_ref[...], preferred_element_type=jnp.float32)
    t = jnp.maximum(t + b1_ref[...], 0.0)
    acc_ref[...] += jnp.dot(t.astype(jnp.bfloat16), w2_ref[...],
                            preferred_element_type=jnp.float32)

    @pl.when(f == pl.num_programs(1) - 1)
    def _():
        y = acc_ref[...] + b2_ref[...] + h_ref[...].astype(jnp.float32)  # residual
        mean = jnp.mean(y, axis=-1, keepdims=True)
        cen = y - mean
        var = jnp.mean(cen * cen, axis=-1, keepdims=True)
        o_ref[...] = (cen * jax.lax.rsqrt(var + eps) * g_ref[...]
                      + bb_ref[...]).astype(o_ref.dtype)


def _flash_attn_kernel(q_ref, k_ref, v_ref, o_ref, m_sc, l_sc, acc_sc,
                       *, num_heads, head_dim, scale):
    """Flash-tiled (unmasked) self-attention.

    Blocks: q [1, tq, E], k/v [1, tkv, E] (lane-dense column slabs of packed qkv),
    output [1, tq, E].  Online softmax state: m_sc/l_sc [H, tq, 1], acc_sc [tq, E].
    Each head's partial output is streamed into its lane band of acc_sc (no concat);
    the HBM store in the finalize step is a single lane-dense [tq, E] write.
    """
    kv = pl.program_id(2)

    @pl.when(kv == 0)
    def _():
        m_sc[...] = jnp.full_like(m_sc, -jnp.inf)
        l_sc[...] = jnp.zeros_like(l_sc)
        acc_sc[...] = jnp.zeros_like(acc_sc)

    q = q_ref[0]            # [tq, E]  bf16
    k = k_ref[0]            # [tkv, E] bf16
    v = v_ref[0]            # [tkv, E] bf16

    for h in range(num_heads):
        lo, hi = h * head_dim, (h + 1) * head_dim
        qh = q[:, lo:hi]
        kh = k[:, lo:hi]
        vh = v[:, lo:hi]
        # scores = (q @ k^T) * scale                               -> [tq, tkv] f32
        s = jax.lax.dot_general(qh, kh, (((1,), (1,)), ((), ())),
                                preferred_element_type=jnp.float32) * scale
        m_prev = m_sc[h]                                           # [tq, 1]
        m_new = jnp.maximum(m_prev, jnp.max(s, axis=-1, keepdims=True))
        alpha = jnp.exp(m_prev - m_new)
        p = jnp.exp(s - m_new)
        l_sc[h] = alpha * l_sc[h] + jnp.sum(p, axis=-1, keepdims=True)
        acc_sc[:, lo:hi] = (alpha * acc_sc[:, lo:hi]
                            + jnp.dot(p.astype(jnp.bfloat16), vh,
                                      preferred_element_type=jnp.float32))
        m_sc[h] = m_new

    @pl.when(kv == pl.num_programs(2) - 1)
    def _():
        for h in range(num_heads):
            lo, hi = h * head_dim, (h + 1) * head_dim
            inv = pl.reciprocal(l_sc[h], approx=True)              # [tq, 1]
            acc_sc[:, lo:hi] = acc_sc[:, lo:hi] * inv
        o_ref[0] = acc_sc[...].astype(o_ref.dtype)                 # lane-dense store


# ------------------------------- wrappers -------------------------------------

def linear(x, w, b, *, activation=None, residual=None, ln=None, eps=1e-5,
           out_dtype=ACT_DTYPE):
    """y = x @ w + b, optional ReLU or fused (residual-add + LayerNorm). Output bf16
    by default (f32 accumulation internally)."""
    M, K = x.shape
    N = w.shape[1]
    out_bytes = jnp.dtype(out_dtype).itemsize
    tn = N if ln is not None else _pick_tile(N, TN_TARGET, 128)   # LN needs full row
    tk = _pick_tile(K, TK_TARGET, 128)

    def tile_bytes(tm):
        by = tm * tn * 4                                 # f32 accumulator
        by += 2 * tm * tk * x.dtype.itemsize             # double-buffered x tile
        by += 2 * tk * tn * w.dtype.itemsize             # double-buffered w tile
        by += 2 * tm * tn * out_bytes                    # double-buffered out tile
        if ln is not None:
            by += 2 * tm * tn * residual.dtype.itemsize  # residual tile
        return by

    tm = _pick_m_tile(M, tile_bytes,
                      want_two_blocks=(ln is not None or N // tn < 2))
    grid = (M // tm, N // tn, K // tk)

    x_spec = pl.BlockSpec((tm, tk), lambda i, j, k: (i, k))
    w_spec = pl.BlockSpec((tk, tn), lambda i, j, k: (k, j))
    b_spec = pl.BlockSpec((1, tn), lambda i, j, k: (0, j))
    o_spec = pl.BlockSpec((tm, tn), lambda i, j, k: (i, j))

    bytes_accessed = (M * K * x.dtype.itemsize + K * N * w.dtype.itemsize
                      + M * N * out_bytes + N * 4)
    if ln is None:
        kern = functools.partial(_linear_kernel, activation=activation)
        in_specs = [x_spec, w_spec, b_spec]
        args = (x, w, b.reshape(1, N))
    else:
        gamma, beta = ln
        kern = functools.partial(_linear_res_ln_kernel, eps=eps)
        r_spec = pl.BlockSpec((tm, tn), lambda i, j, k: (i, j))
        v_spec = pl.BlockSpec((1, tn), lambda i, j, k: (0, j))
        in_specs = [x_spec, w_spec, b_spec, r_spec, v_spec, v_spec]
        args = (x, w, b.reshape(1, N), residual,
                gamma.reshape(1, N), beta.reshape(1, N))
        bytes_accessed += M * N * residual.dtype.itemsize + 2 * N * 4

    return pl.pallas_call(
        kern,
        out_shape=jax.ShapeDtypeStruct((M, N), out_dtype),
        grid=grid,
        in_specs=in_specs,
        out_specs=o_spec,
        scratch_shapes=[pltpu.VMEM((tm, tn), jnp.float32)],
        compiler_params=pltpu.CompilerParams(
            dimension_semantics=("parallel", "parallel", "arbitrary"),
            vmem_limit_bytes=VMEM_LIMIT),
        cost_estimate=pl.CostEstimate(flops=2 * M * K * N, transcendentals=0,
                                      bytes_accessed=bytes_accessed),
    )(*args)


def ffn(h, w1, b1, w2, b2, gamma, beta, *, eps=1e-5, out_dtype=ACT_DTYPE):
    """Fused feed-forward block: LN(h + ReLU(h@W1+b1)@W2 + b2).  One pallas_call;
    the [M, dim_ff] intermediate never leaves VMEM."""
    M, E = h.shape
    F = w1.shape[1]
    tf = _pick_tile(F, TK_TARGET, 128)
    out_bytes = jnp.dtype(out_dtype).itemsize

    def tile_bytes(tm):
        by = tm * E * 4                          # f32 accumulator
        by += 2 * tm * E * h.dtype.itemsize      # h tile (matmul input + residual)
        by += 2 * E * tf * w1.dtype.itemsize     # double-buffered w1 tile
        by += 2 * tf * E * w2.dtype.itemsize     # double-buffered w2 tile
        by += tm * tf * 4                        # ff1 intermediate
        by += 2 * tm * E * out_bytes             # double-buffered out tile
        return by

    tm = _pick_m_tile(M, tile_bytes, want_two_blocks=True)
    grid = (M // tm, F // tf)

    bytes_accessed = (M * E * h.dtype.itemsize + 2 * E * F * w1.dtype.itemsize
                      + M * E * out_bytes + (F + 3 * E) * 4)

    return pl.pallas_call(
        functools.partial(_ffn_kernel, eps=eps),
        out_shape=jax.ShapeDtypeStruct((M, E), out_dtype),
        grid=grid,
        in_specs=[
            pl.BlockSpec((tm, E), lambda i, f: (i, 0)),   # h (matmul + residual)
            pl.BlockSpec((E, tf), lambda i, f: (0, f)),   # w1 tile
            pl.BlockSpec((1, tf), lambda i, f: (0, f)),   # b1 tile
            pl.BlockSpec((tf, E), lambda i, f: (f, 0)),   # w2 tile
            pl.BlockSpec((1, E), lambda i, f: (0, 0)),    # b2
            pl.BlockSpec((1, E), lambda i, f: (0, 0)),    # gamma
            pl.BlockSpec((1, E), lambda i, f: (0, 0)),    # beta
        ],
        out_specs=pl.BlockSpec((tm, E), lambda i, f: (i, 0)),
        scratch_shapes=[pltpu.VMEM((tm, E), jnp.float32)],
        compiler_params=pltpu.CompilerParams(
            dimension_semantics=("parallel", "arbitrary"),
            vmem_limit_bytes=VMEM_LIMIT),
        cost_estimate=pl.CostEstimate(flops=4 * M * E * F, transcendentals=0,
                                      bytes_accessed=bytes_accessed),
    )(h, w1, b1.reshape(1, F), w2, b2.reshape(1, E),
      gamma.reshape(1, E), beta.reshape(1, E))


def embed_pe(x3, w, b, pe, *, out_dtype=ACT_DTYPE):
    """[B,S,Din] -> [B,S,E]: embedding linear with fused positional-encoding add."""
    B, S, Din = x3.shape
    E = w.shape[1]
    tk = _pick_tile(Din, TK_TARGET, 128)
    out_bytes = jnp.dtype(out_dtype).itemsize

    def tile_bytes(ts):
        return (ts * E * 4 + 2 * ts * tk * x3.dtype.itemsize + 2 * tk * E * w.dtype.itemsize
                + 2 * ts * E * 4 + 2 * ts * E * out_bytes)

    ts = _pick_m_tile(S, tile_bytes)
    grid = (B, S // ts, Din // tk)

    bytes_accessed = (B * S * Din * x3.dtype.itemsize + Din * E * w.dtype.itemsize
                      + S * E * 4 + B * S * E * out_bytes)

    return pl.pallas_call(
        _embed_pe_kernel,
        out_shape=jax.ShapeDtypeStruct((B, S, E), out_dtype),
        grid=grid,
        in_specs=[
            pl.BlockSpec((1, ts, tk), lambda bi, si, ki: (bi, si, ki)),
            pl.BlockSpec((tk, E), lambda bi, si, ki: (ki, 0)),
            pl.BlockSpec((1, E), lambda bi, si, ki: (0, 0)),
            pl.BlockSpec((ts, E), lambda bi, si, ki: (si, 0)),
        ],
        out_specs=pl.BlockSpec((1, ts, E), lambda bi, si, ki: (bi, si, 0)),
        scratch_shapes=[pltpu.VMEM((ts, E), jnp.float32)],
        compiler_params=pltpu.CompilerParams(
            dimension_semantics=("parallel", "parallel", "arbitrary"),
            vmem_limit_bytes=VMEM_LIMIT),
        cost_estimate=pl.CostEstimate(flops=2 * B * S * Din * E, transcendentals=0,
                                      bytes_accessed=bytes_accessed),
    )(x3, w, b.reshape(1, E), pe)


def attention(qkv3, num_heads, head_dim, *, out_dtype=ACT_DTYPE):
    """qkv3: [B, S, 3E] packed (q | k | v) bf16 -> [B, S, E] attention output.

    Flash-tiled: grid (B, S//tq, S//tkv) with online softmax; q/k/v arrive as
    lane-dense E-wide column blocks of the packed tensor (no host-side transposes)."""
    B, S, threeE = qkv3.shape
    E = num_heads * head_dim
    assert threeE == 3 * E
    # E-wide column blocks of the [.., 3E] packed tensor must be lane-aligned.
    assert E % 128 == 0, "embed_dim must be a multiple of 128 for lane-dense qkv blocks"
    scale = 1.0 / math.sqrt(head_dim)

    tq = _pick_tile(S, TQ_TARGET, 8)
    tkv = _pick_tile(S, TKV_TARGET, 8)
    grid = (B, S // tq, S // tkv)

    itemsize = qkv3.dtype.itemsize
    bytes_accessed = (B * S * E * itemsize                       # q streamed once
                      + 2 * B * S * E * itemsize * (S // tq)     # k,v per q tile
                      + B * S * E * jnp.dtype(out_dtype).itemsize)

    return pl.pallas_call(
        functools.partial(_flash_attn_kernel, num_heads=num_heads,
                          head_dim=head_dim, scale=scale),
        out_shape=jax.ShapeDtypeStruct((B, S, E), out_dtype),
        grid=grid,
        in_specs=[
            pl.BlockSpec((1, tq, E), lambda b, qi, ki: (b, qi, 0)),   # q columns
            pl.BlockSpec((1, tkv, E), lambda b, qi, ki: (b, ki, 1)),  # k columns
            pl.BlockSpec((1, tkv, E), lambda b, qi, ki: (b, ki, 2)),  # v columns
        ],
        out_specs=pl.BlockSpec((1, tq, E), lambda b, qi, ki: (b, qi, 0)),
        scratch_shapes=[
            pltpu.VMEM((num_heads, tq, 1), jnp.float32),   # running max
            pltpu.VMEM((num_heads, tq, 1), jnp.float32),   # running denom
            pltpu.VMEM((tq, E), jnp.float32),              # output accumulator
        ],
        compiler_params=pltpu.CompilerParams(
            dimension_semantics=("parallel", "parallel", "arbitrary"),
            vmem_limit_bytes=VMEM_LIMIT),
        cost_estimate=pl.CostEstimate(
            flops=4 * B * num_heads * S * S * head_dim,
            transcendentals=B * num_heads * S * S,
            bytes_accessed=bytes_accessed),
    )(qkv3, qkv3, qkv3)


# ----------------------------- glue / params ---------------------------------

def sinusoidal_pe(seq_len, embed_dim):
    position = jnp.arange(seq_len, dtype=jnp.float32)[:, None]
    div_term = jnp.exp(
        jnp.arange(0, embed_dim, 2, dtype=jnp.float32) * (-math.log(10000.0) / embed_dim)
    )
    pe = jnp.zeros((seq_len, embed_dim), dtype=jnp.float32)
    pe = pe.at[:, 0::2].set(jnp.sin(position * div_term))
    pe = pe.at[:, 1::2].set(jnp.cos(position * div_term))
    return pe


def init_params(key, input_dim, embed_dim, num_layers, dim_ff):
    # weights stored as [in, out] (transpose of torch nn.Linear's [out, in]), bf16 for MXU
    def dense(k, din, dout):
        return (0.02 * jax.random.normal(k, (din, dout), jnp.float32)).astype(jnp.bfloat16)

    keys = jax.random.split(key, 2 + 4 * num_layers)
    params = {
        "emb_w": dense(keys[0], input_dim, embed_dim),
        "emb_b": jnp.zeros((embed_dim,), jnp.float32),
        "out_w": dense(keys[1], embed_dim, input_dim),
        "out_b": jnp.zeros((input_dim,), jnp.float32),
        "layers": [],
    }
    for l in range(num_layers):
        k0, k1, k2, k3 = keys[2 + 4 * l: 6 + 4 * l]
        params["layers"].append({
            "in_proj_w": dense(k0, embed_dim, 3 * embed_dim),
            "in_proj_b": jnp.zeros((3 * embed_dim,), jnp.float32),
            "out_proj_w": dense(k1, embed_dim, embed_dim),
            "out_proj_b": jnp.zeros((embed_dim,), jnp.float32),
            "ff1_w": dense(k2, embed_dim, dim_ff),
            "ff1_b": jnp.zeros((dim_ff,), jnp.float32),
            "ff2_w": dense(k3, dim_ff, embed_dim),
            "ff2_b": jnp.zeros((embed_dim,), jnp.float32),
            "ln1_g": jnp.ones((embed_dim,), jnp.float32),
            "ln1_b": jnp.zeros((embed_dim,), jnp.float32),
            "ln2_g": jnp.ones((embed_dim,), jnp.float32),
            "ln2_b": jnp.zeros((embed_dim,), jnp.float32),
        })
    return params


def transformer_forward(params, x, *, num_heads):
    """Equivalent of TransformerModel.forward(x, use_memory=False) in eval mode."""
    squeeze_out = False
    if x.ndim == 2:                       # [B, Din] -> [B, 1, Din]
        x = x[:, None, :]
        squeeze_out = True
    B, S, Din = x.shape
    E = params["emb_w"].shape[1]
    H = num_heads
    Dh = E // H

    # embedding + positional encoding (fused); dropout = identity (eval)
    pe = sinusoidal_pe(S, E)
    h = embed_pe(x, params["emb_w"], params["emb_b"], pe).reshape(B * S, E)   # bf16

    for layer in params["layers"]:
        # ---- multi-head self-attention ----
        qkv = linear(h, layer["in_proj_w"], layer["in_proj_b"])               # [B*S, 3E] bf16
        attn = attention(qkv.reshape(B, S, 3 * E), H, Dh)                     # [B, S, E] bf16
        attn = attn.reshape(B * S, E)
        # out-proj with fused residual-add + LayerNorm (post-LN); dropout = identity
        h = linear(attn, layer["out_proj_w"], layer["out_proj_b"],
                   residual=h, ln=(layer["ln1_g"], layer["ln1_b"]))

        # ---- fused feed-forward (ff1 + ReLU + ff2 + residual + LayerNorm) ----
        h = ffn(h, layer["ff1_w"], layer["ff1_b"], layer["ff2_w"], layer["ff2_b"],
                layer["ln2_g"], layer["ln2_b"])

    out = linear(h, params["out_w"], params["out_b"], out_dtype=jnp.float32)  # [B*S, Din]
    out = out.reshape(B, S, Din)
    if squeeze_out and out.shape[1] == 1:
        out = out[:, 0, :]
    # TODO(synk): memory caching / autoregressive generate() sampling (top-k/top-p,
    # multinomial) are host-side control flow around forward() and are not kernels.
    return out


# --------------------------------- main ---------------------------------------

if __name__ == "__main__":
    # small but structurally faithful config (embed_dim kept a multiple of 128)
    B, S = 2, 16
    input_dim, embed_dim, num_heads, num_layers, dim_ff = 32, 128, 4, 2, 256

    key = jax.random.PRNGKey(0)
    kx, kp = jax.random.split(key)
    x = jax.random.normal(kx, (B, S, input_dim), dtype=jnp.float32)
    params = init_params(kp, input_dim, embed_dim, num_layers, dim_ff)

    fwd = jax.jit(functools.partial(transformer_forward, num_heads=num_heads))
    out = jax.block_until_ready(fwd(params, x))

    assert out.shape == (B, S, input_dim)
    assert bool(jnp.all(jnp.isfinite(out)))
    print("KERNEL_OK")
</pallas_src>

<mosaic_0001>
module attributes {stable_mosaic.version = 11 : i64} {
  func.func @_embed_pe_kernel(%arg0: i32, %arg1: i32, %arg2: i32, %arg3: memref<1x16x32xf32, #tpu.memory_space<vmem>>, %arg4: memref<32x128xbf16, #tpu.memory_space<vmem>>, %arg5: memref<1x128xf32, #tpu.memory_space<vmem>>, %arg6: memref<16x128xf32, #tpu.memory_space<vmem>>, %arg7: memref<1x16x128xbf16, #tpu.memory_space<vmem>>, %arg8: memref<16x128xf32, #tpu.memory_space<vmem>>) attributes {dimension_semantics = [#tpu.dimension_semantics<parallel>, #tpu.dimension_semantics<parallel>, #tpu.dimension_semantics<arbitrary>], iteration_bounds = array<i64: 2, 1, 1>, scalar_prefetch = 0 : i64, scratch_operands = 1 : i64, tpu.core_type = #tpu.core_type<tc>, window_params = [{transform_indices = @transform_0, window_bounds = array<i64: 1, 16, 32>}, {transform_indices = @transform_1, window_bounds = array<i64: 32, 128>}, {pipeline_mode = #tpu.pipeline_mode<synchronous>, transform_indices = @transform_2, window_bounds = array<i64: 1, 128>}, {transform_indices = @transform_3, window_bounds = array<i64: 16, 128>}, {transform_indices = @transform_4, window_bounds = array<i64: 1, 16, 128>}]} {
    %c0_i32 = arith.constant 0 : i32
    %0 = arith.cmpi eq, %arg2, %c0_i32 : i32
    %1 = arith.extui %0 : i1 to i32
    %c0_i32_0 = arith.constant 0 : i32
    %2 = arith.cmpi ne, %1, %c0_i32_0 : i32
    scf.if %2 {
      %cst_11 = arith.constant 0.000000e+00 : f32
      %14 = vector.broadcast %cst_11 : f32 to vector<16x128xf32>
      %c0_12 = arith.constant 0 : index
      %c0_13 = arith.constant 0 : index
      %15 = vector.load %arg8[%c0_12, %c0_13] : memref<16x128xf32, #tpu.memory_space<vmem>>, vector<16x128xf32>
      tpu.vector_store %arg8[%c0_12, %c0_13], %14 {strides = array<i32>} : memref<16x128xf32, #tpu.memory_space<vmem>>, vector<16x128xf32>,
    } else {
    }
    %c0 = arith.constant 0 : index
    %c0_1 = arith.constant 0 : index
    %3 = vector.load %arg8[%c0, %c0_1] : memref<16x128xf32, #tpu.memory_space<vmem>>, vector<16x128xf32>
    %c0_2 = arith.constant 0 : index
    %c0_3 = arith.constant 0 : index
    %c0_4 = arith.constant 0 : index
    %4 = vector.load %arg3[%c0_2, %c0_3, %c0_4] : memref<1x16x32xf32, #tpu.memory_space<vmem>>, vector<1x16x32xf32>
    %5 = vector.shape_cast %4 : vector<1x16x32xf32> to vector<16x32xf32>
    %6 = arith.truncf %5 : vector<16x32xf32> to vector<16x32xbf16>
    %c0_5 = arith.constant 0 : index
    %c0_6 = arith.constant 0 : index
    %7 = vector.load %arg4[%c0_5, %c0_6] : memref<32x128xbf16, #tpu.memory_space<vmem>>, vector<32x128xbf16>
    %cst = arith.constant dense<0.000000e+00> : vector<16x128xf32>
    %8 = tpu.matmul %6, %7, %cst {dimension_numbers = #tpu.dot_dimension_numbers<[1], [0], [0], [1], [0, 0, 1, 1], [], []>} : vector<16x32xbf16>, vector<32x128xbf16>, vector<16x128xf32> -> vector<16x128xf32>
    %9 = arith.addf %3, %8 : vector<16x128xf32>
    %c0_7 = arith.constant 0 : index
    %c0_8 = arith.constant 0 : index
    %10 = vector.load %arg8[%c0_7, %c0_8] : memref<16x128xf32, #tpu.memory_space<vmem>>, vector<16x128xf32>
    tpu.vector_store %arg8[%c0_7, %c0_8], %9 {strides = array<i32>} : memref<16x128xf32, #tpu.memory_space<vmem>>, vector<16x128xf32>,
    %c0_i32_9 = arith.constant 0 : i32
    %11 = arith.cmpi eq, %arg2, %c0_i32_9 : i32
    %12 = arith.extui %11 : i1 to i32
    %c0_i32_10 = arith.constant 0 : i32
    %13 = arith.cmpi ne, %12, %c0_i32_10 : i32
    scf.if %13 {
      %c0_11 = arith.constant 0 : index
      %c0_12 = arith.constant 0 : index
      %14 = vector.load %arg8[%c0_11, %c0_12] : memref<16x128xf32, #tpu.memory_space<vmem>>, vector<16x128xf32>
      %c0_13 = arith.constant 0 : index
      %c0_14 = arith.constant 0 : index
      %15 = vector.load %arg5[%c0_13, %c0_14] : memref<1x128xf32, #tpu.memory_space<vmem>>, vector<1x128xf32>
      %16 = vector.broadcast %15 : vector<1x128xf32> to vector<16x128xf32>
      %17 = arith.addf %14, %16 : vector<16x128xf32>
      %c0_15 = arith.constant 0 : index
      %c0_16 = arith.constant 0 : index
      %18 = vector.load %arg6[%c0_15, %c0_16] : memref<16x128xf32, #tpu.memory_space<vmem>>, vector<16x128xf32>
      %19 = arith.addf %17, %18 : vector<16x128xf32>
      %20 = arith.truncf %19 : vector<16x128xf32> to vector<16x128xbf16>
      %c0_17 = arith.constant 0 : index
      %c0_18 = arith.constant 0 : index
      %c0_19 = arith.constant 0 : index
      %21 = vector.load %arg7[%c0_17, %c0_18, %c0_19] : memref<1x16x128xbf16, #tpu.memory_space<vmem>>, vector<1x16x128xbf16>
      %22 = vector.shape_cast %21 : vector<1x16x128xbf16> to vector<16x128xbf16>
      %23 = vector.shape_cast %20 : vector<16x128xbf16> to vector<1x16x128xbf16>
      tpu.vector_store %arg7[%c0_17, %c0_18, %c0_19], %23 {strides = array<i32>} : memref<1x16x128xbf16, #tpu.memory_space<vmem>>, vector<1x16x128xbf16>,
    } else {
    }
    return
  }
  func.func @transform_0(%arg0: i32, %arg1: i32, %arg2: i32) -> (i32, i32, i32) {
    %c0_i32 = arith.constant 0 : i32
    return %arg0, %arg1, %arg2 : i32, i32, i32
  }
  func.func @transform_1(%arg0: i32, %arg1: i32, %arg2: i32) -> (i32, i32) {
    %c0_i32 = arith.constant 0 : i32
    %c0_i32_0 = arith.constant 0 : i32
    return %arg2, %c0_i32 : i32, i32
  }
  func.func @transform_2(%arg0: i32, %arg1: i32, %arg2: i32) -> (i32, i32) {
    %c0_i32 = arith.constant 0 : i32
    %c0_i32_0 = arith.constant 0 : i32
    %c0_i32_1 = arith.constant 0 : i32
    return %c0_i32, %c0_i32_0 : i32, i32
  }
  func.func @transform_3(%arg0: i32, %arg1: i32, %arg2: i32) -> (i32, i32) {
    %c0_i32 = arith.constant 0 : i32
    %c0_i32_0 = arith.constant 0 : i32
    return %arg1, %c0_i32 : i32, i32
  }
  func.func @transform_4(%arg0: i32, %arg1: i32, %arg2: i32) -> (i32, i32, i32) {
    %c0_i32 = arith.constant 0 : i32
    %c0_i32_0 = arith.constant 0 : i32
    return %arg0, %arg1, %c0_i32 : i32, i32, i32
  }
}

module attributes {stable_mosaic.version = 11 : i64} {
  func.func @_linear_kernel(%arg0: i32, %arg1: i32, %arg2: i32, %arg3: memref<32x128xbf16, #tpu.memory_space<vmem>>, %arg4: memref<128x128xbf16, #tpu.memory_space<vmem>>, %arg5: memref<1x128xf32, #tpu.memory_space<vmem>>, %arg6: memref<32x128xbf16, #tpu.memory_space<vmem>>, %arg7: memref<32x128xf32, #tpu.memory_space<vmem>>) attributes {dimension_semantics = [#tpu.dimension_semantics<parallel>, #tpu.dimension_semantics<parallel>, #tpu.dimension_semantics<arbitrary>], iteration_bounds = array<i64: 1, 3, 1>, scalar_prefetch = 0 : i64, scratch_operands = 1 : i64, tpu.core_type = #tpu.core_type<tc>, window_params = [{transform_indices = @transform_0, window_bounds = array<i64: 32, 128>}, {transform_indices = @transform_1, window_bounds = array<i64: 128, 128>}, {transform_indices = @transform_2, window_bounds = array<i64: 1, 128>}, {transform_indices = @transform_3, window_bounds = array<i64: 32, 128>}]} {
    %c0_i32 = arith.constant 0 : i32
    %0 = arith.cmpi eq, %arg2, %c0_i32 : i32
    %1 = arith.extui %0 : i1 to i32
    %c0_i32_0 = arith.constant 0 : i32
    %2 = arith.cmpi ne, %1, %c0_i32_0 : i32
    scf.if %2 {
      %cst_10 = arith.constant 0.000000e+00 : f32
      %12 = vector.broadcast %cst_10 : f32 to vector<32x128xf32>
      %c0_11 = arith.constant 0 : index
      %c0_12 = arith.constant 0 : index
      %13 = vector.load %arg7[%c0_11, %c0_12] : memref<32x128xf32, #tpu.memory_space<vmem>>, vector<32x128xf32>
      tpu.vector_store %arg7[%c0_11, %c0_12], %12 {strides = array<i32>} : memref<32x128xf32, #tpu.memory_space<vmem>>, vector<32x128xf32>,
    } else {
    }
    %c0 = arith.constant 0 : index
    %c0_1 = arith.constant 0 : index
    %3 = vector.load %arg7[%c0, %c0_1] : memref<32x128xf32, #tpu.memory_space<vmem>>, vector<32x128xf32>
    %c0_2 = arith.constant 0 : index
    %c0_3 = arith.constant 0 : index
    %4 = vector.load %arg3[%c0_2, %c0_3] : memref<32x128xbf16, #tpu.memory_space<vmem>>, vector<32x128xbf16>
    %c0_4 = arith.constant 0 : index
    %c0_5 = arith.constant 0 : index
    %5 = vector.load %arg4[%c0_4, %c0_5] : memref<128x128xbf16, #tpu.memory_space<vmem>>, vector<128x128xbf16>
    %cst = arith.constant dense<0.000000e+00> : vector<32x128xf32>
    %6 = tpu.matmul %4, %5, %cst {dimension_numbers = #tpu.dot_dimension_numbers<[1], [0], [0], [1], [0, 0, 1, 1], [], []>} : vector<32x128xbf16>, vector<128x128xbf16>, vector<32x128xf32> -> vector<32x128xf32>
    %7 = arith.addf %3, %6 : vector<32x128xf32>
    %c0_6 = arith.constant 0 : index
    %c0_7 = arith.constant 0 : index
    %8 = vector.load %arg7[%c0_6, %c0_7] : memref<32x128xf32, #tpu.memory_space<vmem>>, vector<32x128xf32>
    tpu.vector_store %arg7[%c0_6, %c0_7], %7 {strides = array<i32>} : memref<32x128xf32, #tpu.memory_space<vmem>>, vector<32x128xf32>,
    %c0_i32_8 = arith.constant 0 : i32
    %9 = arith.cmpi eq, %arg2, %c0_i32_8 : i32
    %10 = arith.extui %9 : i1 to i32
    %c0_i32_9 = arith.constant 0 : i32
    %11 = arith.cmpi ne, %10, %c0_i32_9 : i32
    scf.if %11 {
      %c0_10 = arith.constant 0 : index
      %c0_11 = arith.constant 0 : index
      %12 = vector.load %arg7[%c0_10, %c0_11] : memref<32x128xf32, #tpu.memory_space<vmem>>, vector<32x128xf32>
      %c0_12 = arith.constant 0 : index
      %c0_13 = arith.constant 0 : index
      %13 = vector.load %arg5[%c0_12, %c0_13] : memref<1x128xf32, #tpu.memory_space<vmem>>, vector<1x128xf32>
      %14 = vector.broadcast %13 : vector<1x128xf32> to vector<32x128xf32>
      %15 = arith.addf %12, %14 : vector<32x128xf32>
      %16 = arith.truncf %15 : vector<32x128xf32> to vector<32x128xbf16>
      %c0_14 = arith.constant 0 : index
      %c0_15 = arith.constant 0 : index
      %17 = vector.load %arg6[%c0_14, %c0_15] : memref<32x128xbf16, #tpu.memory_space<vmem>>, vector<32x128xbf16>
      tpu.vector_store %arg6[%c0_14, %c0_15], %16 {strides = array<i32>} : memref<32x128xbf16, #tpu.memory_space<vmem>>, vector<32x128xbf16>,
    } else {
    }
    return
  }
  func.func @transform_0(%arg0: i32, %arg1: i32, %arg2: i32) -> (i32, i32) {
    %c0_i32 = arith.constant 0 : i32
    return %arg0, %arg2 : i32, i32
  }
  func.func @transform_1(%arg0: i32, %arg1: i32, %arg2: i32) -> (i32, i32) {
    %c0_i32 = arith.constant 0 : i32
    return %arg2, %arg1 : i32, i32
  }
  func.func @transform_2(%arg0: i32, %arg1: i32, %arg2: i32) -> (i32, i32) {
    %c0_i32 = arith.constant 0 : i32
    %c0_i32_0 = arith.constant 0 : i32
    return %c0_i32, %arg1 : i32, i32
  }
  func.func @transform_3(%arg0: i32, %arg1: i32, %arg2: i32) -> (i32, i32) {
    %c0_i32 = arith.constant 0 : i32
    return %arg0, %arg1 : i32, i32
  }
}

module attributes {stable_mosaic.version = 11 : i64} {
  func.func @_ffn_kernel(%arg0: i32, %arg1: i32, %arg2: memref<32x128xbf16, #tpu.memory_space<vmem>>, %arg3: memref<128x256xbf16, #tpu.memory_space<vmem>>, %arg4: memref<1x256xf32, #tpu.memory_space<vmem>>, %arg5: memref<256x128xbf16, #tpu.memory_space<vmem>>, %arg6: memref<1x128xf32, #tpu.memory_space<vmem>>, %arg7: memref<1x128xf32, #tpu.memory_space<vmem>>, %arg8: memref<1x128xf32, #tpu.memory_space<vmem>>, %arg9: memref<32x128xbf16, #tpu.memory_space<vmem>>, %arg10: memref<32x128xf32, #tpu.memory_space<vmem>>) attributes {dimension_semantics = [#tpu.dimension_semantics<parallel>, #tpu.dimension_semantics<arbitrary>], iteration_bounds = array<i64: 1, 1>, scalar_prefetch = 0 : i64, scratch_operands = 1 : i64, tpu.core_type = #tpu.core_type<tc>, window_params = [{transform_indices = @transform_0, window_bounds = array<i64: 32, 128>}, {transform_indices = @transform_1, window_bounds = array<i64: 128, 256>}, {transform_indices = @transform_2, window_bounds = array<i64: 1, 256>}, {transform_indices = @transform_3, window_bounds = array<i64: 256, 128>}, {pipeline_mode = #tpu.pipeline_mode<synchronous>, transform_indices = @transform_4, window_bounds = array<i64: 1, 128>}, {pipeline_mode = #tpu.pipeline_mode<synchronous>, transform_indices = @transform_5, window_bounds = array<i64: 1, 128>}, {pipeline_mode = #tpu.pipeline_mode<synchronous>, transform_indices = @transform_6, window_bounds = array<i64: 1, 128>}, {transform_indices = @transform_7, window_bounds = array<i64: 32, 128>}]} {
    %c0_i32 = arith.constant 0 : i32
    %0 = arith.cmpi eq, %arg1, %c0_i32 : i32
    %1 = arith.extui %0 : i1 to i32
    %c0_i32_0 = arith.constant 0 : i32
    %2 = arith.cmpi ne, %1, %c0_i32_0 : i32
    scf.if %2 {
      %cst_16 = arith.constant 0.000000e+00 : f32
      %20 = vector.broadcast %cst_16 : f32 to vector<32x128xf32>
      %c0_17 = arith.constant 0 : index
      %c0_18 = arith.constant 0 : index
      %21 = vector.load %arg10[%c0_17, %c0_18] : memref<32x128xf32, #tpu.memory_space<vmem>>, vector<32x128xf32>
      tpu.vector_store %arg10[%c0_17, %c0_18], %20 {strides = array<i32>} : memref<32x128xf32, #tpu.memory_space<vmem>>, vector<32x128xf32>,
    } else {
    }
    %c0 = arith.constant 0 : index
    %c0_1 = arith.constant 0 : index
    %3 = vector.load %arg2[%c0, %c0_1] : memref<32x128xbf16, #tpu.memory_space<vmem>>, vector<32x128xbf16>
    %c0_2 = arith.constant 0 : index
    %c0_3 = arith.constant 0 : index
    %4 = vector.load %arg3[%c0_2, %c0_3] : memref<128x256xbf16, #tpu.memory_space<vmem>>, vector<128x256xbf16>
    %cst = arith.constant dense<0.000000e+00> : vector<32x256xf32>
    %5 = tpu.matmul %3, %4, %cst {dimension_numbers = #tpu.dot_dimension_numbers<[1], [0], [0], [1], [0, 0, 1, 1], [], []>} : vector<32x128xbf16>, vector<128x256xbf16>, vector<32x256xf32> -> vector<32x256xf32>
    %c0_4 = arith.constant 0 : index
    %c0_5 = arith.constant 0 : index
    %6 = vector.load %arg4[%c0_4, %c0_5] : memref<1x256xf32, #tpu.memory_space<vmem>>, vector<1x256xf32>
    %7 = vector.broadcast %6 : vector<1x256xf32> to vector<32x256xf32>
    %8 = arith.addf %5, %7 : vector<32x256xf32>
    %cst_6 = arith.constant 0.000000e+00 : f32
    %9 = vector.broadcast %cst_6 : f32 to vector<32x256xf32>
    %10 = arith.maximumf %8, %9 : vector<32x256xf32>
    %c0_7 = arith.constant 0 : index
    %c0_8 = arith.constant 0 : index
    %11 = vector.load %arg10[%c0_7, %c0_8] : memref<32x128xf32, #tpu.memory_space<vmem>>, vector<32x128xf32>
    %12 = arith.truncf %10 : vector<32x256xf32> to vector<32x256xbf16>
    %c0_9 = arith.constant 0 : index
    %c0_10 = arith.constant 0 : index
    %13 = vector.load %arg5[%c0_9, %c0_10] : memref<256x128xbf16, #tpu.memory_space<vmem>>, vector<256x128xbf16>
    %cst_11 = arith.constant dense<0.000000e+00> : vector<32x128xf32>
    %14 = tpu.matmul %12, %13, %cst_11 {dimension_numbers = #tpu.dot_dimension_numbers<[1], [0], [0], [1], [0, 0, 1, 1], [], []>} : vector<32x256xbf16>, vector<256x128xbf16>, vector<32x128xf32> -> vector<32x128xf32>
    %15 = arith.addf %11, %14 : vector<32x128xf32>
    %c0_12 = arith.constant 0 : index
    %c0_13 = arith.constant 0 : index
    %16 = vector.load %arg10[%c0_12, %c0_13] : memref<32x128xf32, #tpu.memory_space<vmem>>, vector<32x128xf32>
    tpu.vector_store %arg10[%c0_12, %c0_13], %15 {strides = array<i32>} : memref<32x128xf32, #tpu.memory_space<vmem>>, vector<32x128xf32>,
    %c0_i32_14 = arith.constant 0 : i32
    %17 = arith.cmpi eq, %arg1, %c0_i32_14 : i32
    %18 = arith.extui %17 : i1 to i32
    %c0_i32_15 = arith.constant 0 : i32
    %19 = arith.cmpi ne, %18, %c0_i32_15 : i32
    scf.if %19 {
      %c0_16 = arith.constant 0 : index
      %c0_17 = arith.constant 0 : index
      %20 = vector.load %arg10[%c0_16, %c0_17] : memref<32x128xf32, #tpu.memory_space<vmem>>, vector<32x128xf32>
      %c0_18 = arith.constant 0 : index
      %c0_19 = arith.constant 0 : index
      %21 = vector.load %arg6[%c0_18, %c0_19] : memref<1x128xf32, #tpu.memory_space<vmem>>, vector<1x128xf32>
      %22 = vector.broadcast %21 : vector<1x128xf32> to vector<32x128xf32>
      %23 = arith.addf %20, %22 : vector<32x128xf32>
      %c0_20 = arith.constant 0 : index
      %c0_21 = arith.constant 0 : index
      %24 = vector.load %arg2[%c0_20, %c0_21] : memref<32x128xbf16, #tpu.memory_space<vmem>>, vector<32x128xbf16>
      %25 = arith.extf %24 : vector<32x128xbf16> to vector<32x128xf32>
      %26 = arith.addf %23, %25 : vector<32x128xf32>
      %cst_22 = arith.constant dense<0.000000e+00> : vector<32xf32>
      %27 = vector.multi_reduction <add>, %26, %cst_22 [1] : vector<32x128xf32> to vector<32xf32>
      %28 = vector.shape_cast %27 : vector<32xf32> to vector<32x1xf32>
      %cst_23 = arith.constant 1.280000e+02 : f32
      %29 = vector.broadcast %cst_23 : f32 to vector<32x1xf32>
      %30 = arith.divf %28, %29 : vector<32x1xf32>
      %31 = vector.broadcast %30 : vector<32x1xf32> to vector<32x128xf32>
      %32 = arith.subf %26, %31 : vector<32x128xf32>
      %33 = arith.mulf %32, %32 : vector<32x128xf32>
      %cst_24 = arith.constant dense<0.000000e+00> : vector<32xf32>
      %34 = vector.multi_reduction <add>, %33, %cst_24 [1] : vector<32x128xf32> to vector<32xf32>
      %35 = vector.shape_cast %34 : vector<32xf32> to vector<32x1xf32>
      %cst_25 = arith.constant 1.280000e+02 : f32
      %36 = vector.broadcast %cst_25 : f32 to vector<32x1xf32>
      %37 = arith.divf %35, %36 : vector<32x1xf32>
      %cst_26 = arith.constant 9.99999974E-6 : f32
      %38 = vector.broadcast %cst_26 : f32 to vector<32x1xf32>
      %39 = arith.addf %37, %38 : vector<32x1xf32>
      %40 = math.rsqrt %39 : vector<32x1xf32>
      %41 = vector.broadcast %40 : vector<32x1xf32> to vector<32x128xf32>
      %42 = arith.mulf %32, %41 : vector<32x128xf32>
      %c0_27 = arith.constant 0 : index
      %c0_28 = arith.constant 0 : index
      %43 = vector.load %arg7[%c0_27, %c0_28] : memref<1x128xf32, #tpu.memory_space<vmem>>, vector<1x128xf32>
      %44 = vector.broadcast %43 : vector<1x128xf32> to vector<32x128xf32>
      %45 = arith.mulf %42, %44 : vector<32x128xf32>
      %c0_29 = arith.constant 0 : index
      %c0_30 = arith.constant 0 : index
      %46 = vector.load %arg8[%c0_29, %c0_30] : memref<1x128xf32, #tpu.memory_space<vmem>>, vector<1x128xf32>
      %47 = vector.broadcast %46 : vector<1x128xf32> to vector<32x128xf32>
      %48 = arith.addf %45, %47 : vector<32x128xf32>
      %49 = arith.truncf %48 : vector<32x128xf32> to vector<32x128xbf16>
      %c0_31 = arith.constant 0 : index
      %c0_32 = arith.constant 0 : index
      %50 = vector.load %arg9[%c0_31, %c0_32] : memref<32x128xbf16, #tpu.memory_space<vmem>>, vector<32x128xbf16>
      tpu.vector_store %arg9[%c0_31, %c0_32], %49 {strides = array<i32>} : memref<32x128xbf16, #tpu.memory_space<vmem>>, vector<32x128xbf16>,
    } else {
    }
    return
  }
  func.func @transform_0(%arg0: i32, %arg1: i32) -> (i32, i32) {
    %c0_i32 = arith.constant 0 : i32
    %c0_i32_0 = arith.constant 0 : i32
    return %arg0, %c0_i32 : i32, i32
  }
  func.func @transform_1(%arg0: i32, %arg1: i32) -> (i32, i32) {
    %c0_i32 = arith.constant 0 : i32
    %c0_i32_0 = arith.constant 0 : i32
    return %c0_i32, %arg1 : i32, i32
  }
  func.func @transform_2(%arg0: i32, %arg1: i32) -> (i32, i32) {
    %c0_i32 = arith.constant 0 : i32
    %c0_i32_0 = arith.constant 0 : i32
    return %c0_i32, %arg1 : i32, i32
  }
  func.func @transform_3(%arg0: i32, %arg1: i32) -> (i32, i32) {
    %c0_i32 = arith.constant 0 : i32
    %c0_i32_0 = arith.constant 0 : i32
    return %arg1, %c0_i32 : i32, i32
  }
  func.func @transform_4(%arg0: i32, %arg1: i32) -> (i32, i32) {
    %c0_i32 = arith.constant 0 : i32
    %c0_i32_0 = arith.constant 0 : i32
    %c0_i32_1 = arith.constant 0 : i32
    return %c0_i32, %c0_i32_0 : i32, i32
  }
  func.func @transform_5(%arg0: i32, %arg1: i32) -> (i32, i32) {
    %c0_i32 = arith.constant 0 : i32
    %c0_i32_0 = arith.constant 0 : i32
    %c0_i32_1 = arith.constant 0 : i32
    return %c0_i32, %c0_i32_0 : i32, i32
  }
  func.func @transform_6(%arg0: i32, %arg1: i32) -> (i32, i32) {
    %c0_i32 = arith.constant 0 : i32
    %c0_i32_0 = arith.constant 0 : i32
    %c0_i32_1 = arith.constant 0 : i32
    return %c0_i32, %c0_i32_0 : i32, i32
  }
  func.func @transform_7(%arg0: i32, %arg1: i32) -> (i32, i32) {
    %c0_i32 = arith.constant 0 : i32
    %c0_i32_0 = arith.constant 0 : i32
    return %arg0, %c0_i32 : i32, i32
  }
}

module attributes {stable_mosaic.version = 11 : i64} {
  func.func @_flash_attn_kernel(%arg0: i32, %arg1: i32, %arg2: i32, %arg3: memref<1x16x128xbf16, #tpu.memory_space<vmem>>, %arg4: memref<1x16x128xbf16, #tpu.memory_space<vmem>>, %arg5: memref<1x16x128xbf16, #tpu.memory_space<vmem>>, %arg6: memref<1x16x128xbf16, #tpu.memory_space<vmem>>, %arg7: memref<4x16x1xf32, #tpu.memory_space<vmem>>, %arg8: memref<4x16x1xf32, #tpu.memory_space<vmem>>, %arg9: memref<16x128xf32, #tpu.memory_space<vmem>>) attributes {dimension_semantics = [#tpu.dimension_semantics<parallel>, #tpu.dimension_semantics<parallel>, #tpu.dimension_semantics<arbitrary>], iteration_bounds = array<i64: 2, 1, 1>, scalar_prefetch = 0 : i64, scratch_operands = 3 : i64, tpu.core_type = #tpu.core_type<tc>, window_params = [{transform_indices = @transform_0, window_bounds = array<i64: 1, 16, 128>}, {transform_indices = @transform_1, window_bounds = array<i64: 1, 16, 128>}, {transform_indices = @transform_2, window_bounds = array<i64: 1, 16, 128>}, {transform_indices = @transform_3, window_bounds = array<i64: 1, 16, 128>}]} {
    %c0_i32 = arith.constant 0 : i32
    %0 = arith.cmpi eq, %arg2, %c0_i32 : i32
    %1 = arith.extui %0 : i1 to i32
    %c0_i32_0 = arith.constant 0 : i32
    %2 = arith.cmpi ne, %1, %c0_i32_0 : i32
    scf.if %2 {
      %cst_88 = arith.constant 0xFF800000 : f32
      %152 = vector.broadcast %cst_88 : f32 to vector<4x16x1xf32>
      %c0_89 = arith.constant 0 : index
      %c0_90 = arith.constant 0 : index
      %c0_91 = arith.constant 0 : index
      %153 = vector.load %arg7[%c0_89, %c0_90, %c0_91] : memref<4x16x1xf32, #tpu.memory_space<vmem>>, vector<4x16x1xf32>
      tpu.vector_store %arg7[%c0_89, %c0_90, %c0_91], %152 {strides = array<i32>} : memref<4x16x1xf32, #tpu.memory_space<vmem>>, vector<4x16x1xf32>,
      %cst_92 = arith.constant 0.000000e+00 : f32
      %154 = vector.broadcast %cst_92 : f32 to vector<4x16x1xf32>
      %c0_93 = arith.constant 0 : index
      %c0_94 = arith.constant 0 : index
      %c0_95 = arith.constant 0 : index
      %155 = vector.load %arg8[%c0_93, %c0_94, %c0_95] : memref<4x16x1xf32, #tpu.memory_space<vmem>>, vector<4x16x1xf32>
      tpu.vector_store %arg8[%c0_93, %c0_94, %c0_95], %154 {strides = array<i32>} : memref<4x16x1xf32, #tpu.memory_space<vmem>>, vector<4x16x1xf32>,
      %cst_96 = arith.constant 0.000000e+00 : f32
      %156 = vector.broadcast %cst_96 : f32 to vector<16x128xf32>
      %c0_97 = arith.constant 0 : index
      %c0_98 = arith.constant 0 : index
      %157 = vector.load %arg9[%c0_97, %c0_98] : memref<16x128xf32, #tpu.memory_space<vmem>>, vector<16x128xf32>
      tpu.vector_store %arg9[%c0_97, %c0_98], %156 {strides = array<i32>} : memref<16x128xf32, #tpu.memory_space<vmem>>, vector<16x128xf32>,
    } else {
    }
    %c0 = arith.constant 0 : index
    %c0_1 = arith.constant 0 : index
    %c0_2 = arith.constant 0 : index
    %3 = vector.load %arg3[%c0, %c0_1, %c0_2] : memref<1x16x128xbf16, #tpu.memory_space<vmem>>, vector<1x16x128xbf16>
    %4 = vector.shape_cast %3 : vector<1x16x128xbf16> to vector<16x128xbf16>
    %c0_3 = arith.constant 0 : index
    %c0_4 = arith.constant 0 : index
    %c0_5 = arith.constant 0 : index
    %5 = vector.load %arg4[%c0_3, %c0_4, %c0_5] : memref<1x16x128xbf16, #tpu.memory_space<vmem>>, vector<1x16x128xbf16>
    %6 = vector.shape_cast %5 : vector<1x16x128xbf16> to vector<16x128xbf16>
    %c0_6 = arith.constant 0 : index
    %c0_7 = arith.constant 0 : index
    %c0_8 = arith.constant 0 : index
    %7 = vector.load %arg5[%c0_6, %c0_7, %c0_8] : memref<1x16x128xbf16, #tpu.memory_space<vmem>>, vector<1x16x128xbf16>
    %8 = vector.shape_cast %7 : vector<1x16x128xbf16> to vector<16x128xbf16>
    %9 = vector.extract_strided_slice %4 {offsets = [0, 0], sizes = [16, 32], strides = [1, 1]} : vector<16x128xbf16> to vector<16x32xbf16>
    %10 = vector.extract_strided_slice %6 {offsets = [0, 0], sizes = [16, 32], strides = [1, 1]} : vector<16x128xbf16> to vector<16x32xbf16>
    %11 = vector.extract_strided_slice %8 {offsets = [0, 0], sizes = [16, 32], strides = [1, 1]} : vector<16x128xbf16> to vector<16x32xbf16>
    %cst = arith.constant dense<0.000000e+00> : vector<16x16xf32>
    %12 = tpu.matmul %9, %10, %cst {dimension_numbers = #tpu.dot_dimension_numbers<[1], [1], [0], [0], [0, 0, 1, 0], [], []>} : vector<16x32xbf16>, vector<16x32xbf16>, vector<16x16xf32> -> vector<16x16xf32>
    %cst_9 = arith.constant 0.176776692 : f32
    %13 = vector.broadcast %cst_9 : f32 to vector<16x16xf32>
    %14 = arith.mulf %12, %13 : vector<16x16xf32>
    %c0_10 = arith.constant 0 : index
    %c0_11 = arith.constant 0 : index
    %c0_12 = arith.constant 0 : index
    %15 = vector.load %arg7[%c0_10, %c0_11, %c0_12] : memref<4x16x1xf32, #tpu.memory_space<vmem>>, vector<1x16x1xf32>
    %16 = vector.shape_cast %15 : vector<1x16x1xf32> to vector<16x1xf32>
    %cst_13 = arith.constant dense<0xFF800000> : vector<16xf32>
    %17 = vector.multi_reduction <maximumf>, %14, %cst_13 [1] : vector<16x16xf32> to vector<16xf32>
    %18 = vector.shape_cast %17 : vector<16xf32> to vector<16x1xf32>
    %19 = arith.maximumf %16, %18 : vector<16x1xf32>
    %20 = arith.subf %16, %19 : vector<16x1xf32>
    %21 = math.exp %20 : vector<16x1xf32>
    %22 = vector.broadcast %19 : vector<16x1xf32> to vector<16x16xf32>
    %23 = arith.subf %14, %22 : vector<16x16xf32>
    %24 = math.exp %23 : vector<16x16xf32>
    %c0_14 = arith.constant 0 : index
    %c0_15 = arith.constant 0 : index
    %c0_16 = arith.constant 0 : index
    %25 = vector.load %arg8[%c0_14, %c0_15, %c0_16] : memref<4x16x1xf32, #tpu.memory_space<vmem>>, vector<1x16x1xf32>
    %26 = vector.shape_cast %25 : vector<1x16x1xf32> to vector<16x1xf32>
    %27 = arith.mulf %21, %26 : vector<16x1xf32>
    %cst_17 = arith.constant dense<0.000000e+00> : vector<16xf32>
    %28 = vector.multi_reduction <add>, %24, %cst_17 [1] : vector<16x16xf32> to vector<16xf32>
    %29 = vector.shape_cast %28 : vector<16xf32> to vector<16x1xf32>
    %30 = arith.addf %27, %29 : vector<16x1xf32>
    %c0_18 = arith.constant 0 : index
    %c0_19 = arith.constant 0 : index
    %c0_20 = arith.constant 0 : index
    %31 = vector.load %arg8[%c0_18, %c0_19, %c0_20] : memref<4x16x1xf32, #tpu.memory_space<vmem>>, vector<1x16x1xf32>
    %32 = vector.shape_cast %31 : vector<1x16x1xf32> to vector<16x1xf32>
    %33 = vector.shape_cast %30 : vector<16x1xf32> to vector<1x16x1xf32>
    tpu.vector_store %arg8[%c0_18, %c0_19, %c0_20], %33 {strides = array<i32>} : memref<4x16x1xf32, #tpu.memory_space<vmem>>, vector<1x16x1xf32>,
    %c0_21 = arith.constant 0 : index
    %c0_22 = arith.constant 0 : index
    %34 = vector.load %arg9[%c0_21, %c0_22] : memref<16x128xf32, #tpu.memory_space<vmem>>, vector<16x32xf32>
    %35 = vector.broadcast %21 : vector<16x1xf32> to vector<16x32xf32>
    %36 = arith.mulf %35, %34 : vector<16x32xf32>
    %37 = arith.truncf %24 : vector<16x16xf32> to vector<16x16xbf16>
    %cst_23 = arith.constant dense<0.000000e+00> : vector<16x32xf32>
    %38 = tpu.matmul %37, %11, %cst_23 {dimension_numbers = #tpu.dot_dimension_numbers<[1], [0], [0], [1], [0, 0, 1, 1], [], []>} : vector<16x16xbf16>, vector<16x32xbf16>, vector<16x32xf32> -> vector<16x32xf32>
    %39 = arith.addf %36, %38 : vector<16x32xf32>
    %c0_24 = arith.constant 0 : index
    %c0_25 = arith.constant 0 : index
    %40 = vector.load %arg9[%c0_24, %c0_25] : memref<16x128xf32, #tpu.memory_space<vmem>>, vector<16x32xf32>
    tpu.vector_store %arg9[%c0_24, %c0_25], %39 {strides = array<i32>} : memref<16x128xf32, #tpu.memory_space<vmem>>, vector<16x32xf32>,
    %c0_26 = arith.constant 0 : index
    %c0_27 = arith.constant 0 : index
    %c0_28 = arith.constant 0 : index
    %41 = vector.load %arg7[%c0_26, %c0_27, %c0_28] : memref<4x16x1xf32, #tpu.memory_space<vmem>>, vector<1x16x1xf32>
    %42 = vector.shape_cast %41 : vector<1x16x1xf32> to vector<16x1xf32>
    %43 = vector.shape_cast %19 : vector<16x1xf32> to vector<1x16x1xf32>
    tpu.vector_store %arg7[%c0_26, %c0_27, %c0_28], %43 {strides = array<i32>} : memref<4x16x1xf32, #tpu.memory_space<vmem>>, vector<1x16x1xf32>,
    %44 = vector.extract_strided_slice %4 {offsets = [0, 32], sizes = [16, 32], strides = [1, 1]} : vector<16x128xbf16> to vector<16x32xbf16>
    %45 = vector.extract_strided_slice %6 {offsets = [0, 32], sizes = [16, 32], strides = [1, 1]} : vector<16x128xbf16> to vector<16x32xbf16>
    %46 = vector.extract_strided_slice %8 {offsets = [0, 32], sizes = [16, 32], strides = [1, 1]} : vector<16x128xbf16> to vector<16x32xbf16>
    %cst_29 = arith.constant dense<0.000000e+00> : vector<16x16xf32>
    %47 = tpu.matmul %44, %45, %cst_29 {dimension_numbers = #tpu.dot_dimension_numbers<[1], [1], [0], [0], [0, 0, 1, 0], [], []>} : vector<16x32xbf16>, vector<16x32xbf16>, vector<16x16xf32> -> vector<16x16xf32>
    %cst_30 = arith.constant 0.176776692 : f32
    %48 = vector.broadcast %cst_30 : f32 to vector<16x16xf32>
    %49 = arith.mulf %47, %48 : vector<16x16xf32>
    %c1 = arith.constant 1 : index
    %c0_31 = arith.constant 0 : index
    %c0_32 = arith.constant 0 : index
    %50 = vector.load %arg7[%c1, %c0_31, %c0_32] : memref<4x16x1xf32, #tpu.memory_space<vmem>>, vector<1x16x1xf32>
    %51 = vector.shape_cast %50 : vector<1x16x1xf32> to vector<16x1xf32>
    %cst_33 = arith.constant dense<0xFF800000> : vector<16xf32>
    %52 = vector.multi_reduction <maximumf>, %49, %cst_33 [1] : vector<16x16xf32> to vector<16xf32>
    %53 = vector.shape_cast %52 : vector<16xf32> to vector<16x1xf32>
    %54 = arith.maximumf %51, %53 : vector<16x1xf32>
    %55 = arith.subf %51, %54 : vector<16x1xf32>
    %56 = math.exp %55 : vector<16x1xf32>
    %57 = vector.broadcast %54 : vector<16x1xf32> to vector<16x16xf32>
    %58 = arith.subf %49, %57 : vector<16x16xf32>
    %59 = math.exp %58 : vector<16x16xf32>
    %c1_34 = arith.constant 1 : index
    %c0_35 = arith.constant 0 : index
    %c0_36 = arith.constant 0 : index
    %60 = vector.load %arg8[%c1_34, %c0_35, %c0_36] : memref<4x16x1xf32, #tpu.memory_space<vmem>>, vector<1x16x1xf32>
    %61 = vector.shape_cast %60 : vector<1x16x1xf32> to vector<16x1xf32>
    %62 = arith.mulf %56, %61 : vector<16x1xf32>
    %cst_37 = arith.constant dense<0.000000e+00> : vector<16xf32>
    %63 = vector.multi_reduction <add>, %59, %cst_37 [1] : vector<16x16xf32> to vector<16xf32>
    %64 = vector.shape_cast %63 : vector<16xf32> to vector<16x1xf32>
    %65 = arith.addf %62, %64 : vector<16x1xf32>
    %c1_38 = arith.constant 1 : index
    %c0_39 = arith.constant 0 : index
    %c0_40 = arith.constant 0 : index
    %66 = vector.load %arg8[%c1_38, %c0_39, %c0_40] : memref<4x16x1xf32, #tpu.memory_space<vmem>>, vector<1x16x1xf32>
    %67 = vector.shape_cast %66 : vector<1x16x1xf32> to vector<16x1xf32>
    %68 = vector.shape_cast %65 : vector<16x1xf32> to vector<1x16x1xf32>
    tpu.vector_store %arg8[%c1_38, %c0_39, %c0_40], %68 {strides = array<i32>} : memref<4x16x1xf32, #tpu.memory_space<vmem>>, vector<1x16x1xf32>,
    %c0_41 = arith.constant 0 : index
    %c32 = arith.constant 32 : index
    %69 = vector.load %arg9[%c0_41, %c32] : memref<16x128xf32, #tpu.memory_space<vmem>>, vector<16x32xf32>
    %70 = vector.broadcast %56 : vector<16x1xf32> to vector<16x32xf32>
    %71 = arith.mulf %70, %69 : vector<16x32xf32>
    %72 = arith.truncf %59 : vector<16x16xf32> to vector<16x16xbf16>
    %cst_42 = arith.constant dense<0.000000e+00> : vector<16x32xf32>
    %73 = tpu.matmul %72, %46, %cst_42 {dimension_numbers = #tpu.dot_dimension_numbers<[1], [0], [0], [1], [0, 0, 1, 1], [], []>} : vector<16x16xbf16>, vector<16x32xbf16>, vector<16x32xf32> -> vector<16x32xf32>
    %74 = arith.addf %71, %73 : vector<16x32xf32>
    %c0_43 = arith.constant 0 : index
    %c32_44 = arith.constant 32 : index
    %75 = vector.load %arg9[%c0_43, %c32_44] : memref<16x128xf32, #tpu.memory_space<vmem>>, vector<16x32xf32>
    tpu.vector_store %arg9[%c0_43, %c32_44], %74 {strides = array<i32>} : memref<16x128xf32, #tpu.memory_space<vmem>>, vector<16x32xf32>,
    %c1_45 = arith.constant 1 : index
    %c0_46 = arith.constant 0 : index
    %c0_47 = arith.constant 0 : index
    %76 = vector.load %arg7[%c1_45, %c0_46, %c0_47] : memref<4x16x1xf32, #tpu.memory_space<vmem>>, vector<1x16x1xf32>
    %77 = vector.shape_cast %76 : vector<1x16x1xf32> to vector<16x1xf32>
    %78 = vector.shape_cast %54 : vector<16x1xf32> to vector<1x16x1xf32>
    tpu.vector_store %arg7[%c1_45, %c0_46, %c0_47], %78 {strides = array<i32>} : memref<4x16x1xf32, #tpu.memory_space<vmem>>, vector<1x16x1xf32>,
    %79 = vector.extract_strided_slice %4 {offsets = [0, 64], sizes = [16, 32], strides = [1, 1]} : vector<16x128xbf16> to vector<16x32xbf16>
    %80 = vector.extract_strided_slice %6 {offsets = [0, 64], sizes = [16, 32], strides = [1, 1]} : vector<16x128xbf16> to vector<16x32xbf16>
    %81 = vector.extract_strided_slice %8 {offsets = [0, 64], sizes = [16, 32], strides = [1, 1]} : vector<16x128xbf16> to vector<16x32xbf16>
    %cst_48 = arith.constant dense<0.000000e+00> : vector<16x16xf32>
    %82 = tpu.matmul %79, %80, %cst_48 {dimension_numbers = #tpu.dot_dimension_numbers<[1], [1], [0], [0], [0, 0, 1, 0], [], []>} : vector<16x32xbf16>, vector<16x32xbf16>, vector<16x16xf32> -> vector<16x16xf32>
    %cst_49 = arith.constant 0.176776692 : f32
    %83 = vector.broadcast %cst_49 : f32 to vector<16x16xf32>
    %84 = arith.mulf %82, %83 : vector<16x16xf32>
    %c2 = arith.constant 2 : index
    %c0_50 = arith.constant 0 : index
    %c0_51 = arith.constant 0 : index
    %85 = vector.load %arg7[%c2, %c0_50, %c0_51] : memref<4x16x1xf32, #tpu.memory_space<vmem>>, vector<1x16x1xf32>
    %86 = vector.shape_cast %85 : vector<1x16x1xf32> to vector<16x1xf32>
    %cst_52 = arith.constant dense<0xFF800000> : vector<16xf32>
    %87 = vector.multi_reduction <maximumf>, %84, %cst_52 [1] : vector<16x16xf32> to vector<16xf32>
    %88 = vector.shape_cast %87 : vector<16xf32> to vector<16x1xf32>
    %89 = arith.maximumf %86, %88 : vector<16x1xf32>
    %90 = arith.subf %86, %89 : vector<16x1xf32>
    %91 = math.exp %90 : vector<16x1xf32>
    %92 = vector.broadcast %89 : vector<16x1xf32> to vector<16x16xf32>
    %93 = arith.subf %84, %92 : vector<16x16xf32>
    %94 = math.exp %93 : vector<16x16xf32>
    %c2_53 = arith.constant 2 : index
    %c0_54 = arith.constant 0 : index
    %c0_55 = arith.constant 0 : index
    %95 = vector.load %arg8[%c2_53, %c0_54, %c0_55] : memref<4x16x1xf32, #tpu.memory_space<vmem>>, vector<1x16x1xf32>
    %96 = vector.shape_cast %95 : vector<1x16x1xf32> to vector<16x1xf32>
    %97 = arith.mulf %91, %96 : vector<16x1xf32>
    %cst_56 = arith.constant dense<0.000000e+00> : vector<16xf32>
    %98 = vector.multi_reduction <add>, %94, %cst_56 [1] : vector<16x16xf32> to vector<16xf32>
    %99 = vector.shape_cast %98 : vector<16xf32> to vector<16x1xf32>
    %100 = arith.addf %97, %99 : vector<16x1xf32>
    %c2_57 = arith.constant 2 : index
    %c0_58 = arith.constant 0 : index
    %c0_59 = arith.constant 0 : index
    %101 = vector.load %arg8[%c2_57, %c0_58, %c0_59] : memref<4x16x1xf32, #tpu.memory_space<vmem>>, vector<1x16x1xf32>
    %102 = vector.shape_cast %101 : vector<1x16x1xf32> to vector<16x1xf32>
    %103 = vector.shape_cast %100 : vector<16x1xf32> to vector<1x16x1xf32>
    tpu.vector_store %arg8[%c2_57, %c0_58, %c0_59], %103 {strides = array<i32>} : memref<4x16x1xf32, #tpu.memory_space<vmem>>, vector<1x16x1xf32>,
    %c0_60 = arith.constant 0 : index
    %c64 = arith.constant 64 : index
    %104 = vector.load %arg9[%c0_60, %c64] : memref<16x128xf32, #tpu.memory_space<vmem>>, vector<16x32xf32>
    %105 = vector.broadcast %91 : vector<16x1xf32> to vector<16x32xf32>
    %106 = arith.mulf %105, %104 : vector<16x32xf32>
    %107 = arith.truncf %94 : vector<16x16xf32> to vector<16x16xbf16>
    %cst_61 = arith.constant dense<0.000000e+00> : vector<16x32xf32>
    %108 = tpu.matmul %107, %81, %cst_61 {dimension_numbers = #tpu.dot_dimension_numbers<[1], [0], [0], [1], [0, 0, 1, 1], [], []>} : vector<16x16xbf16>, vector<16x32xbf16>, vector<16x32xf32> -> vector<16x32xf32>
    %109 = arith.addf %106, %108 : vector<16x32xf32>
    %c0_62 = arith.constant 0 : index
    %c64_63 = arith.constant 64 : index
    %110 = vector.load %arg9[%c0_62, %c64_63] : memref<16x128xf32, #tpu.memory_space<vmem>>, vector<16x32xf32>
    tpu.vector_store %arg9[%c0_62, %c64_63], %109 {strides = array<i32>} : memref<16x128xf32, #tpu.memory_space<vmem>>, vector<16x32xf32>,
    %c2_64 = arith.constant 2 : index
    %c0_65 = arith.constant 0 : index
    %c0_66 = arith.constant 0 : index
    %111 = vector.load %arg7[%c2_64, %c0_65, %c0_66] : memref<4x16x1xf32, #tpu.memory_space<vmem>>, vector<1x16x1xf32>
    %112 = vector.shape_cast %111 : vector<1x16x1xf32> to vector<16x1xf32>
    %113 = vector.shape_cast %89 : vector<16x1xf32> to vector<1x16x1xf32>
    tpu.vector_store %arg7[%c2_64, %c0_65, %c0_66], %113 {strides = array<i32>} : memref<4x16x1xf32, #tpu.memory_space<vmem>>, vector<1x16x1xf32>,
    %114 = vector.extract_strided_slice %4 {offsets = [0, 96], sizes = [16, 32], strides = [1, 1]} : vector<16x128xbf16> to vector<16x32xbf16>
    %115 = vector.extract_strided_slice %6 {offsets = [0, 96], sizes = [16, 32], strides = [1, 1]} : vector<16x128xbf16> to vector<16x32xbf16>
    %116 = vector.extract_strided_slice %8 {offsets = [0, 96], sizes = [16, 32], strides = [1, 1]} : vector<16x128xbf16> to vector<16x32xbf16>
    %cst_67 = arith.constant dense<0.000000e+00> : vector<16x16xf32>
    %117 = tpu.matmul %114, %115, %cst_67 {dimension_numbers = #tpu.dot_dimension_numbers<[1], [1], [0], [0], [0, 0, 1, 0], [], []>} : vector<16x32xbf16>, vector<16x32xbf16>, vector<16x16xf32> -> vector<16x16xf32>
    %cst_68 = arith.constant 0.176776692 : f32
    %118 = vector.broadcast %cst_68 : f32 to vector<16x16xf32>
    %119 = arith.mulf %117, %118 : vector<16x16xf32>
    %c3 = arith.constant 3 : index
    %c0_69 = arith.constant 0 : index
    %c0_70 = arith.constant 0 : index
    %120 = vector.load %arg7[%c3, %c0_69, %c0_70] : memref<4x16x1xf32, #tpu.memory_space<vmem>>, vector<1x16x1xf32>
    %121 = vector.shape_cast %120 : vector<1x16x1xf32> to vector<16x1xf32>
    %cst_71 = arith.constant dense<0xFF800000> : vector<16xf32>
    %122 = vector.multi_reduction <maximumf>, %119, %cst_71 [1] : vector<16x16xf32> to vector<16xf32>
    %123 = vector.shape_cast %122 : vector<16xf32> to vector<16x1xf32>
    %124 = arith.maximumf %121, %123 : vector<16x1xf32>
    %125 = arith.subf %121, %124 : vector<16x1xf32>
    %126 = math.exp %125 : vector<16x1xf32>
    %127 = vector.broadcast %124 : vector<16x1xf32> to vector<16x16xf32>
    %128 = arith.subf %119, %127 : vector<16x16xf32>
    %129 = math.exp %128 : vector<16x16xf32>
    %c3_72 = arith.constant 3 : index
    %c0_73 = arith.constant 0 : index
    %c0_74 = arith.constant 0 : index
    %130 = vector.load %arg8[%c3_72, %c0_73, %c0_74] : memref<4x16x1xf32, #tpu.memory_space<vmem>>, vector<1x16x1xf32>
    %131 = vector.shape_cast %130 : vector<1x16x1xf32> to vector<16x1xf32>
    %132 = arith.mulf %126, %131 : vector<16x1xf32>
    %cst_75 = arith.constant dense<0.000000e+00> : vector<16xf32>
    %133 = vector.multi_reduction <add>, %129, %cst_75 [1] : vector<16x16xf32> to vector<16xf32>
    %134 = vector.shape_cast %133 : vector<16xf32> to vector<16x1xf32>
    %135 = arith.addf %132, %134 : vector<16x1xf32>
    %c3_76 = arith.constant 3 : index
    %c0_77 = arith.constant 0 : index
    %c0_78 = arith.constant 0 : index
    %136 = vector.load %arg8[%c3_76, %c0_77, %c0_78] : memref<4x16x1xf32, #tpu.memory_space<vmem>>, vector<1x16x1xf32>
    %137 = vector.shape_cast %136 : vector<1x16x1xf32> to vector<16x1xf32>
    %138 = vector.shape_cast %135 : vector<16x1xf32> to vector<1x16x1xf32>
    tpu.vector_store %arg8[%c3_76, %c0_77, %c0_78], %138 {strides = array<i32>} : memref<4x16x1xf32, #tpu.memory_space<vmem>>, vector<1x16x1xf32>,
    %c0_79 = arith.constant 0 : index
    %c96 = arith.constant 96 : index
    %139 = vector.load %arg9[%c0_79, %c96] : memref<16x128xf32, #tpu.memory_space<vmem>>, vector<16x32xf32>
    %140 = vector.broadcast %126 : vector<16x1xf32> to vector<16x32xf32>
    %141 = arith.mulf %140, %139 : vector<16x32xf32>
    %142 = arith.truncf %129 : vector<16x16xf32> to vector<16x16xbf16>
    %cst_80 = arith.constant dense<0.000000e+00> : vector<16x32xf32>
    %143 = tpu.matmul %142, %116, %cst_80 {dimension_numbers = #tpu.dot_dimension_numbers<[1], [0], [0], [1], [0, 0, 1, 1], [], []>} : vector<16x16xbf16>, vector<16x32xbf16>, vector<16x32xf32> -> vector<16x32xf32>
    %144 = arith.addf %141, %143 : vector<16x32xf32>
    %c0_81 = arith.constant 0 : index
    %c96_82 = arith.constant 96 : index
    %145 = vector.load %arg9[%c0_81, %c96_82] : memref<16x128xf32, #tpu.memory_space<vmem>>, vector<16x32xf32>
    tpu.vector_store %arg9[%c0_81, %c96_82], %144 {strides = array<i32>} : memref<16x128xf32, #tpu.memory_space<vmem>>, vector<16x32xf32>,
    %c3_83 = arith.constant 3 : index
    %c0_84 = arith.constant 0 : index
    %c0_85 = arith.constant 0 : index
    %146 = vector.load %arg7[%c3_83, %c0_84, %c0_85] : memref<4x16x1xf32, #tpu.memory_space<vmem>>, vector<1x16x1xf32>
    %147 = vector.shape_cast %146 : vector<1x16x1xf32> to vector<16x1xf32>
    %148 = vector.shape_cast %124 : vector<16x1xf32> to vector<1x16x1xf32>
    tpu.vector_store %arg7[%c3_83, %c0_84, %c0_85], %148 {strides = array<i32>} : memref<4x16x1xf32, #tpu.memory_space<vmem>>, vector<1x16x1xf32>,
    %c0_i32_86 = arith.constant 0 : i32
    %149 = arith.cmpi eq, %arg2, %c0_i32_86 : i32
    %150 = arith.extui %149 : i1 to i32
    %c0_i32_87 = arith.constant 0 : i32
    %151 = arith.cmpi ne, %150, %c0_i32_87 : i32
    scf.if %151 {
      %c0_88 = arith.constant 0 : index
      %c0_89 = arith.constant 0 : index
      %c0_90 = arith.constant 0 : index
      %152 = vector.load %arg8[%c0_88, %c0_89, %c0_90] : memref<4x16x1xf32, #tpu.memory_space<vmem>>, vector<1x16x1xf32>
      %153 = vector.shape_cast %152 : vector<1x16x1xf32> to vector<16x1xf32>
      %154 = tpu.reciprocal %153 {approx = true} : vector<16x1xf32> -> vector<16x1xf32>
      %c0_91 = arith.constant 0 : index
      %c0_92 = arith.constant 0 : index
      %155 = vector.load %arg9[%c0_91, %c0_92] : memref<16x128xf32, #tpu.memory_space<vmem>>, vector<16x32xf32>
      %156 = vector.broadcast %154 : vector<16x1xf32> to vector<16x32xf32>
      %157 = arith.mulf %155, %156 : vector<16x32xf32>
      %c0_93 = arith.constant 0 : index
      %c0_94 = arith.constant 0 : index
      %158 = vector.load %arg9[%c0_93, %c0_94] : memref<16x128xf32, #tpu.memory_space<vmem>>, vector<16x32xf32>
      tpu.vector_store %arg9[%c0_93, %c0_94], %157 {strides = array<i32>} : memref<16x128xf32, #tpu.memory_space<vmem>>, vector<16x32xf32>,
      %c1_95 = arith.constant 1 : index
      %c0_96 = arith.constant 0 : index
      %c0_97 = arith.constant 0 : index
      %159 = vector.load %arg8[%c1_95, %c0_96, %c0_97] : memref<4x16x1xf32, #tpu.memory_space<vmem>>, vector<1x16x1xf32>
      %160 = vector.shape_cast %159 : vector<1x16x1xf32> to vector<16x1xf32>
      %161 = tpu.reciprocal %160 {approx = true} : vector<16x1xf32> -> vector<16x1xf32>
      %c0_98 = arith.constant 0 : index
      %c32_99 = arith.constant 32 : index
      %162 = vector.load %arg9[%c0_98, %c32_99] : memref<16x128xf32, #tpu.memory_space<vmem>>, vector<16x32xf32>
      %163 = vector.broadcast %161 : vector<16x1xf32> to vector<16x32xf32>
      %164 = arith.mulf %162, %163 : vector<16x32xf32>
      %c0_100 = arith.constant 0 : index
      %c32_101 = arith.constant 32 : index
      %165 = vector.load %arg9[%c0_100, %c32_101] : memref<16x128xf32, #tpu.memory_space<vmem>>, vector<16x32xf32>
      tpu.vector_store %arg9[%c0_100, %c32_101], %164 {strides = array<i32>} : memref<16x128xf32, #tpu.memory_space<vmem>>, vector<16x32xf32>,
      %c2_102 = arith.constant 2 : index
      %c0_103 = arith.constant 0 : index
      %c0_104 = arith.constant 0 : index
      %166 = vector.load %arg8[%c2_102, %c0_103, %c0_104] : memref<4x16x1xf32, #tpu.memory_space<vmem>>, vector<1x16x1xf32>
      %167 = vector.shape_cast %166 : vector<1x16x1xf32> to vector<16x1xf32>
      %168 = tpu.reciprocal %167 {approx = true} : vector<16x1xf32> -> vector<16x1xf32>
      %c0_105 = arith.constant 0 : index
      %c64_106 = arith.constant 64 : index
      %169 = vector.load %arg9[%c0_105, %c64_106] : memref<16x128xf32, #tpu.memory_space<vmem>>, vector<16x32xf32>
      %170 = vector.broadcast %168 : vector<16x1xf32> to vector<16x32xf32>
      %171 = arith.mulf %169, %170 : vector<16x32xf32>
      %c0_107 = arith.constant 0 : index
      %c64_108 = arith.constant 64 : index
      %172 = vector.load %arg9[%c0_107, %c64_108] : memref<16x128xf32, #tpu.memory_space<vmem>>, vector<16x32xf32>
      tpu.vector_store %arg9[%c0_107, %c64_108], %171 {strides = array<i32>} : memref<16x128xf32, #tpu.memory_space<vmem>>, vector<16x32xf32>,
      %c3_109 = arith.constant 3 : index
      %c0_110 = arith.constant 0 : index
      %c0_111 = arith.constant 0 : index
      %173 = vector.load %arg8[%c3_109, %c0_110, %c0_111] : memref<4x16x1xf32, #tpu.memory_space<vmem>>, vector<1x16x1xf32>
      %174 = vector.shape_cast %173 : vector<1x16x1xf32> to vector<16x1xf32>
      %175 = tpu.reciprocal %174 {approx = true} : vector<16x1xf32> -> vector<16x1xf32>
      %c0_112 = arith.constant 0 : index
      %c96_113 = arith.constant 96 : index
      %176 = vector.load %arg9[%c0_112, %c96_113] : memref<16x128xf32, #tpu.memory_space<vmem>>, vector<16x32xf32>
      %177 = vector.broadcast %175 : vector<16x1xf32> to vector<16x32xf32>
      %178 = arith.mulf %176, %177 : vector<16x32xf32>
      %c0_114 = arith.constant 0 : index
      %c96_115 = arith.constant 96 : index
      %179 = vector.load %arg9[%c0_114, %c96_115] : memref<16x128xf32, #tpu.memory_space<vmem>>, vector<16x32xf32>
      tpu.vector_store %arg9[%c0_114, %c96_115], %178 {strides = array<i32>} : memref<16x128xf32, #tpu.memory_space<vmem>>, vector<16x32xf32>,
      %c0_116 = arith.constant 0 : index
      %c0_117 = arith.constant 0 : index
      %180 = vector.load %arg9[%c0_116, %c0_117] : memref<16x128xf32, #tpu.memory_space<vmem>>, vector<16x128xf32>
      %181 = arith.truncf %180 : vector<16x128xf32> to vector<16x128xbf16>
      %c0_118 = arith.constant 0 : index
      %c0_119 = arith.constant 0 : index
      %c0_120 = arith.constant 0 : index
      %182 = vector.load %arg6[%c0_118, %c0_119, %c0_120] : memref<1x16x128xbf16, #tpu.memory_space<vmem>>, vector<1x16x128xbf16>
      %183 = vector.shape_cast %182 : vector<1x16x128xbf16> to vector<16x128xbf16>
      %184 = vector.shape_cast %181 : vector<16x128xbf16> to vector<1x16x128xbf16>
      tpu.vector_store %arg6[%c0_118, %c0_119, %c0_120], %184 {strides = array<i32>} : memref<1x16x128xbf16, #tpu.memory_space<vmem>>, vector<1x16x128xbf16>,
    } else {
    }
    return
  }
  func.func @transform_0(%arg0: i32, %arg1: i32, %arg2: i32) -> (i32, i32, i32) {
    %c0_i32 = arith.constant 0 : i32
    %c0_i32_0 = arith.constant 0 : i32
    return %arg0, %arg1, %c0_i32 : i32, i32, i32
  }
  func.func @transform_1(%arg0: i32, %arg1: i32, %arg2: i32) -> (i32, i32, i32) {
    %c1_i32 = arith.constant 1 : i32
    %c0_i32 = arith.constant 0 : i32
    return %arg0, %arg2, %c1_i32 : i32, i32, i32
  }
  func.func @transform_2(%arg0: i32, %arg1: i32, %arg2: i32) -> (i32, i32, i32) {
    %c2_i32 = arith.constant 2 : i32
    %c0_i32 = arith.constant 0 : i32
    return %arg0, %arg2, %c2_i32 : i32, i32, i32
  }
  func.func @transform_3(%arg0: i32, %arg1: i32, %arg2: i32) -> (i32, i32, i32) {
    %c0_i32 = arith.constant 0 : i32
    %c0_i32_0 = arith.constant 0 : i32
    return %arg0, %arg1, %c0_i32 : i32, i32, i32
  }
}

module attributes {stable_mosaic.version = 11 : i64} {
  func.func @_linear_res_ln_kernel(%arg0: i32, %arg1: i32, %arg2: i32, %arg3: memref<32x128xbf16, #tpu.memory_space<vmem>>, %arg4: memref<128x128xbf16, #tpu.memory_space<vmem>>, %arg5: memref<1x128xf32, #tpu.memory_space<vmem>>, %arg6: memref<32x128xbf16, #tpu.memory_space<vmem>>, %arg7: memref<1x128xf32, #tpu.memory_space<vmem>>, %arg8: memref<1x128xf32, #tpu.memory_space<vmem>>, %arg9: memref<32x128xbf16, #tpu.memory_space<vmem>>, %arg10: memref<32x128xf32, #tpu.memory_space<vmem>>) attributes {dimension_semantics = [#tpu.dimension_semantics<parallel>, #tpu.dimension_semantics<parallel>, #tpu.dimension_semantics<arbitrary>], iteration_bounds = array<i64: 1, 1, 1>, scalar_prefetch = 0 : i64, scratch_operands = 1 : i64, tpu.core_type = #tpu.core_type<tc>, window_params = [{transform_indices = @transform_0, window_bounds = array<i64: 32, 128>}, {transform_indices = @transform_1, window_bounds = array<i64: 128, 128>}, {transform_indices = @transform_2, window_bounds = array<i64: 1, 128>}, {transform_indices = @transform_3, window_bounds = array<i64: 32, 128>}, {transform_indices = @transform_4, window_bounds = array<i64: 1, 128>}, {transform_indices = @transform_5, window_bounds = array<i64: 1, 128>}, {transform_indices = @transform_6, window_bounds = array<i64: 32, 128>}]} {
    %c0_i32 = arith.constant 0 : i32
    %0 = arith.cmpi eq, %arg2, %c0_i32 : i32
    %1 = arith.extui %0 : i1 to i32
    %c0_i32_0 = arith.constant 0 : i32
    %2 = arith.cmpi ne, %1, %c0_i32_0 : i32
    scf.if %2 {
      %cst_10 = arith.constant 0.000000e+00 : f32
      %12 = vector.broadcast %cst_10 : f32 to vector<32x128xf32>
      %c0_11 = arith.constant 0 : index
      %c0_12 = arith.constant 0 : index
      %13 = vector.load %arg10[%c0_11, %c0_12] : memref<32x128xf32, #tpu.memory_space<vmem>>, vector<32x128xf32>
      tpu.vector_store %arg10[%c0_11, %c0_12], %12 {strides = array<i32>} : memref<32x128xf32, #tpu.memory_space<vmem>>, vector<32x128xf32>,
    } else {
    }
    %c0 = arith.constant 0 : index
    %c0_1 = arith.constant 0 : index
    %3 = vector.load %arg10[%c0, %c0_1] : memref<32x128xf32, #tpu.memory_space<vmem>>, vector<32x128xf32>
    %c0_2 = arith.constant 0 : index
    %c0_3 = arith.constant 0 : index
    %4 = vector.load %arg3[%c0_2, %c0_3] : memref<32x128xbf16, #tpu.memory_space<vmem>>, vector<32x128xbf16>
    %c0_4 = arith.constant 0 : index
    %c0_5 = arith.constant 0 : index
    %5 = vector.load %arg4[%c0_4, %c0_5] : memref<128x128xbf16, #tpu.memory_space<vmem>>, vector<128x128xbf16>
    %cst = arith.constant dense<0.000000e+00> : vector<32x128xf32>
    %6 = tpu.matmul %4, %5, %cst {dimension_numbers = #tpu.dot_dimension_numbers<[1], [0], [0], [1], [0, 0, 1, 1], [], []>} : vector<32x128xbf16>, vector<128x128xbf16>, vector<32x128xf32> -> vector<32x128xf32>
    %7 = arith.addf %3, %6 : vector<32x128xf32>
    %c0_6 = arith.constant 0 : index
    %c0_7 = arith.constant 0 : index
    %8 = vector.load %arg10[%c0_6, %c0_7] : memref<32x128xf32, #tpu.memory_space<vmem>>, vector<32x128xf32>
    tpu.vector_store %arg10[%c0_6, %c0_7], %7 {strides = array<i32>} : memref<32x128xf32, #tpu.memory_space<vmem>>, vector<32x128xf32>,
    %c0_i32_8 = arith.constant 0 : i32
    %9 = arith.cmpi eq, %arg2, %c0_i32_8 : i32
    %10 = arith.extui %9 : i1 to i32
    %c0_i32_9 = arith.constant 0 : i32
    %11 = arith.cmpi ne, %10, %c0_i32_9 : i32
    scf.if %11 {
      %c0_10 = arith.constant 0 : index
      %c0_11 = arith.constant 0 : index
      %12 = vector.load %arg10[%c0_10, %c0_11] : memref<32x128xf32, #tpu.memory_space<vmem>>, vector<32x128xf32>
      %c0_12 = arith.constant 0 : index
      %c0_13 = arith.constant 0 : index
      %13 = vector.load %arg5[%c0_12, %c0_13] : memref<1x128xf32, #tpu.memory_space<vmem>>, vector<1x128xf32>
      %14 = vector.broadcast %13 : vector<1x128xf32> to vector<32x128xf32>
      %15 = arith.addf %12, %14 : vector<32x128xf32>
      %c0_14 = arith.constant 0 : index
      %c0_15 = arith.constant 0 : index
      %16 = vector.load %arg6[%c0_14, %c0_15] : memref<32x128xbf16, #tpu.memory_space<vmem>>, vector<32x128xbf16>
      %17 = arith.extf %16 : vector<32x128xbf16> to vector<32x128xf32>
      %18 = arith.addf %15, %17 : vector<32x128xf32>
      %cst_16 = arith.constant dense<0.000000e+00> : vector<32xf32>
      %19 = vector.multi_reduction <add>, %18, %cst_16 [1] : vector<32x128xf32> to vector<32xf32>
      %20 = vector.shape_cast %19 : vector<32xf32> to vector<32x1xf32>
      %cst_17 = arith.constant 1.280000e+02 : f32
      %21 = vector.broadcast %cst_17 : f32 to vector<32x1xf32>
      %22 = arith.divf %20, %21 : vector<32x1xf32>
      %23 = vector.broadcast %22 : vector<32x1xf32> to vector<32x128xf32>
      %24 = arith.subf %18, %23 : vector<32x128xf32>
      %25 = arith.mulf %24, %24 : vector<32x128xf32>
      %cst_18 = arith.constant dense<0.000000e+00> : vector<32xf32>
      %26 = vector.multi_reduction <add>, %25, %cst_18 [1] : vector<32x128xf32> to vector<32xf32>
      %27 = vector.shape_cast %26 : vector<32xf32> to vector<32x1xf32>
      %cst_19 = arith.constant 1.280000e+02 : f32
      %28 = vector.broadcast %cst_19 : f32 to vector<32x1xf32>
      %29 = arith.divf %27, %28 : vector<32x1xf32>
      %cst_20 = arith.constant 9.99999974E-6 : f32
      %30 = vector.broadcast %cst_20 : f32 to vector<32x1xf32>
      %31 = arith.addf %29, %30 : vector<32x1xf32>
      %32 = math.rsqrt %31 : vector<32x1xf32>
      %33 = vector.broadcast %32 : vector<32x1xf32> to vector<32x128xf32>
      %34 = arith.mulf %24, %33 : vector<32x128xf32>
      %c0_21 = arith.constant 0 : index
      %c0_22 = arith.constant 0 : index
      %35 = vector.load %arg7[%c0_21, %c0_22] : memref<1x128xf32, #tpu.memory_space<vmem>>, vector<1x128xf32>
      %36 = vector.broadcast %35 : vector<1x128xf32> to vector<32x128xf32>
      %37 = arith.mulf %34, %36 : vector<32x128xf32>
      %c0_23 = arith.constant 0 : index
      %c0_24 = arith.constant 0 : index
      %38 = vector.load %arg8[%c0_23, %c0_24] : memref<1x128xf32, #tpu.memory_space<vmem>>, vector<1x128xf32>
      %39 = vector.broadcast %38 : vector<1x128xf32> to vector<32x128xf32>
      %40 = arith.addf %37, %39 : vector<32x128xf32>
      %41 = arith.truncf %40 : vector<32x128xf32> to vector<32x128xbf16>
      %c0_25 = arith.constant 0 : index
      %c0_26 = arith.constant 0 : index
      %42 = vector.load %arg9[%c0_25, %c0_26] : memref<32x128xbf16, #tpu.memory_space<vmem>>, vector<32x128xbf16>
      tpu.vector_store %arg9[%c0_25, %c0_26], %41 {strides = array<i32>} : memref<32x128xbf16, #tpu.memory_space<vmem>>, vector<32x128xbf16>,
    } else {
    }
    return
  }
  func.func @transform_0(%arg0: i32, %arg1: i32, %arg2: i32) -> (i32, i32) {
    %c0_i32 = arith.constant 0 : i32
    return %arg0, %arg2 : i32, i32
  }
  func.func @transform_1(%arg0: i32, %arg1: i32, %arg2: i32) -> (i32, i32) {
    %c0_i32 = arith.constant 0 : i32
    return %arg2, %arg1 : i32, i32
  }
  func.func @transform_2(%arg0: i32, %arg1: i32, %arg2: i32) -> (i32, i32) {
    %c0_i32 = arith.constant 0 : i32
    %c0_i32_0 = arith.constant 0 : i32
    return %c0_i32, %arg1 : i32, i32
  }
  func.func @transform_3(%arg0: i32, %arg1: i32, %arg2: i32) -> (i32, i32) {
    %c0_i32 = arith.constant 0 : i32
    return %arg0, %arg1 : i32, i32
  }
  func.func @transform_4(%arg0: i32, %arg1: i32, %arg2: i32) -> (i32, i32) {
    %c0_i32 = arith.constant 0 : i32
    %c0_i32_0 = arith.constant 0 : i32
    return %c0_i32, %arg1 : i32, i32
  }
  func.func @transform_5(%arg0: i32, %arg1: i32, %arg2: i32) -> (i32, i32) {
    %c0_i32 = arith.constant 0 : i32
    %c0_i32_0 = arith.constant 0 : i32
    return %c0_i32, %arg1 : i32, i32
  }
  func.func @transform_6(%arg0: i32, %arg1: i32, %arg2: i32) -> (i32, i32) {
    %c0_i32 = arith.constant 0 : i32
    return %arg0, %arg1 : i32, i32
  }
}

module attributes {stable_mosaic.version = 11 : i64} {
  func.func @_linear_kernel(%arg0: i32, %arg1: i32, %arg2: i32, %arg3: memref<32x128xbf16, #tpu.memory_space<vmem>>, %arg4: memref<128x32xbf16, #tpu.memory_space<vmem>>, %arg5: memref<1x32xf32, #tpu.memory_space<vmem>>, %arg6: memref<32x32xf32, #tpu.memory_space<vmem>>, %arg7: memref<32x32xf32, #tpu.memory_space<vmem>>) attributes {dimension_semantics = [#tpu.dimension_semantics<parallel>, #tpu.dimension_semantics<parallel>, #tpu.dimension_semantics<arbitrary>], iteration_bounds = array<i64: 1, 1, 1>, scalar_prefetch = 0 : i64, scratch_operands = 1 : i64, tpu.core_type = #tpu.core_type<tc>, window_params = [{transform_indices = @transform_0, window_bounds = array<i64: 32, 128>}, {transform_indices = @transform_1, window_bounds = array<i64: 128, 32>}, {transform_indices = @transform_2, window_bounds = array<i64: 1, 32>}, {transform_indices = @transform_3, window_bounds = array<i64: 32, 32>}]} {
    %c0_i32 = arith.constant 0 : i32
    %0 = arith.cmpi eq, %arg2, %c0_i32 : i32
    %1 = arith.extui %0 : i1 to i32
    %c0_i32_0 = arith.constant 0 : i32
    %2 = arith.cmpi ne, %1, %c0_i32_0 : i32
    scf.if %2 {
      %cst_10 = arith.constant 0.000000e+00 : f32
      %12 = vector.broadcast %cst_10 : f32 to vector<32x32xf32>
      %c0_11 = arith.constant 0 : index
      %c0_12 = arith.constant 0 : index
      %13 = vector.load %arg7[%c0_11, %c0_12] : memref<32x32xf32, #tpu.memory_space<vmem>>, vector<32x32xf32>
      tpu.vector_store %arg7[%c0_11, %c0_12], %12 {strides = array<i32>} : memref<32x32xf32, #tpu.memory_space<vmem>>, vector<32x32xf32>,
    } else {
    }
    %c0 = arith.constant 0 : index
    %c0_1 = arith.constant 0 : index
    %3 = vector.load %arg7[%c0, %c0_1] : memref<32x32xf32, #tpu.memory_space<vmem>>, vector<32x32xf32>
    %c0_2 = arith.constant 0 : index
    %c0_3 = arith.constant 0 : index
    %4 = vector.load %arg3[%c0_2, %c0_3] : memref<32x128xbf16, #tpu.memory_space<vmem>>, vector<32x128xbf16>
    %c0_4 = arith.constant 0 : index
    %c0_5 = arith.constant 0 : index
    %5 = vector.load %arg4[%c0_4, %c0_5] : memref<128x32xbf16, #tpu.memory_space<vmem>>, vector<128x32xbf16>
    %cst = arith.constant dense<0.000000e+00> : vector<32x32xf32>
    %6 = tpu.matmul %4, %5, %cst {dimension_numbers = #tpu.dot_dimension_numbers<[1], [0], [0], [1], [0, 0, 1, 1], [], []>} : vector<32x128xbf16>, vector<128x32xbf16>, vector<32x32xf32> -> vector<32x32xf32>
    %7 = arith.addf %3, %6 : vector<32x32xf32>
    %c0_6 = arith.constant 0 : index
    %c0_7 = arith.constant 0 : index
    %8 = vector.load %arg7[%c0_6, %c0_7] : memref<32x32xf32, #tpu.memory_space<vmem>>, vector<32x32xf32>
    tpu.vector_store %arg7[%c0_6, %c0_7], %7 {strides = array<i32>} : memref<32x32xf32, #tpu.memory_space<vmem>>, vector<32x32xf32>,
    %c0_i32_8 = arith.constant 0 : i32
    %9 = arith.cmpi eq, %arg2, %c0_i32_8 : i32
    %10 = arith.extui %9 : i1 to i32
    %c0_i32_9 = arith.constant 0 : i32
    %11 = arith.cmpi ne, %10, %c0_i32_9 : i32
    scf.if %11 {
      %c0_10 = arith.constant 0 : index
      %c0_11 = arith.constant 0 : index
      %12 = vector.load %arg7[%c0_10, %c0_11] : memref<32x32xf32, #tpu.memory_space<vmem>>, vector<32x32xf32>
      %c0_12 = arith.constant 0 : index
      %c0_13 = arith.constant 0 : index
      %13 = vector.load %arg5[%c0_12, %c0_13] : memref<1x32xf32, #tpu.memory_space<vmem>>, vector<1x32xf32>
      %14 = vector.broadcast %13 : vector<1x32xf32> to vector<32x32xf32>
      %15 = arith.addf %12, %14 : vector<32x32xf32>
      %c0_14 = arith.constant 0 : index
      %c0_15 = arith.constant 0 : index
      %16 = vector.load %arg6[%c0_14, %c0_15] : memref<32x32xf32, #tpu.memory_space<vmem>>, vector<32x32xf32>
      tpu.vector_store %arg6[%c0_14, %c0_15], %15 {strides = array<i32>} : memref<32x32xf32, #tpu.memory_space<vmem>>, vector<32x32xf32>,
    } else {
    }
    return
  }
  func.func @transform_0(%arg0: i32, %arg1: i32, %arg2: i32) -> (i32, i32) {
    %c0_i32 = arith.constant 0 : i32
    return %arg0, %arg2 : i32, i32
  }
  func.func @transform_1(%arg0: i32, %arg1: i32, %arg2: i32) -> (i32, i32) {
    %c0_i32 = arith.constant 0 : i32
    return %arg2, %arg1 : i32, i32
  }
  func.func @transform_2(%arg0: i32, %arg1: i32, %arg2: i32) -> (i32, i32) {
    %c0_i32 = arith.constant 0 : i32
    %c0_i32_0 = arith.constant 0 : i32
    return %c0_i32, %arg1 : i32, i32
  }
  func.func @transform_3(%arg0: i32, %arg1: i32, %arg2: i32) -> (i32, i32) {
    %c0_i32 = arith.constant 0 : i32
    return %arg0, %arg1 : i32, i32
  }
}

</mosaic_0001>

<llo_original>
// kernel: transformer_forward.10
$region0: #{transformer_forward.10}
  #allocation0 [shape = 'u32[]', space=smem, size = 0x4, offset = 0x4, fixed_abs, tag = 'smem constant byte address 0x4 - core index']
  #allocation1 [shape = 'u32[144,128]{1,0:T(1,128)}', space=vmem, size = 0x12000, scoped, tag = 'internal scratch']
  #allocation2 [shape = 'f32[16,128]{1,0:T(8,128)}', space=vmem, size = 0x2000, scoped, tag = 'scratch operand']
  %s0 = inlined_call_operand.vmem [shape: f32[2,16,32], index: 0, kind: input, shape index: {}]
  %s1 = inlined_call_operand.vmem [shape: bf16[32,128], index: 1, kind: input, shape index: {}]
  %s2 = inlined_call_operand.vmem [shape: f32[1,128], index: 2, kind: input, shape index: {}]
  %s3 = inlined_call_operand.vmem [shape: f32[16,128], index: 3, kind: input, shape index: {}]
  %s4 = inlined_call_operand.vmem [shape: bf16[2,16,128], index: 4, kind: output, shape index: {}]
  %s5 = sld [smem:[#allocation0]]
  $region57: #{transformer_forward.10} parent=0
    _
  %s7 = ssub.s32 1, %s5
  %s8 = scalar_select 0, %s7, %s5
  loop: start=0, step=1, limit=4
  $region2: #{transformer_forward.10} parent=0 // loop_pre_header
    _
  $region3: #{transformer_forward.10} parent=0 // loop_header
    %s10 = sphi 0, %s14
    %p11 = scmp.ge.s32.totalorder %s10, 4
    %s17 = sphi 0, %s36
    %s18 = sphi 0, %s32
    %s19 = sphi 0, %s28
    %s20 = sphi 0, %s17
    %s21 = sphi 0, %s18
    %s22 = sphi 0, %s19
    %s23 = sphi 0, %s20
    %s24 = sphi 0, %s21
    %s25 = sphi 0, %s22
    %s43 = sphi 0, %s45
    %s46 = sphi 0, %s43
    %s47 = sphi 0, %s46
    %s63 = sphi 0, %s47
    %s69 = sphi 0, %s71
    %s72 = sphi 0, %s69
    %s73 = sphi 0, %s72
    %s89 = sphi 0, %s73
    %s93 = sphi 0, %s93
    %s95 = sphi 0, %s93
    %s96 = sphi 0, %s95
    %s110 = sphi 0, %s96
    %s116 = sphi 0, %s118
    %s119 = sphi 0, %s116
    %s120 = sphi 0, %s119
    %s136 = sphi 0, %s120
    %s144 = sphi 0, %s146
    %s147 = sphi 0, %s144
    %s148 = sphi 0, %s147
    %s164 = sphi 0, %s148
  $region4: #{transformer_forward.10} parent=0 // loop_header_branch
    %13 = sbr.rel (%p11) target = $region8
  $region5: #{transformer_forward.10} parent=0 // loop_body
    %s15 = ssub.s32 %s10, 1
    %s16 = ssub.s32 %s10, 2
    %s26 = sadd.s32 1, %s19
    %p27 = scmp.ge.s32.totalorder %s26, 1
    %s28 = scalar_select %p27, 0, %s26
    %s29 = sadd.s32 1, %s18
    %s30 = scalar_select %p27, %s29, %s18
    %p31 = scmp.ge.s32.totalorder %s30, 1
    %s32 = scalar_select %p31, 0, %s30
    %s33 = sadd.s32 1, %s17
    %s34 = scalar_select %p31, %s33, %s17
    %p35 = scmp.ge.s32.totalorder %s34, 2
    %s36 = scalar_select %p35, 0, %s34
    %s37 = ssub.s32 %s17, %s36
    %s38 = ssub.s32 %s18, %s32
    %s39 = sor.u32 %s37, %s38
    %s40 = ssub.s32 %s19, %s28
    %s41 = sor.u32 %s39, %s40
    %p42 = scmp.eq.s32.totalorder %s41, 0
    %s44 = sadd.s32 %s43, 1
    %s45 = scalar_select %p42, %s43, %s44
    %p48 = pneg %p42
    %p49 = scmp.eq.s32.totalorder %s10, 1
    %p50 = por %p48, %p49
    %p51 = scmp.ne.s32.totalorder %s43, %s46
    %p52 = scmp.eq.s32.totalorder %s10, 0
    %p53 = por %p51, %p52
    %p54 = scmp.ne.s32.totalorder %s43, %s46
    %p55 = scmp.eq.s32.totalorder %s15, 1
    %p56 = por %p54, %p55
    %p57 = scmp.ne.s32.totalorder %s46, %s47
    %p58 = scmp.eq.s32.totalorder %s15, 0
    %p59 = por %p57, %p58
    %p60 = scmp.ne.s32.totalorder %s46, %s47
    %p61 = scmp.eq.s32.totalorder %s16, 1
    %p62 = por %p60, %p61
    %p64 = scmp.ne.s32.totalorder %s47, %s63
    %p65 = scmp.eq.s32.totalorder %s16, 0
    %p66 = por %p64, %p65
    %s67 = ssub.s32 %s19, %s28
    %p68 = scmp.eq.s32.totalorder %s67, 0
    %s70 = sadd.s32 %s69, 1
    %s71 = scalar_select %p68, %s69, %s70
    %p74 = pneg %p68
    %p75 = scmp.eq.s32.totalorder %s10, 1
    %p76 = por %p74, %p75
    %p77 = scmp.ne.s32.totalorder %s69, %s72
    %p78 = scmp.eq.s32.totalorder %s10, 0
    %p79 = por %p77, %p78
    %p80 = scmp.ne.s32.totalorder %s69, %s72
    %p81 = scmp.eq.s32.totalorder %s15, 1
    %p82 = por %p80, %p81
    %p83 = scmp.ne.s32.totalorder %s72, %s73
    %p84 = scmp.eq.s32.totalorder %s15, 0
    %p85 = por %p83, %p84
    %p86 = scmp.ne.s32.totalorder %s72, %s73
    %p87 = scmp.eq.s32.totalorder %s16, 1
    %p88 = por %p86, %p87
    %p90 = scmp.ne.s32.totalorder %s73, %s89
    %p91 = scmp.eq.s32.totalorder %s16, 0
    %p92 = por %p90, %p91
    %s94 = sadd.s32 %s93, 1
    %p97 = scmp.eq.s32.totalorder %s10, 1
    %p98 = scmp.ne.s32.totalorder %s93, %s95
    %p99 = scmp.eq.s32.totalorder %s10, 0
    %p100 = por %p98, %p99
    %p101 = scmp.ne.s32.totalorder %s93, %s95
    %p102 = scmp.eq.s32.totalorder %s15, 1
    %p103 = por %p101, %p102
    %p104 = scmp.ne.s32.totalorder %s95, %s96
    %p105 = scmp.eq.s32.totalorder %s15, 0
    %p106 = por %p104, %p105
    %p107 = scmp.ne.s32.totalorder %s95, %s96
    %p108 = scmp.eq.s32.totalorder %s16, 1
    %p109 = por %p107, %p108
    %p111 = scmp.ne.s32.totalorder %s96, %s110
    %p112 = scmp.eq.s32.totalorder %s16, 0
    %p113 = por %p111, %p112
    %s114 = ssub.s32 %s18, %s32
    %p115 = scmp.eq.s32.totalorder %s114, 0
    %s117 = sadd.s32 %s116, 1
    %s118 = scalar_select %p115, %s116, %s117
    %p121 = pneg %p115
    %p122 = scmp.eq.s32.totalorder %s10, 1
    %p123 = por %p121, %p122
    %p124 = scmp.ne.s32.totalorder %s116, %s119
    %p125 = scmp.eq.s32.totalorder %s10, 0
    %p126 = por %p124, %p125
    %p127 = scmp.ne.s32.totalorder %s116, %s119
    %p128 = scmp.eq.s32.totalorder %s15, 1
    %p129 = por %p127, %p128
    %p130 = scmp.ne.s32.totalorder %s119, %s120
    %p131 = scmp.eq.s32.totalorder %s15, 0
    %p132 = por %p130, %p131
    %p133 = scmp.ne.s32.totalorder %s119, %s120
    %p134 = scmp.eq.s32.totalorder %s16, 1
    %p135 = por %p133, %p134
    %p137 = scmp.ne.s32.totalorder %s120, %s136
    %p138 = scmp.eq.s32.totalorder %s16, 0
    %p139 = por %p137, %p138
    %s140 = ssub.s32 %s17, %s36
    %s141 = ssub.s32 %s18, %s32
    %s142 = sor.u32 %s140, %s141
    %p143 = scmp.eq.s32.totalorder %s142, 0
    %s145 = sadd.s32 %s144, 1
    %s146 = scalar_select %p143, %s144, %s145
    %p149 = pneg %p143
    %p150 = scmp.eq.s32.totalorder %s10, 1
    %p151 = por %p149, %p150
    %p152 = scmp.ne.s32.totalorder %s144, %s147
    %p153 = scmp.eq.s32.totalorder %s10, 0
    %p154 = por %p152, %p153
    %p155 = scmp.ne.s32.totalorder %s144, %s147
    %p156 = scmp.eq.s32.totalorder %s15, 1
    %p157 = por %p155, %p156
    %p158 = scmp.ne.s32.totalorder %s147, %s148
    %p159 = scmp.eq.s32.totalorder %s15, 0
    %p160 = por %p158, %p159
    %p161 = scmp.ne.s32.totalorder %s147, %s148
    %p162 = scmp.eq.s32.totalorder %s16, 1
    %p163 = por %p161, %p162
    %p165 = scmp.ne.s32.totalorder %s148, %s164
    %p166 = scmp.eq.s32.totalorder %s16, 0
    %p167 = por %p165, %p166
    %p168 = scmp.le.s32.totalorder 1, %s10
    %p169 = scmp.lt.s32.totalorder %s10, 3
    %p170 = pnand %p168, %p169
    %p171 = pneg %p170
    // Predicated region
    $region9: #{transformer_forward.10} parent=5 // pred_check
      _
    $region10: #{transformer_forward.10} parent=5 // pred_check_branch
      %173 = sbr.rel (%p170) target = $region12
    $region11: #{transformer_forward.10} parent=5 // pred_region
      %s174 = ssub.s32 %s10, 1
      // Predicated region
      $region13: #{transformer_forward.10} parent=11 // pred_check
        %p175 = pneg %p85
      $region14: #{transformer_forward.10} parent=11 // pred_check_branch
        %177 = sbr.rel (%p175) target = $region16
      $region15: #{transformer_forward.10} parent=11 // pred_region
        %s178 = smul.u32 4, %s22
        %p179 = scmp.lt.s32.totalorder %s178, 3
        %s180 = scalar_select %p179, %s178, 3
        %s181 = smul.addr %s180, 4
        %s182 = scalar_lea.vmem %s1, %s181
        %s183 = smul.u32 4, %s22
      $region16: #{transformer_forward.10} parent=11 // pred_fallthru
        _
      // Predicated region
      $region17: #{transformer_forward.10} parent=11 // pred_check
        %p184 = pneg %p106
      $region18: #{transformer_forward.10} parent=11 // pred_check_branch
        %186 = sbr.rel (%p184) target = $region20
      $region19: #{transformer_forward.10} parent=11 // pred_region
        _
      $region20: #{transformer_forward.10} parent=11 // pred_fallthru
        _
      // Predicated region
      $region21: #{transformer_forward.10} parent=11 // pred_check
        %p187 = pneg %p132
      $region22: #{transformer_forward.10} parent=11 // pred_check_branch
        %189 = sbr.rel (%p187) target = $region24
      $region23: #{transformer_forward.10} parent=11 // pred_region
        %s190 = smul.u32 2, %s21
        %p191 = scmp.lt.s32.totalorder %s190, 1
        %s192 = scalar_select %p191, %s190, 1
        %s193 = smul.addr %s192, 8
        %s194 = scalar_lea.vmem %s3, %s193
        %s195 = smul.u32 2, %s21
      $region24: #{transformer_forward.10} parent=11 // pred_fallthru
        _
    $region12: #{transformer_forward.10} parent=5 // pred_fallthru
      _
    %p196 = scmp.lt.s32.totalorder %s10, 2
    // Predicated region
    $region25: #{transformer_forward.10} parent=5 // pred_check
      %p197 = pneg %p196
    $region26: #{transformer_forward.10} parent=5 // pred_check_branch
      %199 = sbr.rel (%p197) target = $region28
    $region27: #{transformer_forward.10} parent=5 // pred_region
      // Predicated region
      $region29: #{transformer_forward.10} parent=27 // pred_check
        %p200 = pneg %p53
      $region30: #{transformer_forward.10} parent=27 // pred_check_branch
        %202 = sbr.rel (%p200) target = $region32
      $region31: #{transformer_forward.10} parent=27 // pred_region
        %s203 = smul.u32 2, %s18
        %p204 = scmp.lt.s32.totalorder %s17, 1
        %s205 = scalar_select %p204, %s17, 1
        %p206 = scmp.lt.s32.totalorder %s203, 1
        %s207 = scalar_select %p206, %s203, 1
        %p208 = scmp.lt.s32.totalorder %s19, 0
        %s209 = scalar_select %p208, %s19, 0
        %s210 = sadd.s32 %s209, %s207
        %s211 = smul.addr %s205, 2
        %s212 = sadd.s32 %s210, %s211
        %s213 = smul.addr %s212, 8
        %s214 = scalar_lea.vmem %s0, %s213
        %s215 = smul.u32 2, %s18
      $region32: #{transformer_forward.10} parent=27 // pred_fallthru
        _
    $region28: #{transformer_forward.10} parent=5 // pred_fallthru
      _
    %p216 = scmp.le.s32.totalorder 1, %s10
    %p217 = scmp.lt.s32.totalorder %s10, 3
    %p218 = pnand %p216, %p217
    %p219 = pneg %p218
    // Predicated region
    $region33: #{transformer_forward.10} parent=5 // pred_check
      _
    $region34: #{transformer_forward.10} parent=5 // pred_check_branch
      %221 = sbr.rel (%p218) target = $region36
    $region35: #{transformer_forward.10} parent=5 // pred_region
      %s222 = ssub.s32 %s10, 1
      %s223 = smul.u32 2, %s21
      %p224 = scmp.lt.s32.totalorder %s20, 1
      %s225 = scalar_select %p224, %s20, 1
      %p226 = scmp.lt.s32.totalorder %s223, 1
      %s227 = scalar_select %p226, %s223, 1
      %p228 = scmp.lt.s32.totalorder %s22, 0
      %s229 = scalar_select %p228, %s22, 0
      %s230 = sadd.s32 %s229, %s227
      %s231 = smul.addr %s225, 2
      %s232 = sadd.s32 %s230, %s231
      %s233 = smul.addr %s232, 8
      %s234 = scalar_lea.vmem %s0, %s233
      %p235 = pneg %p59
      %p236 = pneg %p56
      %s237 = smul.u32 4, %s22
      %p238 = scmp.lt.s32.totalorder %s237, 3
      %s239 = scalar_select %p238, %s237, 3
      %s240 = smul.addr %s239, 4
      %s241 = scalar_lea.vmem %s1, %s240
      %p242 = pneg %p85
      %p243 = pneg %p82
      %p244 = pneg %p106
      %p245 = pneg %p103
      %s246 = smul.u32 2, %s21
      %p247 = scmp.lt.s32.totalorder %s246, 1
      %s248 = scalar_select %p247, %s246, 1
      %s249 = smul.addr %s248, 8
      %s250 = scalar_lea.vmem %s3, %s249
      %p251 = pneg %p132
      %p252 = pneg %p129
      %p253 = pneg %p160
      %p254 = pneg %p157
      %s255 = smul.u32 2, %s21
      %p256 = scmp.lt.s32.totalorder %s20, 1
      %s257 = scalar_select %p256, %s20, 1
      %p258 = scmp.lt.s32.totalorder %s255, 1
      %s259 = scalar_select %p258, %s255, 1
      %s260 = smul.addr %s257, 2
      %s261 = sadd.s32 %s259, %s260
      %s262 = smul.addr %s261, 4
      %s263 = scalar_lea.vmem %s4, %s262
      %s264 = smul.u32 2, %s21
      %p265 = scmp.lt.s32.totalorder %s20, 1
      %s266 = scalar_select %p265, %s20, 1
      %p267 = scmp.lt.s32.totalorder %s264, 1
      %s268 = scalar_select %p267, %s264, 1
      %p269 = scmp.lt.s32.totalorder %s22, 0
      %s270 = scalar_select %p269, %s22, 0
      %s271 = sadd.s32 %s270, %s268
      %s272 = smul.addr %s266, 2
      %s273 = sadd.s32 %s271, %s272
      %s274 = smul.addr %s273, 8
      %s275 = scalar_lea.vmem %s0, %s274
      %s276 = smul.u32 2, %s21
      %s277 = smul.u32 4, %s22
      %p278 = scmp.lt.s32.totalorder %s277, 3
      %s279 = scalar_select %p278, %s277, 3
      %s280 = smul.addr %s279, 4
      %s281 = scalar_lea.vmem %s1, %s280
      %s282 = smul.u32 4, %s22
      %s283 = smul.u32 2, %s21
      %p284 = scmp.lt.s32.totalorder %s283, 1
      %s285 = scalar_select %p284, %s283, 1
      %s286 = smul.addr %s285, 8
      %s287 = scalar_lea.vmem %s3, %s286
      %s288 = smul.u32 2, %s21
      %s289 = smul.u32 2, %s21
      %p290 = scmp.lt.s32.totalorder %s20, 1
      %s291 = scalar_select %p290, %s20, 1
      %p292 = scmp.lt.s32.totalorder %s289, 1
      %s293 = scalar_select %p292, %s289, 1
      %s294 = smul.addr %s291, 2
      %s295 = sadd.s32 %s293, %s294
      %s296 = smul.addr %s295, 4
      %s297 = scalar_lea.vmem %s4, %s296
      %s298 = smul.u32 2, %s21
      %p300 = scmp.eq.s32.totalorder %s22, 0
      // Predicated region
      $region37: #{transformer_forward.10} parent=35 // pred_check
        %p301 = pneg %p300
      $region38: #{transformer_forward.10} parent=35 // pred_check_branch
        %303 = sbr.rel (%p301) target = $region40
      $region39: #{transformer_forward.10} parent=35 // pred_region
        %304 = vst [vmem:[#allocation2] sm:$0xff] 0.0
        %305 = vst [vmem:[#allocation2 + $0x8] sm:$0xff] 0.0
      $region40: #{transformer_forward.10} parent=35 // pred_fallthru
        _
      %v306 = vld [vmem:[#allocation2] sm:$0xff]
      %v307 = vld [vmem:[#allocation2 + $0x8] sm:$0xff]
      %v308 = vld [vmem:[%s275] sm:$0xff]
      %v309 = vld [vmem:[%s275 + $0x8] sm:$0xff]
      %v310 = vpack.c.bf16 %v309, %v308
      %v311 = vld [vmem:[%s281] sm:$0xf]
      %v312 = vld [vmem:[%s281 + $0x4] sm:$0xf]
      %v313 = vld [vmem:[%s281 + $0x8] sm:$0xf]
      %v314 = vld [vmem:[%s281 + $0xc] sm:$0xf]
      %v319 = vunpack.c.l.b16 %v311
      %v320 = vunpack.c.l.b16 %v312
      %v321 = vunpack.c.l.b16 %v313
      %v322 = vunpack.c.l.b16 %v314
      %v323 = vpack.c.b16 %v320, %v319
      %v324 = vpack.c.b16 %v322, %v321
      %vm327 = vcmask 261120
      %v329 = vsel %vm327, %v310, 0
      %331 = vmatprep.subr.bf16.mxu0 0
      %332 = vmatpush1.bf16.msra.mxu0 %v323
      %333 = vmatprep.subr.bf16.mxu0 0
      %334 = vmatpush1.bf16.msra.mxu0 %v324
      %335 = vmatprep.subr.bf16.mxu0 0
      %336 = vmatpush1.bf16.msra.mxu0 0
      %337 = vmatprep.subr.bf16.mxu0 0
      %338 = vmatpush1.bf16.msra.mxu0 0
      %339 = vmatprep.subr.bf16.mxu0 0
      %340 = vmatpush1.bf16.msra.mxu0 0
      %341 = vmatprep.subr.bf16.mxu0 0
      %342 = vmatpush1.bf16.msra.mxu0 0
      %343 = vmatprep.subr.bf16.mxu0 0
      %344 = vmatpush1.bf16.msra.mxu0 0
      %345 = vmatprep.subr.bf16.mxu0 0
      %346 = vmatpush1.bf16.msra.mxu0 0
      %347 = vmatprep.subr.bf16.mxu0 0
      %348 = vmatpush1.bf16.msra.mxu0 0
      %349 = vmatprep.subr.bf16.mxu0 0
      %350 = vmatpush1.bf16.msra.mxu0 0
      %351 = vmatprep.subr.bf16.mxu0 0
      %352 = vmatpush1.bf16.msra.mxu0 0
      %353 = vmatprep.subr.bf16.mxu0 0
      %354 = vmatpush1.bf16.msra.mxu0 0
      %355 = vmatprep.subr.bf16.mxu0 0
      %356 = vmatpush1.bf16.msra.mxu0 0
      %357 = vmatprep.subr.bf16.mxu0 0
      %358 = vmatpush1.bf16.msra.mxu0 0
      %359 = vmatprep.subr.bf16.mxu0 0
      %360 = vmatpush1.bf16.msra.mxu0 0
      %361 = vmatprep.subr.bf16.mxu0 0
      %362 = vmatpush1.bf16.msra.mxu0 0
      %363 = vmatprep.mubr.bf16.mxu0 0
      %364 = vmatmul.mubr.bf16.gmra.mrb[0].mxu0 %v329
      %v365 = vpop.f32.mrb[0].mxu0
      %v366 = vadd.f32 0.0, %v365
      %v367 = vpop.f32.mrb[0].mxu0
      %v368 = vpop.f32.mrb[0].mxu0
      %v369 = vadd.f32 0.0, %v368
      %v370 = vpop.f32.mrb[0].mxu0
      %371 = vdwg.mxu0
      %v372 = vadd.f32 %v306, %v366
      %v373 = vadd.f32 %v307, %v369
      %374 = vst [vmem:[#allocation2] sm:$0xff] %v372
      %375 = vst [vmem:[#allocation2 + $0x8] sm:$0xff] %v373
      // Predicated region
      $region41: #{transformer_forward.10} parent=35 // pred_check
        %p376 = pneg %p300
      $region42: #{transformer_forward.10} parent=35 // pred_check_branch
        %378 = sbr.rel (%p376) target = $region44
      $region43: #{transformer_forward.10} parent=35 // pred_region
        %v379 = vld [vmem:[#allocation2] sm:$0xff]
        %v380 = vld [vmem:[#allocation2 + $0x8] sm:$0xff]
        %v381 = vld [vmem:[%s2] sm:$0x1]
        %v383 = vlaneseq
        %v384 = vshrl.u32 %v383, 7
        %v385 = vsub.s32 0, %v384
        %v386 = vrot.slane %v381, %v385
        %v388 = vadd.f32 %v379, %v386
        %v389 = vadd.f32 %v380, %v386
        %v390 = vld [vmem:[%s287] sm:$0xff]
        %v391 = vld [vmem:[%s287 + $0x8] sm:$0xff]
        %v392 = vadd.f32 %v388, %v390
        %v393 = vadd.f32 %v389, %v391
        %v394 = vpack.c.bf16 %v393, %v392
        %v396 = vunpack.c.l.b16 %v394
        %v397 = vunpack.c.h.b16 %v394
        %v398 = vpack.c.b16 %v396, %v396
        %v399 = vpack.c.b16 %v397, %v397
        %402 = vst [vmem:[%s297] sm:$0xf] %v398
        %403 = vst [vmem:[%s297 + $0x4] sm:$0xf] %v399
      $region44: #{transformer_forward.10} parent=35 // pred_fallthru
        _
      %s404 = smul.u32 2, %s21
      %p405 = scmp.lt.s32.totalorder %s20, 1
      %s406 = scalar_select %p405, %s20, 1
      %p407 = scmp.lt.s32.totalorder %s404, 1
      %s408 = scalar_select %p407, %s404, 1
      %s409 = smul.addr %s406, 2
      %s410 = sadd.s32 %s408, %s409
      %s411 = smul.addr %s410, 4
      %s412 = scalar_lea.vmem %s4, %s411
      // Predicated region
      $region45: #{transformer_forward.10} parent=35 // pred_check
        %p413 = pneg %p157
      $region46: #{transformer_forward.10} parent=35 // pred_check_branch
        %415 = sbr.rel (%p413) target = $region48
      $region47: #{transformer_forward.10} parent=35 // pred_region
        %s416 = smul.u32 2, %s21
      $region48: #{transformer_forward.10} parent=35 // pred_fallthru
        _
    $region36: #{transformer_forward.10} parent=5 // pred_fallthru
      _
    %p417 = scmp.le.s32.totalorder 2, %s10
    // Predicated region
    $region49: #{transformer_forward.10} parent=5 // pred_check
      %p418 = pneg %p417
    $region50: #{transformer_forward.10} parent=5 // pred_check_branch
      %420 = sbr.rel (%p418) target = $region52
    $region51: #{transformer_forward.10} parent=5 // pred_region
      %s421 = ssub.s32 %s10, 2
      // Predicated region
      $region53: #{transformer_forward.10} parent=51 // pred_check
        %p422 = pneg %p163
      $region54: #{transformer_forward.10} parent=51 // pred_check_branch
        %424 = sbr.rel (%p422) target = $region56
      $region55: #{transformer_forward.10} parent=51 // pred_region
        %s425 = smul.u32 2, %s24
        %p426 = scmp.lt.s32.totalorder %s23, 1
        %s427 = scalar_select %p426, %s23, 1
        %p428 = scmp.lt.s32.totalorder %s425, 1
        %s429 = scalar_select %p428, %s425, 1
        %s430 = smul.addr %s427, 2
        %s431 = sadd.s32 %s429, %s430
        %s432 = smul.addr %s431, 4
        %s433 = scalar_lea.vmem %s4, %s432
      $region56: #{transformer_forward.10} parent=51 // pred_fallthru
        _
    $region52: #{transformer_forward.10} parent=5 // pred_fallthru
      _
  $region6: #{transformer_forward.10} parent=0 // loop_footer
    %s14 = sadd.s32 1, %s10
  $region7: #{transformer_forward.10} parent=0 // loop_footer_branch
    %9 = sbr.rel target = $region3
  $region8: #{transformer_forward.10} parent=0 // loop_exit
    _

// kernel: transformer_forward.11
$region0: #{transformer_forward.11}
  #allocation0 [shape = 'u32[]', space=smem, size = 0x4, offset = 0x4, fixed_abs, tag = 'smem constant byte address 0x4 - core index']
  #allocation1 [shape = 'u32[144,128]{1,0:T(1,128)}', space=vmem, size = 0x12000, scoped, tag = 'internal scratch']
  #allocation2 [shape = 'f32[32,128]{1,0:T(8,128)}', space=vmem, size = 0x4000, scoped, tag = 'scratch operand']
  %s0 = inlined_call_operand.vmem [shape: bf16[32,128], index: 0, kind: input, shape index: {}]
  %s1 = inlined_call_operand.vmem [shape: bf16[128,384], index: 1, kind: input, shape index: {}]
  %s2 = inlined_call_operand.vmem [shape: f32[1,384], index: 2, kind: input, shape index: {}]
  %s3 = inlined_call_operand.vmem [shape: bf16[32,384], index: 3, kind: output, shape index: {}]
  %s4 = sld [smem:[#allocation0]]
  $region131: #{transformer_forward.11} parent=0
    _
  %s6 = ssub.s32 1, %s4
  %s7 = scalar_select 0, %s6, %s4
  $region1: #{transformer_forward.11} parent=0
    #allocation3 [shape = 'u8[65536]{0}', space=vmem, size = 0x10000, scoped, tag = 'input window, operand 1']
    #allocation4 [shape = 'u8[16384]{0}', space=vmem, size = 0x4000, scoped, tag = 'output window, operand 0']
    loop: start=0, step=1, limit=5
    $region2: #{transformer_forward.11} parent=1 // loop_pre_header
      _
    $region3: #{transformer_forward.11} parent=1 // loop_header
      %s9 = sphi 0, %s13
      %p10 = scmp.ge.s32.totalorder %s9, 5
      %s16 = sphi 0, %s35
      %s17 = sphi 0, %s31
      %s18 = sphi 0, %s27
      %s19 = sphi 0, %s16
      %s20 = sphi 0, %s17
      %s21 = sphi 0, %s18
      %s22 = sphi 0, %s19
      %s23 = sphi 0, %s20
      %s24 = sphi 0, %s21
      %s40 = sphi 0, %s42
      %s43 = sphi 0, %s40
      %s44 = sphi 0, %s43
      %s60 = sphi 0, %s44
      %s68 = sphi 0, %s70
      %s71 = sphi 0, %s68
      %s72 = sphi 0, %s71
      %s88 = sphi 0, %s72
      %s94 = sphi 0, %s96
      %s97 = sphi 0, %s94
      %s98 = sphi 0, %s97
      %s114 = sphi 0, %s98
      %s122 = sphi 0, %s124
      %s125 = sphi 0, %s122
      %s126 = sphi 0, %s125
      %s142 = sphi 0, %s126
    $region4: #{transformer_forward.11} parent=1 // loop_header_branch
      %12 = sbr.rel (%p10) target = $region8
    $region5: #{transformer_forward.11} parent=1 // loop_body
      %s14 = ssub.s32 %s9, 1
      %s15 = ssub.s32 %s9, 2
      %s25 = sadd.s32 1, %s18
      %p26 = scmp.ge.s32.totalorder %s25, 1
      %s27 = scalar_select %p26, 0, %s25
      %s28 = sadd.s32 1, %s17
      %s29 = scalar_select %p26, %s28, %s17
      %p30 = scmp.ge.s32.totalorder %s29, 3
      %s31 = scalar_select %p30, 0, %s29
      %s32 = sadd.s32 1, %s16
      %s33 = scalar_select %p30, %s32, %s16
      %p34 = scmp.ge.s32.totalorder %s33, 1
      %s35 = scalar_select %p34, 0, %s33
      %s36 = ssub.s32 %s16, %s35
      %s37 = ssub.s32 %s18, %s27
      %s38 = sor.u32 %s36, %s37
      %p39 = scmp.eq.s32.totalorder %s38, 0
      %s41 = sadd.s32 %s40, 1
      %s42 = scalar_select %p39, %s40, %s41
      %p45 = pneg %p39
      %p46 = scmp.eq.s32.totalorder %s9, 2
      %p47 = por %p45, %p46
      %p48 = scmp.ne.s32.totalorder %s40, %s43
      %p49 = scmp.eq.s32.totalorder %s9, 0
      %p50 = por %p48, %p49
      %p51 = scmp.ne.s32.totalorder %s40, %s43
      %p52 = scmp.eq.s32.totalorder %s14, 2
      %p53 = por %p51, %p52
      %p54 = scmp.ne.s32.totalorder %s43, %s44
      %p55 = scmp.eq.s32.totalorder %s14, 0
      %p56 = por %p54, %p55
      %p57 = scmp.ne.s32.totalorder %s43, %s44
      %p58 = scmp.eq.s32.totalorder %s15, 2
      %p59 = por %p57, %p58
      %p61 = scmp.ne.s32.totalorder %s44, %s60
      %p62 = scmp.eq.s32.totalorder %s15, 0
      %p63 = por %p61, %p62
      %s64 = ssub.s32 %s18, %s27
      %s65 = ssub.s32 %s17, %s31
      %s66 = sor.u32 %s64, %s65
      %p67 = scmp.eq.s32.totalorder %s66, 0
      %s69 = sadd.s32 %s68, 1
      %s70 = scalar_select %p67, %s68, %s69
      %p73 = pneg %p67
      %p74 = scmp.eq.s32.totalorder %s9, 2
      %p75 = por %p73, %p74
      %p76 = scmp.ne.s32.totalorder %s68, %s71
      %p77 = scmp.eq.s32.totalorder %s9, 0
      %p78 = por %p76, %p77
      %p79 = scmp.ne.s32.totalorder %s68, %s71
      %p80 = scmp.eq.s32.totalorder %s14, 2
      %p81 = por %p79, %p80
      %p82 = scmp.ne.s32.totalorder %s71, %s72
      %p83 = scmp.eq.s32.totalorder %s14, 0
      %p84 = por %p82, %p83
      %p85 = scmp.ne.s32.totalorder %s71, %s72
      %p86 = scmp.eq.s32.totalorder %s15, 2
      %p87 = por %p85, %p86
      %p89 = scmp.ne.s32.totalorder %s72, %s88
      %p90 = scmp.eq.s32.totalorder %s15, 0
      %p91 = por %p89, %p90
      %s92 = ssub.s32 %s17, %s31
      %p93 = scmp.eq.s32.totalorder %s92, 0
      %s95 = sadd.s32 %s94, 1
      %s96 = scalar_select %p93, %s94, %s95
      %p99 = pneg %p93
      %p100 = scmp.eq.s32.totalorder %s9, 2
      %p101 = por %p99, %p100
      %p102 = scmp.ne.s32.totalorder %s94, %s97
      %p103 = scmp.eq.s32.totalorder %s9, 0
      %p104 = por %p102, %p103
      %p105 = scmp.ne.s32.totalorder %s94, %s97
      %p106 = scmp.eq.s32.totalorder %s14, 2
      %p107 = por %p105, %p106
      %p108 = scmp.ne.s32.totalorder %s97, %s98
      %p109 = scmp.eq.s32.totalorder %s14, 0
      %p110 = por %p108, %p109
      %p111 = scmp.ne.s32.totalorder %s97, %s98
      %p112 = scmp.eq.s32.totalorder %s15, 2
      %p113 = por %p111, %p112
      %p115 = scmp.ne.s32.totalorder %s98, %s114
      %p116 = scmp.eq.s32.totalorder %s15, 0
      %p117 = por %p115, %p116
      %s118 = ssub.s32 %s16, %s35
      %s119 = ssub.s32 %s17, %s31
      %s120 = sor.u32 %s118, %s119
      %p121 = scmp.eq.s32.totalorder %s120, 0
      %s123 = sadd.s32 %s122, 1
      %s124 = scalar_select %p121, %s122, %s123
      %p127 = pneg %p121
      %p128 = scmp.eq.s32.totalorder %s9, 2
      %p129 = por %p127, %p128
      %p130 = scmp.ne.s32.totalorder %s122, %s125
      %p131 = scmp.eq.s32.totalorder %s9, 0
      %p132 = por %p130, %p131
      %p133 = scmp.ne.s32.totalorder %s122, %s125
      %p134 = scmp.eq.s32.totalorder %s14, 2
      %p135 = por %p133, %p134
      %p136 = scmp.ne.s32.totalorder %s125, %s126
      %p137 = scmp.eq.s32.totalorder %s14, 0
      %p138 = por %p136, %p137
      %p139 = scmp.ne.s32.totalorder %s125, %s126
      %p140 = scmp.eq.s32.totalorder %s15, 2
      %p141 = por %p139, %p140
      %p143 = scmp.ne.s32.totalorder %s126, %s142
      %p144 = scmp.eq.s32.totalorder %s15, 0
      %p145 = por %p143, %p144
      %p146 = scmp.le.s32.totalorder 1, %s9
      %p147 = scmp.lt.s32.totalorder %s9, 4
      %p148 = pnand %p146, %p147
      %p149 = pneg %p148
      // Predicated region
      $region9: #{transformer_forward.11} parent=5 // pred_check
        _
      $region10: #{transformer_forward.11} parent=5 // pred_check_branch
        %151 = sbr.rel (%p148) target = $region12
      $region11: #{transformer_forward.11} parent=5 // pred_region
        %s152 = ssub.s32 %s9, 1
        // Predicated region
        $region13: #{transformer_forward.11} parent=11 // pred_check
          %p153 = pneg %p56
        $region14: #{transformer_forward.11} parent=11 // pred_check_branch
          %155 = sbr.rel (%p153) target = $region16
        $region15: #{transformer_forward.11} parent=11 // pred_region
          %s156 = smul.u32 4, %s19
          %p157 = scmp.lt.s32.totalorder %s156, 3
          %s158 = scalar_select %p157, %s156, 3
          %p159 = scmp.lt.s32.totalorder %s21, 0
          %s160 = scalar_select %p159, %s21, 0
          %s161 = sadd.s32 %s160, %s158
          %s162 = smul.addr %s161, 4
          %s163 = scalar_lea.vmem %s0, %s162
          %s164 = smul.u32 4, %s19
        $region16: #{transformer_forward.11} parent=11 // pred_fallthru
          _
      $region12: #{transformer_forward.11} parent=5 // pred_fallthru
        _
      %p165 = scmp.lt.s32.totalorder %s9, 3
      // Predicated region
      $region17: #{transformer_forward.11} parent=5 // pred_check
        %p166 = pneg %p165
      $region18: #{transformer_forward.11} parent=5 // pred_check_branch
        %168 = sbr.rel (%p166) target = $region20
      $region19: #{transformer_forward.11} parent=5 // pred_region
        // Predicated region
        $region21: #{transformer_forward.11} parent=19 // pred_check
          %p169 = pneg %p78
        $region22: #{transformer_forward.11} parent=19 // pred_check_branch
          %171 = sbr.rel (%p169) target = $region24
        $region23: #{transformer_forward.11} parent=19 // pred_region
          %s172 = sand.u32 %s68, 1
          %s173 = sand.u32 %s68, 1
          %s174 = smul.addr %s173, 64
          %s175 = scalar_lea.vmem [#allocation3], %s174
          %s176 = smul.u32 16, %s18
          %s177 = smul.addr %s176, 3
          %s178 = sadd.s32 %s17, %s177
          %s179 = smul.addr %s178, 4
          %s180 = scalar_lea.vmem %s1, %s179
          // Predicated region
          $region25: #{transformer_forward.11} parent=23 // pred_check
            _
          $region26: #{transformer_forward.11} parent=23 // pred_check_branch
            %182 = sbr.rel (0) target = $region28
          $region27: #{transformer_forward.11} parent=23 // pred_region
            // Predicated region
            $region29: #{transformer_forward.11} parent=27 // pred_check
              _
            $region30: #{transformer_forward.11} parent=27 // pred_check_branch
              %184 = sbr.rel target = $region32
            $region31: #{transformer_forward.11} parent=27 // pred_region
              // Predicated region
              $region44: #{transformer_forward.11} parent=31 // pred_check
                _
              $region45: #{transformer_forward.11} parent=31 // pred_check_branch
                %229 = sbr.rel (0) target = $region47
              $region46: #{transformer_forward.11} parent=31 // pred_region
                loop: start=0, step=1, limit=1
                $region48: #{transformer_forward.11} parent=46 // loop_pre_header
                  _
                $region49: #{transformer_forward.11} parent=46 // loop_header
                  %s231 = sphi 0, %s235
                  %p232 = scmp.ge.s32.totalorder %s231, 1
                  %s236 = sphi %s180, %s180
                  %s237 = sphi %s175, %s175
                $region50: #{transformer_forward.11} parent=46 // loop_header_branch
                  %234 = sbr.rel (%p232) target = $region54
                $region51: #{transformer_forward.11} parent=46 // loop_body
                  _
                $region52: #{transformer_forward.11} parent=46 // loop_footer
                  %s235 = sadd.s32 1, %s231
                $region53: #{transformer_forward.11} parent=46 // loop_footer_branch
                  %230 = sbr.rel target = $region49
                $region54: #{transformer_forward.11} parent=46 // loop_exit
                  _
                loop: start=0, step=1, limit=1
                $region55: #{transformer_forward.11} parent=46 // loop_pre_header
                  _
                $region56: #{transformer_forward.11} parent=46 // loop_header
                  %s240 = sphi 0, %s244
                  %p241 = scmp.ge.s32.totalorder %s240, 1
                  %s245 = sphi %s180, %s180
                  %s246 = sphi %s175, %s175
                $region57: #{transformer_forward.11} parent=46 // loop_header_branch
                  %243 = sbr.rel (%p241) target = $region61
                $region58: #{transformer_forward.11} parent=46 // loop_body
                  %v247 = vld [vmem:[%s245] sm:$0xf]
                  %248 = vst [vmem:[%s246] sm:$0xf] %v247
                  %v249 = vld [vmem:[%s245 + $0xc] sm:$0xf]
                  %250 = vst [vmem:[%s246 + $0x4] sm:$0xf] %v249
                  %v251 = vld [vmem:[%s245 + $0x18] sm:$0xf]
                  %252 = vst [vmem:[%s246 + $0x8] sm:$0xf] %v251
                  %v253 = vld [vmem:[%s245 + $0x24] sm:$0xf]
                  %254 = vst [vmem:[%s246 + $0xc] sm:$0xf] %v253
                  %v255 = vld [vmem:[%s245 + $0x30] sm:$0xf]
                  %256 = vst [vmem:[%s246 + $0x10] sm:$0xf] %v255
                  %v257 = vld [vmem:[%s245 + $0x3c] sm:$0xf]
                  %258 = vst [vmem:[%s246 + $0x14] sm:$0xf] %v257
                  %v259 = vld [vmem:[%s245 + $0x48] sm:$0xf]
                  %260 = vst [vmem:[%s246 + $0x18] sm:$0xf] %v259
                  %v261 = vld [vmem:[%s245 + $0x54] sm:$0xf]
                  %262 = vst [vmem:[%s246 + $0x1c] sm:$0xf] %v261
                  %v263 = vld [vmem:[%s245 + $0x60] sm:$0xf]
                  %264 = vst [vmem:[%s246 + $0x20] sm:$0xf] %v263
                  %v265 = vld [vmem:[%s245 + $0x6c] sm:$0xf]
                  %266 = vst [vmem:[%s246 + $0x24] sm:$0xf] %v265
                  %v267 = vld [vmem:[%s245 + $0x78] sm:$0xf]
                  %268 = vst [vmem:[%s246 + $0x28] sm:$0xf] %v267
                  %v269 = vld [vmem:[%s245 + $0x84] sm:$0xf]
                  %270 = vst [vmem:[%s246 + $0x2c] sm:$0xf] %v269
                  %v271 = vld [vmem:[%s245 + $0x90] sm:$0xf]
                  %272 = vst [vmem:[%s246 + $0x30] sm:$0xf] %v271
                  %v273 = vld [vmem:[%s245 + $0x9c] sm:$0xf]
                  %274 = vst [vmem:[%s246 + $0x34] sm:$0xf] %v273
                  %v275 = vld [vmem:[%s245 + $0xa8] sm:$0xf]
                  %276 = vst [vmem:[%s246 + $0x38] sm:$0xf] %v275
                  %v277 = vld [vmem:[%s245 + $0xb4] sm:$0xf]
                  %278 = vst [vmem:[%s246 + $0x3c] sm:$0xf] %v277
                $region59: #{transformer_forward.11} parent=46 // loop_footer
                  %s244 = sadd.s32 1, %s240
                $region60: #{transformer_forward.11} parent=46 // loop_footer_branch
                  %239 = sbr.rel target = $region56
                $region61: #{transformer_forward.11} parent=46 // loop_exit
                  _
              $region47: #{transformer_forward.11} parent=31 // pred_fallthru
                _
            $region32: #{transformer_forward.11} parent=27 // pred_fallthru
              _
            // Predicated region
            $region33: #{transformer_forward.11} parent=27 // pred_check
              _
            $region34: #{transformer_forward.11} parent=27 // pred_check_branch
              %186 = sbr.rel (0) target = $region36
            $region35: #{transformer_forward.11} parent=27 // pred_region
              loop: start=0, step=1, limit=1
              $region37: #{transformer_forward.11} parent=35 // loop_pre_header
                _
              $region38: #{transformer_forward.11} parent=35 // loop_header
                %s189 = sphi 0, %s193
                %p190 = scmp.ge.s32.totalorder %s189, 1
                %s194 = sphi %s180, %s180
                %s195 = sphi %s175, %s175
              $region39: #{transformer_forward.11} parent=35 // loop_header_branch
                %192 = sbr.rel (%p190) target = $region43
              $region40: #{transformer_forward.11} parent=35 // loop_body
                %v196 = vld [vmem:[%s194] sm:$0xf]
                %197 = vst [vmem:[%s195] sm:$0xf] %v196
                %v198 = vld [vmem:[%s194 + $0xc] sm:$0xf]
                %199 = vst [vmem:[%s195 + $0x4] sm:$0xf] %v198
                %v200 = vld [vmem:[%s194 + $0x18] sm:$0xf]
                %201 = vst [vmem:[%s195 + $0x8] sm:$0xf] %v200
                %v202 = vld [vmem:[%s194 + $0x24] sm:$0xf]
                %203 = vst [vmem:[%s195 + $0xc] sm:$0xf] %v202
                %v204 = vld [vmem:[%s194 + $0x30] sm:$0xf]
                %205 = vst [vmem:[%s195 + $0x10] sm:$0xf] %v204
                %v206 = vld [vmem:[%s194 + $0x3c] sm:$0xf]
                %207 = vst [vmem:[%s195 + $0x14] sm:$0xf] %v206
                %v208 = vld [vmem:[%s194 + $0x48] sm:$0xf]
                %209 = vst [vmem:[%s195 + $0x18] sm:$0xf] %v208
                %v210 = vld [vmem:[%s194 + $0x54] sm:$0xf]
                %211 = vst [vmem:[%s195 + $0x1c] sm:$0xf] %v210
                %v212 = vld [vmem:[%s194 + $0x60] sm:$0xf]
                %213 = vst [vmem:[%s195 + $0x20] sm:$0xf] %v212
                %v214 = vld [vmem:[%s194 + $0x6c] sm:$0xf]
                %215 = vst [vmem:[%s195 + $0x24] sm:$0xf] %v214
                %v216 = vld [vmem:[%s194 + $0x78] sm:$0xf]
                %217 = vst [vmem:[%s195 + $0x28] sm:$0xf] %v216
                %v218 = vld [vmem:[%s194 + $0x84] sm:$0xf]
                %219 = vst [vmem:[%s195 + $0x2c] sm:$0xf] %v218
                %v220 = vld [vmem:[%s194 + $0x90] sm:$0xf]
                %221 = vst [vmem:[%s195 + $0x30] sm:$0xf] %v220
                %v222 = vld [vmem:[%s194 + $0x9c] sm:$0xf]
                %223 = vst [vmem:[%s195 + $0x34] sm:$0xf] %v222
                %v224 = vld [vmem:[%s194 + $0xa8] sm:$0xf]
                %225 = vst [vmem:[%s195 + $0x38] sm:$0xf] %v224
                %v226 = vld [vmem:[%s194 + $0xb4] sm:$0xf]
                %227 = vst [vmem:[%s195 + $0x3c] sm:$0xf] %v226
              $region41: #{transformer_forward.11} parent=35 // loop_footer
                %s193 = sadd.s32 1, %s189
              $region42: #{transformer_forward.11} parent=35 // loop_footer_branch
                %188 = sbr.rel target = $region38
              $region43: #{transformer_forward.11} parent=35 // loop_exit
                _
            $region36: #{transformer_forward.11} parent=27 // pred_fallthru
              _
          $region28: #{transformer_forward.11} parent=23 // pred_fallthru
            _
          %279 = vnop
        $region24: #{transformer_forward.11} parent=19 // pred_fallthru
          _
        // Predicated region
        $region62: #{transformer_forward.11} parent=19 // pred_check
          %p280 = pneg %p104
        $region63: #{transformer_forward.11} parent=19 // pred_check_branch
          %282 = sbr.rel (%p280) target = $region65
        $region64: #{transformer_forward.11} parent=19 // pred_region
          %p283 = scmp.lt.s32.totalorder %s17, 2
          %s284 = scalar_select %p283, %s17, 2
          %s285 = scalar_lea.vmem %s2, %s284
        $region65: #{transformer_forward.11} parent=19 // pred_fallthru
          _
      $region20: #{transformer_forward.11} parent=5 // pred_fallthru
        _
      %p286 = scmp.le.s32.totalorder 1, %s9
      %p287 = scmp.lt.s32.totalorder %s9, 4
      %p288 = pnand %p286, %p287
      %p289 = pneg %p288
      // Predicated region
      $region66: #{transformer_forward.11} parent=5 // pred_check
        _
      $region67: #{transformer_forward.11} parent=5 // pred_check_branch
        %291 = sbr.rel (%p288) target = $region69
      $region68: #{transformer_forward.11} parent=5 // pred_region
        %s292 = ssub.s32 %s9, 1
        %s293 = sand.u32 %s71, 1
        %s294 = sand.u32 %s71, 1
        %s295 = smul.addr %s294, 64
        %s296 = scalar_lea.vmem [#allocation3], %s295
        // Predicated region
        $region70: #{transformer_forward.11} parent=68 // pred_check
          %p297 = pneg %p84
        $region71: #{transformer_forward.11} parent=68 // pred_check_branch
          %299 = sbr.rel (%p297) target = $region73
        $region72: #{transformer_forward.11} parent=68 // pred_region
          _
        $region73: #{transformer_forward.11} parent=68 // pred_fallthru
          _
        %s300 = smul.u32 4, %s19
        %p301 = scmp.lt.s32.totalorder %s300, 3
        %s302 = scalar_select %p301, %s300, 3
        %p303 = scmp.lt.s32.totalorder %s21, 0
        %s304 = scalar_select %p303, %s21, 0
        %s305 = sadd.s32 %s304, %s302
        %s306 = smul.addr %s305, 4
        %s307 = scalar_lea.vmem %s0, %s306
        %p308 = pneg %p56
        %p309 = pneg %p53
        %s310 = sand.u32 %s71, 1
        %s311 = sand.u32 %s71, 1
        %s312 = smul.addr %s311, 64
        %s313 = scalar_lea.vmem [#allocation3], %s312
        %p314 = pneg %p84
        %p315 = pneg %p81
        %p316 = scmp.lt.s32.totalorder %s20, 2
        %s317 = scalar_select %p316, %s20, 2
        %s318 = scalar_lea.vmem %s2, %s317
        %p319 = pneg %p110
        %p320 = pneg %p107
        %p321 = pneg %p138
        %p322 = pneg %p135
        %s323 = sand.u32 %s125, 1
        %s324 = sand.u32 %s125, 1
        %s325 = smul.addr %s324, 16
        %s326 = scalar_lea.vmem [#allocation4], %s325
        %s327 = smul.u32 4, %s19
        %p328 = scmp.lt.s32.totalorder %s327, 3
        %s329 = scalar_select %p328, %s327, 3
        %p330 = scmp.lt.s32.totalorder %s21, 0
        %s331 = scalar_select %p330, %s21, 0
        %s332 = sadd.s32 %s331, %s329
        %s333 = smul.addr %s332, 4
        %s334 = scalar_lea.vmem %s0, %s333
        %s335 = smul.u32 4, %s19
        %s336 = smul.u32 16, %s21
        %p337 = scmp.lt.s32.totalorder %s20, 2
        %s338 = scalar_select %p337, %s20, 2
        %s339 = scalar_lea.vmem %s2, %s338
        %s340 = smul.u32 4, %s19
        %p342 = scmp.eq.s32.totalorder %s21, 0
        // Predicated region
        $region74: #{transformer_forward.11} parent=68 // pred_check
          %p343 = pneg %p342
        $region75: #{transformer_forward.11} parent=68 // pred_check_branch
          %345 = sbr.rel (%p343) target = $region77
        $region76: #{transformer_forward.11} parent=68 // pred_region
          %346 = vst [vmem:[#allocation2] sm:$0xff] 0.0
          %347 = vst [vmem:[#allocation2 + $0x8] sm:$0xff] 0.0
          %348 = vst [vmem:[#allocation2 + $0x10] sm:$0xff] 0.0
          %349 = vst [vmem:[#allocation2 + $0x18] sm:$0xff] 0.0
        $region77: #{transformer_forward.11} parent=68 // pred_fallthru
          _
        %v350 = vld [vmem:[#allocation2] sm:$0xff]
        %v351 = vld [vmem:[#allocation2 + $0x8] sm:$0xff]
        %v352 = vld [vmem:[#allocation2 + $0x10] sm:$0xff]
        %v353 = vld [vmem:[#allocation2 + $0x18] sm:$0xff]
        %v354 = vld [vmem:[%s334] sm:$0xf]
        %v355 = vld [vmem:[%s334 + $0x4] sm:$0xf]
        %v356 = vld [vmem:[%s334 + $0x8] sm:$0xf]
        %v357 = vld [vmem:[%s334 + $0xc] sm:$0xf]
        %v358 = vld [vmem:[%s296] sm:$0xf]
        %v359 = vld [vmem:[%s296 + $0x4] sm:$0xf]
        %v360 = vld [vmem:[%s296 + $0x8] sm:$0xf]
        %v361 = vld [vmem:[%s296 + $0xc] sm:$0xf]
        %v362 = vld [vmem:[%s296 + $0x10] sm:$0xf]
        %v363 = vld [vmem:[%s296 + $0x14] sm:$0xf]
        %v364 = vld [vmem:[%s296 + $0x18] sm:$0xf]
        %v365 = vld [vmem:[%s296 + $0x1c] sm:$0xf]
        %v366 = vld [vmem:[%s296 + $0x20] sm:$0xf]
        %v367 = vld [vmem:[%s296 + $0x24] sm:$0xf]
        %v368 = vld [vmem:[%s296 + $0x28] sm:$0xf]
        %v369 = vld [vmem:[%s296 + $0x2c] sm:$0xf]
        %v370 = vld [vmem:[%s296 + $0x30] sm:$0xf]
        %v371 = vld [vmem:[%s296 + $0x34] sm:$0xf]
        %v372 = vld [vmem:[%s296 + $0x38] sm:$0xf]
        %v373 = vld [vmem:[%s296 + $0x3c] sm:$0xf]
        %v378 = vunpack.c.l.b16 %v354
        %v379 = vunpack.c.l.b16 %v355
        %v380 = vunpack.c.l.b16 %v356
        %v381 = vunpack.c.l.b16 %v357
        %v382 = vpack.c.b16 %v379, %v378
        %v383 = vpack.c.b16 %v381, %v380
        %v402 = vunpack.c.l.b16 %v358
        %v403 = vunpack.c.l.b16 %v359
        %v404 = vunpack.c.l.b16 %v360
        %v405 = vunpack.c.l.b16 %v361
        %v406 = vunpack.c.l.b16 %v362
        %v407 = vunpack.c.l.b16 %v363
        %v408 = vunpack.c.l.b16 %v364
        %v409 = vunpack.c.l.b16 %v365
        %v410 = vunpack.c.l.b16 %v366
        %v411 = vunpack.c.l.b16 %v367
        %v412 = vunpack.c.l.b16 %v368
        %v413 = vunpack.c.l.b16 %v369
        %v414 = vunpack.c.l.b16 %v370
        %v415 = vunpack.c.l.b16 %v371
        %v416 = vunpack.c.l.b16 %v372
        %v417 = vunpack.c.l.b16 %v373
        %v418 = vpack.c.b16 %v403, %v402
        %v419 = vpack.c.b16 %v405, %v404
        %v420 = vpack.c.b16 %v407, %v406
        %v421 = vpack.c.b16 %v409, %v408
        %v422 = vpack.c.b16 %v411, %v410
        %v423 = vpack.c.b16 %v413, %v412
        %v424 = vpack.c.b16 %v415, %v414
        %v425 = vpack.c.b16 %v417, %v416
        %434 = vmatprep.subr.bf16.mxu0 0
        %435 = vmatpush1.bf16.msra.mxu0 %v418
        %436 = vmatprep.subr.bf16.mxu0 0
        %437 = vmatpush1.bf16.msra.mxu0 %v419
        %438 = vmatprep.subr.bf16.mxu0 0
        %439 = vmatpush1.bf16.msra.mxu0 %v420
        %440 = vmatprep.subr.bf16.mxu0 0
        %441 = vmatpush1.bf16.msra.mxu0 %v421
        %442 = vmatprep.subr.bf16.mxu0 0
        %443 = vmatpush1.bf16.msra.mxu0 %v422
        %444 = vmatprep.subr.bf16.mxu0 0
        %445 = vmatpush1.bf16.msra.mxu0 %v423
        %446 = vmatprep.subr.bf16.mxu0 0
        %447 = vmatpush1.bf16.msra.mxu0 %v424
        %448 = vmatprep.subr.bf16.mxu0 0
        %449 = vmatpush1.bf16.msra.mxu0 %v425
        %450 = vmatprep.subr.bf16.mxu0 0
        %451 = vmatpush1.bf16.msra.mxu0 0
        %452 = vmatprep.subr.bf16.mxu0 0
        %453 = vmatpush1.bf16.msra.mxu0 0
        %454 = vmatprep.subr.bf16.mxu0 0
        %455 = vmatpush1.bf16.msra.mxu0 0
        %456 = vmatprep.subr.bf16.mxu0 0
        %457 = vmatpush1.bf16.msra.mxu0 0
        %458 = vmatprep.subr.bf16.mxu0 0
        %459 = vmatpush1.bf16.msra.mxu0 0
        %460 = vmatprep.subr.bf16.mxu0 0
        %461 = vmatpush1.bf16.msra.mxu0 0
        %462 = vmatprep.subr.bf16.mxu0 0
        %463 = vmatpush1.bf16.msra.mxu0 0
        %464 = vmatprep.subr.bf16.mxu0 0
        %465 = vmatpush1.bf16.msra.mxu0 0
        %466 = vmatprep.mubr.bf16.mxu0 0
        %467 = vmatmul.mubr.bf16.gmra.mrb[0].mxu0 %v382
        %v468 = vpop.f32.mrb[0].mxu0
        %v469 = vadd.f32 0.0, %v468
        %v470 = vpop.f32.mrb[0].mxu0
        %v471 = vpop.f32.mrb[0].mxu0
        %v472 = vadd.f32 0.0, %v471
        %v473 = vpop.f32.mrb[0].mxu0
        %474 = vmatprep.mubr.bf16.mxu0 0
        %475 = vmatmul.mubr.bf16.gmra.mrb[0].mxu0 %v383
        %v476 = vpop.f32.mrb[0].mxu0
        %v477 = vadd.f32 0.0, %v476
        %v478 = vpop.f32.mrb[0].mxu0
        %v479 = vpop.f32.mrb[0].mxu0
        %v480 = vadd.f32 0.0, %v479
        %v481 = vpop.f32.mrb[0].mxu0
        %482 = vdwg.mxu0
        %v483 = vadd.f32 %v350, %v469
        %v484 = vadd.f32 %v351, %v472
        %v485 = vadd.f32 %v352, %v477
        %v486 = vadd.f32 %v353, %v480
        %487 = vst [vmem:[#allocation2] sm:$0xff] %v483
        %488 = vst [vmem:[#allocation2 + $0x8] sm:$0xff] %v484
        %489 = vst [vmem:[#allocation2 + $0x10] sm:$0xff] %v485
        %490 = vst [vmem:[#allocation2 + $0x18] sm:$0xff] %v486
        // Predicated region
        $region78: #{transformer_forward.11} parent=68 // pred_check
          %p491 = pneg %p342
        $region79: #{transformer_forward.11} parent=68 // pred_check_branch
          %493 = sbr.rel (%p491) target = $region81
        $region80: #{transformer_forward.11} parent=68 // pred_region
          %v494 = vld [vmem:[#allocation2] sm:$0xff]
          %v495 = vld [vmem:[#allocation2 + $0x8] sm:$0xff]
          %v496 = vld [vmem:[#allocation2 + $0x10] sm:$0xff]
          %v497 = vld [vmem:[#allocation2 + $0x18] sm:$0xff]
          %v498 = vld [vmem:[%s339] sm:$0x1]
          %v500 = vlaneseq
          %v501 = vshrl.u32 %v500, 7
          %v502 = vsub.s32 0, %v501
          %v503 = vrot.slane %v498, %v502
          %v505 = vadd.f32 %v494, %v503
          %v506 = vadd.f32 %v495, %v503
          %v507 = vadd.f32 %v496, %v503
          %v508 = vadd.f32 %v497, %v503
          %v509 = vpack.c.bf16 %v506, %v505
          %v510 = vpack.c.bf16 %v508, %v507
          %v513 = vunpack.c.l.b16 %v509
          %v514 = vunpack.c.h.b16 %v509
          %v515 = vunpack.c.l.b16 %v510
          %v516 = vunpack.c.h.b16 %v510
          %v517 = vpack.c.b16 %v513, %v513
          %v518 = vpack.c.b16 %v514, %v514
          %v519 = vpack.c.b16 %v515, %v515
          %v520 = vpack.c.b16 %v516, %v516
          %525 = vst [vmem:[%s326] sm:$0xf] %v517
          %526 = vst [vmem:[%s326 + $0x4] sm:$0xf] %v518
          %527 = vst [vmem:[%s326 + $0x8] sm:$0xf] %v519
          %528 = vst [vmem:[%s326 + $0xc] sm:$0xf] %v520
        $region81: #{transformer_forward.11} parent=68 // pred_fallthru
          _
        %s529 = sand.u32 %s125, 1
        %s530 = sand.u32 %s125, 1
        %s531 = smul.addr %s530, 16
        %s532 = scalar_lea.vmem [#allocation4], %s531
        // Predicated region
        $region82: #{transformer_forward.11} parent=68 // pred_check
          %p533 = pneg %p135
        $region83: #{transformer_forward.11} parent=68 // pred_check_branch
          %535 = sbr.rel (%p533) target = $region85
        $region84: #{transformer_forward.11} parent=68 // pred_region
          %s536 = smul.u32 4, %s19
          %s537 = smul.addr %s536, 3
          %s538 = sadd.s32 %s20, %s537
          %s539 = smul.addr %s538, 4
          %s540 = scalar_lea.vmem %s3, %s539
          // Predicated region
          $region86: #{transformer_forward.11} parent=84 // pred_check
            _
          $region87: #{transformer_forward.11} parent=84 // pred_check_branch
            %542 = sbr.rel (0) target = $region89
          $region88: #{transformer_forward.11} parent=84 // pred_region
            // Predicated region
            $region90: #{transformer_forward.11} parent=88 // pred_check
              _
            $region91: #{transformer_forward.11} parent=88 // pred_check_branch
              %544 = sbr.rel target = $region93
            $region92: #{transformer_forward.11} parent=88 // pred_region
              // Predicated region
              $region105: #{transformer_forward.11} parent=92 // pred_check
                _
              $region106: #{transformer_forward.11} parent=92 // pred_check_branch
                %565 = sbr.rel (0) target = $region108
              $region107: #{transformer_forward.11} parent=92 // pred_region
                loop: start=0, step=1, limit=1
                $region109: #{transformer_forward.11} parent=107 // loop_pre_header
                  _
                $region110: #{transformer_forward.11} parent=107 // loop_header
                  %s567 = sphi 0, %s571
                  %p568 = scmp.ge.s32.totalorder %s567, 1
                  %s572 = sphi %s532, %s532
                  %s573 = sphi %s540, %s540
                $region111: #{transformer_forward.11} parent=107 // loop_header_branch
                  %570 = sbr.rel (%p568) target = $region115
                $region112: #{transformer_forward.11} parent=107 // loop_body
                  _
                $region113: #{transformer_forward.11} parent=107 // loop_footer
                  %s571 = sadd.s32 1, %s567
                $region114: #{transformer_forward.11} parent=107 // loop_footer_branch
                  %566 = sbr.rel target = $region110
                $region115: #{transformer_forward.11} parent=107 // loop_exit
                  _
                loop: start=0, step=1, limit=1
                $region116: #{transformer_forward.11} parent=107 // loop_pre_header
                  _
                $region117: #{transformer_forward.11} parent=107 // loop_header
                  %s576 = sphi 0, %s580
                  %p577 = scmp.ge.s32.totalorder %s576, 1
                  %s581 = sphi %s532, %s532
                  %s582 = sphi %s540, %s540
                $region118: #{transformer_forward.11} parent=107 // loop_header_branch
                  %579 = sbr.rel (%p577) target = $region122
                $region119: #{transformer_forward.11} parent=107 // loop_body
                  %v583 = vld [vmem:[%s581] sm:$0xf]
                  %584 = vst [vmem:[%s582] sm:$0xf] %v583
                  %v585 = vld [vmem:[%s581 + $0x4] sm:$0xf]
                  %586 = vst [vmem:[%s582 + $0xc] sm:$0xf] %v585
                  %v587 = vld [vmem:[%s581 + $0x8] sm:$0xf]
                  %588 = vst [vmem:[%s582 + $0x18] sm:$0xf] %v587
                  %v589 = vld [vmem:[%s581 + $0xc] sm:$0xf]
                  %590 = vst [vmem:[%s582 + $0x24] sm:$0xf] %v589
                $region120: #{transformer_forward.11} parent=107 // loop_footer
                  %s580 = sadd.s32 1, %s576
                $region121: #{transformer_forward.11} parent=107 // loop_footer_branch
                  %575 = sbr.rel target = $region117
                $region122: #{transformer_forward.11} parent=107 // loop_exit
                  _
              $region108: #{transformer_forward.11} parent=92 // pred_fallthru
                _
            $region93: #{transformer_forward.11} parent=88 // pred_fallthru
              _
            // Predicated region
            $region94: #{transformer_forward.11} parent=88 // pred_check
              _
            $region95: #{transformer_forward.11} parent=88 // pred_check_branch
              %546 = sbr.rel (0) target = $region97
            $region96: #{transformer_forward.11} parent=88 // pred_region
              loop: start=0, step=1, limit=1
              $region98: #{transformer_forward.11} parent=96 // loop_pre_header
                _
              $region99: #{transformer_forward.11} parent=96 // loop_header
                %s549 = sphi 0, %s553
                %p550 = scmp.ge.s32.totalorder %s549, 1
                %s554 = sphi %s532, %s532
                %s555 = sphi %s540, %s540
              $region100: #{transformer_forward.11} parent=96 // loop_header_branch
                %552 = sbr.rel (%p550) target = $region104
              $region101: #{transformer_forward.11} parent=96 // loop_body
                %v556 = vld [vmem:[%s554] sm:$0xf]
                %557 = vst [vmem:[%s555] sm:$0xf] %v556
                %v558 = vld [vmem:[%s554 + $0x4] sm:$0xf]
                %559 = vst [vmem:[%s555 + $0xc] sm:$0xf] %v558
                %v560 = vld [vmem:[%s554 + $0x8] sm:$0xf]
                %561 = vst [vmem:[%s555 + $0x18] sm:$0xf] %v560
                %v562 = vld [vmem:[%s554 + $0xc] sm:$0xf]
                %563 = vst [vmem:[%s555 + $0x24] sm:$0xf] %v562
              $region102: #{transformer_forward.11} parent=96 // loop_footer
                %s553 = sadd.s32 1, %s549
              $region103: #{transformer_forward.11} parent=96 // loop_footer_branch
                %548 = sbr.rel target = $region99
              $region104: #{transformer_forward.11} parent=96 // loop_exit
                _
            $region97: #{transformer_forward.11} parent=88 // pred_fallthru
              _
          $region89: #{transformer_forward.11} parent=84 // pred_fallthru
            _
          %591 = vnop
        $region85: #{transformer_forward.11} parent=68 // pred_fallthru
          _
      $region69: #{transformer_forward.11} parent=5 // pred_fallthru
        _
      %p592 = scmp.le.s32.totalorder 2, %s9
      // Predicated region
      $region123: #{transformer_forward.11} parent=5 // pred_check
        %p593 = pneg %p592
      $region124: #{transformer_forward.11} parent=5 // pred_check_branch
        %595 = sbr.rel (%p593) target = $region126
      $region125: #{transformer_forward.11} parent=5 // pred_region
        %s596 = ssub.s32 %s9, 2
        // Predicated region
        $region127: #{transformer_forward.11} parent=125 // pred_check
          %p597 = pneg %p141
        $region128: #{transformer_forward.11} parent=125 // pred_check_branch
          %599 = sbr.rel (%p597) target = $region130
        $region129: #{transformer_forward.11} parent=125 // pred_region
          %s600 = sand.u32 %s126, 1
          %s601 = sand.u32 %s126, 1
          %s602 = smul.addr %s601, 16
          %s603 = scalar_lea.vmem [#allocation4], %s602
        $region130: #{transformer_forward.11} parent=125 // pred_fallthru
          _
      $region126: #{transformer_forward.11} parent=5 // pred_fallthru
        _
    $region6: #{transformer_forward.11} parent=1 // loop_footer
      %s13 = sadd.s32 1, %s9
    $region7: #{transformer_forward.11} parent=1 // loop_footer_branch
      %8 = sbr.rel target = $region3
    $region8: #{transformer_forward.11} parent=1 // loop_exit
      _

// kernel: transformer_forward.13
$region0: #{transformer_forward.13}
  #allocation0 [shape = 'u32[]', space=smem, size = 0x4, offset = 0x4, fixed_abs, tag = 'smem constant byte address 0x4 - core index']
  #allocation1 [shape = 'u32[144,128]{1,0:T(1,128)}', space=vmem, size = 0x12000, scoped, tag = 'internal scratch']
  #allocation2 [shape = 'f32[32,128]{1,0:T(8,128)}', space=vmem, size = 0x4000, scoped, tag = 'scratch operand']
  %s0 = inlined_call_operand.vmem [shape: bf16[32,128], index: 0, kind: input, shape index: {}]
  %s1 = inlined_call_operand.vmem [shape: bf16[128,128], index: 1, kind: input, shape index: {}]
  %s2 = inlined_call_operand.vmem [shape: f32[1,128], index: 2, kind: input, shape index: {}]
  %s3 = inlined_call_operand.vmem [shape: bf16[32,128], index: 3, kind: input, shape index: {}]
  %s4 = inlined_call_operand.vmem [shape: f32[1,128], index: 4, kind: input, shape index: {}]
  %s5 = inlined_call_operand.vmem [shape: f32[1,128], index: 5, kind: input, shape index: {}]
  %s6 = inlined_call_operand.vmem [shape: bf16[32,128], index: 6, kind: output, shape index: {}]
  %s7 = sld [smem:[#allocation0]]
  $region42: #{transformer_forward.13} parent=0
    _
  %s9 = ssub.s32 1, %s7
  %s10 = scalar_select 0, %s9, %s7
  // Predicated region
  $region2: #{transformer_forward.13} parent=0 // pred_check
    _
  $region3: #{transformer_forward.13} parent=0 // pred_check_branch
    %12 = sbr.rel (0) target = $region5
  $region4: #{transformer_forward.13} parent=0 // pred_region
    _
  $region5: #{transformer_forward.13} parent=0 // pred_fallthru
    _
  // Predicated region
  $region6: #{transformer_forward.13} parent=0 // pred_check
    _
  $region7: #{transformer_forward.13} parent=0 // pred_check_branch
    %14 = sbr.rel (0) target = $region9
  $region8: #{transformer_forward.13} parent=0 // pred_region
    _
  $region9: #{transformer_forward.13} parent=0 // pred_fallthru
    _
  // Predicated region
  $region10: #{transformer_forward.13} parent=0 // pred_check
    _
  $region11: #{transformer_forward.13} parent=0 // pred_check_branch
    %16 = sbr.rel (0) target = $region13
  $region12: #{transformer_forward.13} parent=0 // pred_region
    _
  $region13: #{transformer_forward.13} parent=0 // pred_fallthru
    _
  // Predicated region
  $region14: #{transformer_forward.13} parent=0 // pred_check
    _
  $region15: #{transformer_forward.13} parent=0 // pred_check_branch
    %18 = sbr.rel (0) target = $region17
  $region16: #{transformer_forward.13} parent=0 // pred_region
    _
  $region17: #{transformer_forward.13} parent=0 // pred_fallthru
    _
  // Predicated region
  $region18: #{transformer_forward.13} parent=0 // pred_check
    _
  $region19: #{transformer_forward.13} parent=0 // pred_check_branch
    %20 = sbr.rel (0) target = $region21
  $region20: #{transformer_forward.13} parent=0 // pred_region
    _
  $region21: #{transformer_forward.13} parent=0 // pred_fallthru
    _
  // Predicated region
  $region22: #{transformer_forward.13} parent=0 // pred_check
    _
  $region23: #{transformer_forward.13} parent=0 // pred_check_branch
    %22 = sbr.rel (0) target = $region25
  $region24: #{transformer_forward.13} parent=0 // pred_region
    _
  $region25: #{transformer_forward.13} parent=0 // pred_fallthru
    _
  %p24 = scmp.eq.s32.totalorder 0, 0
  // Predicated region
  $region26: #{transformer_forward.13} parent=0 // pred_check
    %p25 = pneg %p24
  $region27: #{transformer_forward.13} parent=0 // pred_check_branch
    %27 = sbr.rel (%p25) target = $region29
  $region28: #{transformer_forward.13} parent=0 // pred_region
    %28 = vst [vmem:[#allocation2] sm:$0xff] 0.0
    %29 = vst [vmem:[#allocation2 + $0x8] sm:$0xff] 0.0
    %30 = vst [vmem:[#allocation2 + $0x10] sm:$0xff] 0.0
    %31 = vst [vmem:[#allocation2 + $0x18] sm:$0xff] 0.0
  $region29: #{transformer_forward.13} parent=0 // pred_fallthru
    _
  %v32 = vld [vmem:[#allocation2] sm:$0xff]
  %v33 = vld [vmem:[#allocation2 + $0x8] sm:$0xff]
  %v34 = vld [vmem:[#allocation2 + $0x10] sm:$0xff]
  %v35 = vld [vmem:[#allocation2 + $0x18] sm:$0xff]
  %v36 = vld [vmem:[%s0] sm:$0xf]
  %v37 = vld [vmem:[%s0 + $0x4] sm:$0xf]
  %v38 = vld [vmem:[%s0 + $0x8] sm:$0xf]
  %v39 = vld [vmem:[%s0 + $0xc] sm:$0xf]
  %v40 = vld [vmem:[%s1] sm:$0xf]
  %v41 = vld [vmem:[%s1 + $0x4] sm:$0xf]
  %v42 = vld [vmem:[%s1 + $0x8] sm:$0xf]
  %v43 = vld [vmem:[%s1 + $0xc] sm:$0xf]
  %v44 = vld [vmem:[%s1 + $0x10] sm:$0xf]
  %v45 = vld [vmem:[%s1 + $0x14] sm:$0xf]
  %v46 = vld [vmem:[%s1 + $0x18] sm:$0xf]
  %v47 = vld [vmem:[%s1 + $0x1c] sm:$0xf]
  %v48 = vld [vmem:[%s1 + $0x20] sm:$0xf]
  %v49 = vld [vmem:[%s1 + $0x24] sm:$0xf]
  %v50 = vld [vmem:[%s1 + $0x28] sm:$0xf]
  %v51 = vld [vmem:[%s1 + $0x2c] sm:$0xf]
  %v52 = vld [vmem:[%s1 + $0x30] sm:$0xf]
  %v53 = vld [vmem:[%s1 + $0x34] sm:$0xf]
  %v54 = vld [vmem:[%s1 + $0x38] sm:$0xf]
  %v55 = vld [vmem:[%s1 + $0x3c] sm:$0xf]
  %v60 = vunpack.c.l.b16 %v36
  %v61 = vunpack.c.l.b16 %v37
  %v62 = vunpack.c.l.b16 %v38
  %v63 = vunpack.c.l.b16 %v39
  %v64 = vpack.c.b16 %v61, %v60
  %v65 = vpack.c.b16 %v63, %v62
  %v84 = vunpack.c.l.b16 %v40
  %v85 = vunpack.c.l.b16 %v41
  %v86 = vunpack.c.l.b16 %v42
  %v87 = vunpack.c.l.b16 %v43
  %v88 = vunpack.c.l.b16 %v44
  %v89 = vunpack.c.l.b16 %v45
  %v90 = vunpack.c.l.b16 %v46
  %v91 = vunpack.c.l.b16 %v47
  %v92 = vunpack.c.l.b16 %v48
  %v93 = vunpack.c.l.b16 %v49
  %v94 = vunpack.c.l.b16 %v50
  %v95 = vunpack.c.l.b16 %v51
  %v96 = vunpack.c.l.b16 %v52
  %v97 = vunpack.c.l.b16 %v53
  %v98 = vunpack.c.l.b16 %v54
  %v99 = vunpack.c.l.b16 %v55
  %v100 = vpack.c.b16 %v85, %v84
  %v101 = vpack.c.b16 %v87, %v86
  %v102 = vpack.c.b16 %v89, %v88
  %v103 = vpack.c.b16 %v91, %v90
  %v104 = vpack.c.b16 %v93, %v92
  %v105 = vpack.c.b16 %v95, %v94
  %v106 = vpack.c.b16 %v97, %v96
  %v107 = vpack.c.b16 %v99, %v98
  %116 = vmatprep.subr.bf16.mxu0 0
  %117 = vmatpush1.bf16.msra.mxu0 %v100
  %118 = vmatprep.subr.bf16.mxu0 0
  %119 = vmatpush1.bf16.msra.mxu0 %v101
  %120 = vmatprep.subr.bf16.mxu0 0
  %121 = vmatpush1.bf16.msra.mxu0 %v102
  %122 = vmatprep.subr.bf16.mxu0 0
  %123 = vmatpush1.bf16.msra.mxu0 %v103
  %124 = vmatprep.subr.bf16.mxu0 0
  %125 = vmatpush1.bf16.msra.mxu0 %v104
  %126 = vmatprep.subr.bf16.mxu0 0
  %127 = vmatpush1.bf16.msra.mxu0 %v105
  %128 = vmatprep.subr.bf16.mxu0 0
  %129 = vmatpush1.bf16.msra.mxu0 %v106
  %130 = vmatprep.subr.bf16.mxu0 0
  %131 = vmatpush1.bf16.msra.mxu0 %v107
  %132 = vmatprep.subr.bf16.mxu0 0
  %133 = vmatpush1.bf16.msra.mxu0 0
  %134 = vmatprep.subr.bf16.mxu0 0
  %135 = vmatpush1.bf16.msra.mxu0 0
  %136 = vmatprep.subr.bf16.mxu0 0
  %137 = vmatpush1.bf16.msra.mxu0 0
  %138 = vmatprep.subr.bf16.mxu0 0
  %139 = vmatpush1.bf16.msra.mxu0 0
  %140 = vmatprep.subr.bf16.mxu0 0
  %141 = vmatpush1.bf16.msra.mxu0 0
  %142 = vmatprep.subr.bf16.mxu0 0
  %143 = vmatpush1.bf16.msra.mxu0 0
  %144 = vmatprep.subr.bf16.mxu0 0
  %145 = vmatpush1.bf16.msra.mxu0 0
  %146 = vmatprep.subr.bf16.mxu0 0
  %147 = vmatpush1.bf16.msra.mxu0 0
  %148 = vmatprep.mubr.bf16.mxu0 0
  %149 = vmatmul.mubr.bf16.gmra.mrb[0].mxu0 %v64
  %v150 = vpop.f32.mrb[0].mxu0
  %v151 = vadd.f32 0.0, %v150
  %v152 = vpop.f32.mrb[0].mxu0
  %v153 = vpop.f32.mrb[0].mxu0
  %v154 = vadd.f32 0.0, %v153
  %v155 = vpop.f32.mrb[0].mxu0
  %156 = vmatprep.mubr.bf16.mxu0 0
  %157 = vmatmul.mubr.bf16.gmra.mrb[0].mxu0 %v65
  %v158 = vpop.f32.mrb[0].mxu0
  %v159 = vadd.f32 0.0, %v158
  %v160 = vpop.f32.mrb[0].mxu0
  %v161 = vpop.f32.mrb[0].mxu0
  %v162 = vadd.f32 0.0, %v161
  %v163 = vpop.f32.mrb[0].mxu0
  %164 = vdwg.mxu0
  %v165 = vadd.f32 %v32, %v151
  %v166 = vadd.f32 %v33, %v154
  %v167 = vadd.f32 %v34, %v159
  %v168 = vadd.f32 %v35, %v162
  %169 = vst [vmem:[#allocation2] sm:$0xff] %v165
  %170 = vst [vmem:[#allocation2 + $0x8] sm:$0xff] %v166
  %171 = vst [vmem:[#allocation2 + $0x10] sm:$0xff] %v167
  %172 = vst [vmem:[#allocation2 + $0x18] sm:$0xff] %v168
  // Predicated region
  $region30: #{transformer_forward.13} parent=0 // pred_check
    %p173 = pneg %p24
  $region31: #{transformer_forward.13} parent=0 // pred_check_branch
    %175 = sbr.rel (%p173) target = $region33
  $region32: #{transformer_forward.13} parent=0 // pred_region
    %v176 = vld [vmem:[#allocation2] sm:$0xff]
    %v177 = vld [vmem:[#allocation2 + $0x8] sm:$0xff]
    %v178 = vld [vmem:[#allocation2 + $0x10] sm:$0xff]
    %v179 = vld [vmem:[#allocation2 + $0x18] sm:$0xff]
    %v180 = vld [vmem:[%s2] sm:$0x1]
    %v182 = vlaneseq
    %v183 = vshrl.u32 %v182, 7
    %v184 = vsub.s32 0, %v183
    %v185 = vrot.slane %v180, %v184
    %v187 = vadd.f32 %v176, %v185
    %v188 = vadd.f32 %v177, %v185
    %v189 = vadd.f32 %v178, %v185
    %v190 = vadd.f32 %v179, %v185
    %v191 = vld [vmem:[%s3] sm:$0xf]
    %v192 = vld [vmem:[%s3 + $0x4] sm:$0xf]
    %v193 = vld [vmem:[%s3 + $0x8] sm:$0xf]
    %v194 = vld [vmem:[%s3 + $0xc] sm:$0xf]
    %v195 = vunpack.c.l.bf16 %v191
    %v196 = vunpack.c.l.bf16 %v192
    %v197 = vunpack.c.l.bf16 %v193
    %v198 = vunpack.c.l.bf16 %v194
    %v199 = vadd.f32 %v187, %v195
    %v200 = vadd.f32 %v188, %v196
    %v201 = vadd.f32 %v189, %v197
    %v202 = vadd.f32 %v190, %v198
    %203 = vadd.xlane.f32.xlu0 %v199
    %v204 = vpop.xlane.xlu0 %203
    %205 = vadd.xlane.f32.xlu0 %v200
    %v206 = vpop.xlane.xlu0 %205
    %207 = vadd.xlane.f32.xlu0 %v201
    %v208 = vpop.xlane.xlu0 %207
    %209 = vadd.xlane.f32.xlu0 %v202
    %v210 = vpop.xlane.xlu0 %209
    %v211 = vrcp.pop 128.0
    %v212 = vmul.f32 %v204, %v211
    %v213 = vmul.f32 %v206, %v211
    %v214 = vmul.f32 %v208, %v211
    %v215 = vmul.f32 %v210, %v211
    %v216 = vsub.f32 %v199, %v212
    %v217 = vsub.f32 %v200, %v213
    %v218 = vsub.f32 %v201, %v214
    %v219 = vsub.f32 %v202, %v215
    %v220 = vmul.f32 %v216, %v216
    %v221 = vmul.f32 %v217, %v217
    %v222 = vmul.f32 %v218, %v218
    %v223 = vmul.f32 %v219, %v219
    %224 = vadd.xlane.f32.xlu0 %v220
    %v225 = vpop.xlane.xlu0 %224
    %226 = vadd.xlane.f32.xlu0 %v221
    %v227 = vpop.xlane.xlu0 %226
    %228 = vadd.xlane.f32.xlu0 %v222
    %v229 = vpop.xlane.xlu0 %228
    %230 = vadd.xlane.f32.xlu0 %v223
    %v231 = vpop.xlane.xlu0 %230
    %v232 = vmul.f32 %v225, %v211
    %v233 = vmul.f32 %v227, %v211
    %v234 = vmul.f32 %v229, %v211
    %v235 = vmul.f32 %v231, %v211
    %v236 = vadd.f32 %v232, 1e-05
    %v237 = vadd.f32 %v233, 1e-05
    %v238 = vadd.f32 %v234, 1e-05
    %v239 = vadd.f32 %v235, 1e-05
    %v240 = vrsqrt.pop %v236
    %v241 = vrsqrt.pop %v237
    %v242 = vrsqrt.pop %v238
    %v243 = vrsqrt.pop %v239
    %v244 = vmul.f32 %v216, %v240
    %v245 = vmul.f32 %v217, %v241
    %v246 = vmul.f32 %v218, %v242
    %v247 = vmul.f32 %v219, %v243
    %v248 = vld [vmem:[%s4] sm:$0x1]
    %v250 = vlaneseq
    %v251 = vshrl.u32 %v250, 7
    %v252 = vsub.s32 0, %v251
    %v253 = vrot.slane %v248, %v252
    %v255 = vmul.f32 %v244, %v253
    %v256 = vmul.f32 %v245, %v253
    %v257 = vmul.f32 %v246, %v253
    %v258 = vmul.f32 %v247, %v253
    %v259 = vld [vmem:[%s5] sm:$0x1]
    %v261 = vlaneseq
    %v262 = vshrl.u32 %v261, 7
    %v263 = vsub.s32 0, %v262
    %v264 = vrot.slane %v259, %v263
    %v266 = vadd.f32 %v255, %v264
    %v267 = vadd.f32 %v256, %v264
    %v268 = vadd.f32 %v257, %v264
    %v269 = vadd.f32 %v258, %v264
    %v270 = vpack.c.bf16 %v267, %v266
    %v271 = vpack.c.bf16 %v269, %v268
    %v274 = vunpack.c.l.b16 %v270
    %v275 = vunpack.c.h.b16 %v270
    %v276 = vunpack.c.l.b16 %v271
    %v277 = vunpack.c.h.b16 %v271
    %v278 = vpack.c.b16 %v274, %v274
    %v279 = vpack.c.b16 %v275, %v275
    %v280 = vpack.c.b16 %v276, %v276
    %v281 = vpack.c.b16 %v277, %v277
    %286 = vst [vmem:[%s6] sm:$0xf] %v278
    %287 = vst [vmem:[%s6 + $0x4] sm:$0xf] %v279
    %288 = vst [vmem:[%s6 + $0x8] sm:$0xf] %v280
    %289 = vst [vmem:[%s6 + $0xc] sm:$0xf] %v281
  $region33: #{transformer_forward.13} parent=0 // pred_fallthru
    _
  // Predicated region
  $region34: #{transformer_forward.13} parent=0 // pred_check
    _
  $region35: #{transformer_forward.13} parent=0 // pred_check_branch
    %291 = sbr.rel (0) target = $region37
  $region36: #{transformer_forward.13} parent=0 // pred_region
    _
  $region37: #{transformer_forward.13} parent=0 // pred_fallthru
    _
  // Predicated region
  $region38: #{transformer_forward.13} parent=0 // pred_check
    _
  $region39: #{transformer_forward.13} parent=0 // pred_check_branch
    %293 = sbr.rel (0) target = $region41
  $region40: #{transformer_forward.13} parent=0 // pred_region
    _
  $region41: #{transformer_forward.13} parent=0 // pred_fallthru
    _

// kernel: transformer_forward.14
$region0: #{transformer_forward.14}
  #allocation0 [shape = 'u32[]', space=smem, size = 0x4, offset = 0x4, fixed_abs, tag = 'smem constant byte address 0x4 - core index']
  #allocation1 [shape = 'u32[144,128]{1,0:T(1,128)}', space=vmem, size = 0x12000, scoped, tag = 'internal scratch']
  #allocation2 [shape = 'f32[32,128]{1,0:T(8,128)}', space=vmem, size = 0x4000, scoped, tag = 'scratch operand']
  %s0 = inlined_call_operand.vmem [shape: bf16[32,128], index: 0, kind: input, shape index: {}]
  %s1 = inlined_call_operand.vmem [shape: bf16[128,256], index: 1, kind: input, shape index: {}]
  %s2 = inlined_call_operand.vmem [shape: f32[1,256], index: 2, kind: input, shape index: {}]
  %s3 = inlined_call_operand.vmem [shape: bf16[256,128], index: 3, kind: input, shape index: {}]
  %s4 = inlined_call_operand.vmem [shape: f32[1,128], index: 4, kind: input, shape index: {}]
  %s5 = inlined_call_operand.vmem [shape: f32[1,128], index: 5, kind: input, shape index: {}]
  %s6 = inlined_call_operand.vmem [shape: f32[1,128], index: 6, kind: input, shape index: {}]
  %s7 = inlined_call_operand.vmem [shape: bf16[32,128], index: 7, kind: output, shape index: {}]
  %s8 = sld [smem:[#allocation0]]
  $region46: #{transformer_forward.14} parent=0
    _
  %s10 = ssub.s32 1, %s8
  %s11 = scalar_select 0, %s10, %s8
  // Predicated region
  $region2: #{transformer_forward.14} parent=0 // pred_check
    _
  $region3: #{transformer_forward.14} parent=0 // pred_check_branch
    %13 = sbr.rel (0) target = $region5
  $region4: #{transformer_forward.14} parent=0 // pred_region
    _
  $region5: #{transformer_forward.14} parent=0 // pred_fallthru
    _
  // Predicated region
  $region6: #{transformer_forward.14} parent=0 // pred_check
    _
  $region7: #{transformer_forward.14} parent=0 // pred_check_branch
    %15 = sbr.rel (0) target = $region9
  $region8: #{transformer_forward.14} parent=0 // pred_region
    _
  $region9: #{transformer_forward.14} parent=0 // pred_fallthru
    _
  // Predicated region
  $region10: #{transformer_forward.14} parent=0 // pred_check
    _
  $region11: #{transformer_forward.14} parent=0 // pred_check_branch
    %17 = sbr.rel (0) target = $region13
  $region12: #{transformer_forward.14} parent=0 // pred_region
    _
  $region13: #{transformer_forward.14} parent=0 // pred_fallthru
    _
  // Predicated region
  $region14: #{transformer_forward.14} parent=0 // pred_check
    _
  $region15: #{transformer_forward.14} parent=0 // pred_check_branch
    %19 = sbr.rel (0) target = $region17
  $region16: #{transformer_forward.14} parent=0 // pred_region
    _
  $region17: #{transformer_forward.14} parent=0 // pred_fallthru
    _
  // Predicated region
  $region18: #{transformer_forward.14} parent=0 // pred_check
    _
  $region19: #{transformer_forward.14} parent=0 // pred_check_branch
    %21 = sbr.rel (0) target = $region21
  $region20: #{transformer_forward.14} parent=0 // pred_region
    _
  $region21: #{transformer_forward.14} parent=0 // pred_fallthru
    _
  // Predicated region
  $region22: #{transformer_forward.14} parent=0 // pred_check
    _
  $region23: #{transformer_forward.14} parent=0 // pred_check_branch
    %23 = sbr.rel (0) target = $region25
  $region24: #{transformer_forward.14} parent=0 // pred_region
    _
  $region25: #{transformer_forward.14} parent=0 // pred_fallthru
    _
  // Predicated region
  $region26: #{transformer_forward.14} parent=0 // pred_check
    _
  $region27: #{transformer_forward.14} parent=0 // pred_check_branch
    %25 = sbr.rel (0) target = $region29
  $region28: #{transformer_forward.14} parent=0 // pred_region
    _
  $region29: #{transformer_forward.14} parent=0 // pred_fallthru
    _
  %p27 = scmp.eq.s32.totalorder 0, 0
  // Predicated region
  $region30: #{transformer_forward.14} parent=0 // pred_check
    %p28 = pneg %p27
  $region31: #{transformer_forward.14} parent=0 // pred_check_branch
    %30 = sbr.rel (%p28) target = $region33
  $region32: #{transformer_forward.14} parent=0 // pred_region
    %31 = vst [vmem:[#allocation2] sm:$0xff] 0.0
    %32 = vst [vmem:[#allocation2 + $0x8] sm:$0xff] 0.0
    %33 = vst [vmem:[#allocation2 + $0x10] sm:$0xff] 0.0
    %34 = vst [vmem:[#allocation2 + $0x18] sm:$0xff] 0.0
  $region33: #{transformer_forward.14} parent=0 // pred_fallthru
    _
  %v35 = vld [vmem:[%s0] sm:$0xf]
  %v36 = vld [vmem:[%s0 + $0x4] sm:$0xf]
  %v37 = vld [vmem:[%s0 + $0x8] sm:$0xf]
  %v38 = vld [vmem:[%s0 + $0xc] sm:$0xf]
  %v39 = vld [vmem:[%s1] sm:$0xff]
  %v40 = vld [vmem:[%s1 + $0x8] sm:$0xff]
  %v41 = vld [vmem:[%s1 + $0x10] sm:$0xff]
  %v42 = vld [vmem:[%s1 + $0x18] sm:$0xff]
  %v43 = vld [vmem:[%s1 + $0x20] sm:$0xff]
  %v44 = vld [vmem:[%s1 + $0x28] sm:$0xff]
  %v45 = vld [vmem:[%s1 + $0x30] sm:$0xff]
  %v46 = vld [vmem:[%s1 + $0x38] sm:$0xff]
  %v47 = vld [vmem:[%s1 + $0x40] sm:$0xff]
  %v48 = vld [vmem:[%s1 + $0x48] sm:$0xff]
  %v49 = vld [vmem:[%s1 + $0x50] sm:$0xff]
  %v50 = vld [vmem:[%s1 + $0x58] sm:$0xff]
  %v51 = vld [vmem:[%s1 + $0x60] sm:$0xff]
  %v52 = vld [vmem:[%s1 + $0x68] sm:$0xff]
  %v53 = vld [vmem:[%s1 + $0x70] sm:$0xff]
  %v54 = vld [vmem:[%s1 + $0x78] sm:$0xff]
  %v55 = vld [vmem:[%s2] sm:$0x3]
  %v57 = vlaneseq
  %v58 = vshrl.u32 %v57, 7
  %v59 = vsub.s32 0, %v58
  %v60 = vrot.slane %v55, %v59
  %v61 = vlaneseq
  %v62 = vshrl.u32 %v61, 7
  %v63 = vsub.s32 1, %v62
  %v64 = vrot.slane %v55, %v63
  %v71 = vunpack.c.l.b16 %v35
  %v72 = vunpack.c.l.b16 %v36
  %v73 = vunpack.c.l.b16 %v37
  %v74 = vunpack.c.l.b16 %v38
  %v75 = vpack.c.b16 %v72, %v71
  %v76 = vpack.c.b16 %v74, %v73
  %v95 = vunpack.c.l.b16 %v39
  %v96 = vunpack.c.h.b16 %v39
  %v97 = vunpack.c.l.b16 %v40
  %v98 = vunpack.c.h.b16 %v40
  %v99 = vunpack.c.l.b16 %v41
  %v100 = vunpack.c.h.b16 %v41
  %v101 = vunpack.c.l.b16 %v42
  %v102 = vunpack.c.h.b16 %v42
  %v103 = vunpack.c.l.b16 %v43
  %v104 = vunpack.c.h.b16 %v43
  %v105 = vunpack.c.l.b16 %v44
  %v106 = vunpack.c.h.b16 %v44
  %v107 = vunpack.c.l.b16 %v45
  %v108 = vunpack.c.h.b16 %v45
  %v109 = vunpack.c.l.b16 %v46
  %v110 = vunpack.c.h.b16 %v46
  %v111 = vunpack.c.l.b16 %v47
  %v112 = vunpack.c.h.b16 %v47
  %v113 = vunpack.c.l.b16 %v48
  %v114 = vunpack.c.h.b16 %v48
  %v115 = vunpack.c.l.b16 %v49
  %v116 = vunpack.c.h.b16 %v49
  %v117 = vunpack.c.l.b16 %v50
  %v118 = vunpack.c.h.b16 %v50
  %v119 = vunpack.c.l.b16 %v51
  %v120 = vunpack.c.h.b16 %v51
  %v121 = vunpack.c.l.b16 %v52
  %v122 = vunpack.c.h.b16 %v52
  %v123 = vunpack.c.l.b16 %v53
  %v124 = vunpack.c.h.b16 %v53
  %v125 = vunpack.c.l.b16 %v54
  %v126 = vunpack.c.h.b16 %v54
  %v127 = vpack.c.b16 %v97, %v95
  %v128 = vpack.c.b16 %v98, %v96
  %v129 = vpack.c.b16 %v101, %v99
  %v130 = vpack.c.b16 %v102, %v100
  %v131 = vpack.c.b16 %v105, %v103
  %v132 = vpack.c.b16 %v106, %v104
  %v133 = vpack.c.b16 %v109, %v107
  %v134 = vpack.c.b16 %v110, %v108
  %v135 = vpack.c.b16 %v113, %v111
  %v136 = vpack.c.b16 %v114, %v112
  %v137 = vpack.c.b16 %v117, %v115
  %v138 = vpack.c.b16 %v118, %v116
  %v139 = vpack.c.b16 %v121, %v119
  %v140 = vpack.c.b16 %v122, %v120
  %v141 = vpack.c.b16 %v125, %v123
  %v142 = vpack.c.b16 %v126, %v124
  %159 = vmatprep.subr.bf16.mxu0 %v128
  %160 = vmatpush1.bf16.msra.mxu0 %v127
  %161 = vmatprep.subr.bf16.mxu0 %v130
  %162 = vmatpush1.bf16.msra.mxu0 %v129
  %163 = vmatprep.subr.bf16.mxu0 %v132
  %164 = vmatpush1.bf16.msra.mxu0 %v131
  %165 = vmatprep.subr.bf16.mxu0 %v134
  %166 = vmatpush1.bf16.msra.mxu0 %v133
  %167 = vmatprep.subr.bf16.mxu0 %v136
  %168 = vmatpush1.bf16.msra.mxu0 %v135
  %169 = vmatprep.subr.bf16.mxu0 %v138
  %170 = vmatpush1.bf16.msra.mxu0 %v137
  %171 = vmatprep.subr.bf16.mxu0 %v140
  %172 = vmatpush1.bf16.msra.mxu0 %v139
  %173 = vmatprep.subr.bf16.mxu0 %v142
  %174 = vmatpush1.bf16.msra.mxu0 %v141
  %175 = vmatprep.subr.bf16.mxu0 0
  %176 = vmatpush1.bf16.msra.mxu0 0
  %177 = vmatprep.subr.bf16.mxu0 0
  %178 = vmatpush1.bf16.msra.mxu0 0
  %179 = vmatprep.subr.bf16.mxu0 0
  %180 = vmatpush1.bf16.msra.mxu0 0
  %181 = vmatprep.subr.bf16.mxu0 0
  %182 = vmatpush1.bf16.msra.mxu0 0
  %183 = vmatprep.subr.bf16.mxu0 0
  %184 = vmatpush1.bf16.msra.mxu0 0
  %185 = vmatprep.subr.bf16.mxu0 0
  %186 = vmatpush1.bf16.msra.mxu0 0
  %187 = vmatprep.subr.bf16.mxu0 0
  %188 = vmatpush1.bf16.msra.mxu0 0
  %189 = vmatprep.subr.bf16.mxu0 0
  %190 = vmatpush1.bf16.msra.mxu0 0
  %191 = vmatprep.mubr.bf16.mxu0 0
  %192 = vmatmul.mubr.bf16.gmra.mrb[0].mxu0 %v75
  %v193 = vpop.f32.mrb[0].mxu0
  %v194 = vadd.f32 %v60, %v193
  %v195 = vpop.f32.mrb[0].mxu0
  %v196 = vadd.f32 %v64, %v195
  %v197 = vpop.f32.mrb[0].mxu0
  %v198 = vadd.f32 %v60, %v197
  %v199 = vpop.f32.mrb[0].mxu0
  %v200 = vadd.f32 %v64, %v199
  %201 = vmatprep.mubr.bf16.mxu0 0
  %202 = vmatmul.mubr.bf16.gmra.mrb[0].mxu0 %v76
  %v203 = vpop.f32.mrb[0].mxu0
  %v204 = vadd.f32 %v60, %v203
  %v205 = vpop.f32.mrb[0].mxu0
  %v206 = vadd.f32 %v64, %v205
  %v207 = vpop.f32.mrb[0].mxu0
  %v208 = vadd.f32 %v60, %v207
  %v209 = vpop.f32.mrb[0].mxu0
  %v210 = vadd.f32 %v64, %v209
  %211 = vdwg.mxu0
  %v212 = vmax.f32 %v194, 0.0
  %v213 = vmax.f32 %v196, 0.0
  %v214 = vmax.f32 %v198, 0.0
  %v215 = vmax.f32 %v200, 0.0
  %v216 = vmax.f32 %v204, 0.0
  %v217 = vmax.f32 %v206, 0.0
  %v218 = vmax.f32 %v208, 0.0
  %v219 = vmax.f32 %v210, 0.0
  %v220 = vld [vmem:[#allocation2] sm:$0xff]
  %v221 = vld [vmem:[#allocation2 + $0x8] sm:$0xff]
  %v222 = vld [vmem:[#allocation2 + $0x10] sm:$0xff]
  %v223 = vld [vmem:[#allocation2 + $0x18] sm:$0xff]
  %v224 = vpack.c.bf16 %v214, %v212
  %v225 = vpack.c.bf16 %v215, %v213
  %v226 = vpack.c.bf16 %v218, %v216
  %v227 = vpack.c.bf16 %v219, %v217
  %v228 = vld [vmem:[%s3] sm:$0xf]
  %v229 = vld [vmem:[%s3 + $0x4] sm:$0xf]
  %v230 = vld [vmem:[%s3 + $0x8] sm:$0xf]
  %v231 = vld [vmem:[%s3 + $0xc] sm:$0xf]
  %v232 = vld [vmem:[%s3 + $0x10] sm:$0xf]
  %v233 = vld [vmem:[%s3 + $0x14] sm:$0xf]
  %v234 = vld [vmem:[%s3 + $0x18] sm:$0xf]
  %v235 = vld [vmem:[%s3 + $0x1c] sm:$0xf]
  %v236 = vld [vmem:[%s3 + $0x20] sm:$0xf]
  %v237 = vld [vmem:[%s3 + $0x24] sm:$0xf]
  %v238 = vld [vmem:[%s3 + $0x28] sm:$0xf]
  %v239 = vld [vmem:[%s3 + $0x2c] sm:$0xf]
  %v240 = vld [vmem:[%s3 + $0x30] sm:$0xf]
  %v241 = vld [vmem:[%s3 + $0x34] sm:$0xf]
  %v242 = vld [vmem:[%s3 + $0x38] sm:$0xf]
  %v243 = vld [vmem:[%s3 + $0x3c] sm:$0xf]
  %v244 = vld [vmem:[%s3 + $0x40] sm:$0xf]
  %v245 = vld [vmem:[%s3 + $0x44] sm:$0xf]
  %v246 = vld [vmem:[%s3 + $0x48] sm:$0xf]
  %v247 = vld [vmem:[%s3 + $0x4c] sm:$0xf]
  %v248 = vld [vmem:[%s3 + $0x50] sm:$0xf]
  %v249 = vld [vmem:[%s3 + $0x54] sm:$0xf]
  %v250 = vld [vmem:[%s3 + $0x58] sm:$0xf]
  %v251 = vld [vmem:[%s3 + $0x5c] sm:$0xf]
  %v252 = vld [vmem:[%s3 + $0x60] sm:$0xf]
  %v253 = vld [vmem:[%s3 + $0x64] sm:$0xf]
  %v254 = vld [vmem:[%s3 + $0x68] sm:$0xf]
  %v255 = vld [vmem:[%s3 + $0x6c] sm:$0xf]
  %v256 = vld [vmem:[%s3 + $0x70] sm:$0xf]
  %v257 = vld [vmem:[%s3 + $0x74] sm:$0xf]
  %v258 = vld [vmem:[%s3 + $0x78] sm:$0xf]
  %v259 = vld [vmem:[%s3 + $0x7c] sm:$0xf]
  %v292 = vunpack.c.l.b16 %v228
  %v293 = vunpack.c.l.b16 %v229
  %v294 = vunpack.c.l.b16 %v230
  %v295 = vunpack.c.l.b16 %v231
  %v296 = vunpack.c.l.b16 %v232
  %v297 = vunpack.c.l.b16 %v233
  %v298 = vunpack.c.l.b16 %v234
  %v299 = vunpack.c.l.b16 %v235
  %v300 = vunpack.c.l.b16 %v236
  %v301 = vunpack.c.l.b16 %v237
  %v302 = vunpack.c.l.b16 %v238
  %v303 = vunpack.c.l.b16 %v239
  %v304 = vunpack.c.l.b16 %v240
  %v305 = vunpack.c.l.b16 %v241
  %v306 = vunpack.c.l.b16 %v242
  %v307 = vunpack.c.l.b16 %v243
  %v308 = vunpack.c.l.b16 %v244
  %v309 = vunpack.c.l.b16 %v245
  %v310 = vunpack.c.l.b16 %v246
  %v311 = vunpack.c.l.b16 %v247
  %v312 = vunpack.c.l.b16 %v248
  %v313 = vunpack.c.l.b16 %v249
  %v314 = vunpack.c.l.b16 %v250
  %v315 = vunpack.c.l.b16 %v251
  %v316 = vunpack.c.l.b16 %v252
  %v317 = vunpack.c.l.b16 %v253
  %v318 = vunpack.c.l.b16 %v254
  %v319 = vunpack.c.l.b16 %v255
  %v320 = vunpack.c.l.b16 %v256
  %v321 = vunpack.c.l.b16 %v257
  %v322 = vunpack.c.l.b16 %v258
  %v323 = vunpack.c.l.b16 %v259
  %v324 = vpack.c.b16 %v293, %v292
  %v325 = vpack.c.b16 %v295, %v294
  %v326 = vpack.c.b16 %v297, %v296
  %v327 = vpack.c.b16 %v299, %v298
  %v328 = vpack.c.b16 %v301, %v300
  %v329 = vpack.c.b16 %v303, %v302
  %v330 = vpack.c.b16 %v305, %v304
  %v331 = vpack.c.b16 %v307, %v306
  %v332 = vpack.c.b16 %v309, %v308
  %v333 = vpack.c.b16 %v311, %v310
  %v334 = vpack.c.b16 %v313, %v312
  %v335 = vpack.c.b16 %v315, %v314
  %v336 = vpack.c.b16 %v317, %v316
  %v337 = vpack.c.b16 %v319, %v318
  %v338 = vpack.c.b16 %v321, %v320
  %v339 = vpack.c.b16 %v323, %v322
  %356 = vmatprep.subr.bf16.mxu0 0
  %357 = vmatpush1.bf16.msra.mxu0 %v324
  %358 = vmatprep.subr.bf16.mxu0 0
  %359 = vmatpush1.bf16.msra.mxu0 %v325
  %360 = vmatprep.subr.bf16.mxu0 0
  %361 = vmatpush1.bf16.msra.mxu0 %v326
  %362 = vmatprep.subr.bf16.mxu0 0
  %363 = vmatpush1.bf16.msra.mxu0 %v327
  %364 = vmatprep.subr.bf16.mxu0 0
  %365 = vmatpush1.bf16.msra.mxu0 %v328
  %366 = vmatprep.subr.bf16.mxu0 0
  %367 = vmatpush1.bf16.msra.mxu0 %v329
  %368 = vmatprep.subr.bf16.mxu0 0
  %369 = vmatpush1.bf16.msra.mxu0 %v330
  %370 = vmatprep.subr.bf16.mxu0 0
  %371 = vmatpush1.bf16.msra.mxu0 %v331
  %372 = vmatprep.subr.bf16.mxu0 0
  %373 = vmatpush1.bf16.msra.mxu0 %v332
  %374 = vmatprep.subr.bf16.mxu0 0
  %375 = vmatpush1.bf16.msra.mxu0 %v333
  %376 = vmatprep.subr.bf16.mxu0 0
  %377 = vmatpush1.bf16.msra.mxu0 %v334
  %378 = vmatprep.subr.bf16.mxu0 0
  %379 = vmatpush1.bf16.msra.mxu0 %v335
  %380 = vmatprep.subr.bf16.mxu0 0
  %381 = vmatpush1.bf16.msra.mxu0 %v336
  %382 = vmatprep.subr.bf16.mxu0 0
  %383 = vmatpush1.bf16.msra.mxu0 %v337
  %384 = vmatprep.subr.bf16.mxu0 0
  %385 = vmatpush1.bf16.msra.mxu0 %v338
  %386 = vmatprep.subr.bf16.mxu0 0
  %387 = vmatpush1.bf16.msra.mxu0 %v339
  %388 = vmatprep.mubr.bf16.mxu0 %v225
  %389 = vmatmul.mubr.bf16.gmra.mrb[0].mxu0 %v224
  %v390 = vpop.f32.mrb[0].mxu0
  %v391 = vadd.f32 0.0, %v390
  %v392 = vpop.f32.mrb[0].mxu0
  %v393 = vpop.f32.mrb[0].mxu0
  %v394 = vadd.f32 0.0, %v393
  %v395 = vpop.f32.mrb[0].mxu0
  %396 = vmatprep.mubr.bf16.mxu0 %v227
  %397 = vmatmul.mubr.bf16.gmra.mrb[0].mxu0 %v226
  %v398 = vpop.f32.mrb[0].mxu0
  %v399 = vadd.f32 0.0, %v398
  %v400 = vpop.f32.mrb[0].mxu0
  %v401 = vpop.f32.mrb[0].mxu0
  %v402 = vadd.f32 0.0, %v401
  %v403 = vpop.f32.mrb[0].mxu0
  %404 = vdwg.mxu0
  %v405 = vadd.f32 %v220, %v391
  %v406 = vadd.f32 %v221, %v394
  %v407 = vadd.f32 %v222, %v399
  %v408 = vadd.f32 %v223, %v402
  %409 = vst [vmem:[#allocation2] sm:$0xff] %v405
  %410 = vst [vmem:[#allocation2 + $0x8] sm:$0xff] %v406
  %411 = vst [vmem:[#allocation2 + $0x10] sm:$0xff] %v407
  %412 = vst [vmem:[#allocation2 + $0x18] sm:$0xff] %v408
  // Predicated region
  $region34: #{transformer_forward.14} parent=0 // pred_check
    %p413 = pneg %p27
  $region35: #{transformer_forward.14} parent=0 // pred_check_branch
    %415 = sbr.rel (%p413) target = $region37
  $region36: #{transformer_forward.14} parent=0 // pred_region
    %v416 = vld [vmem:[#allocation2] sm:$0xff]
    %v417 = vld [vmem:[#allocation2 + $0x8] sm:$0xff]
    %v418 = vld [vmem:[#allocation2 + $0x10] sm:$0xff]
    %v419 = vld [vmem:[#allocation2 + $0x18] sm:$0xff]
    %v420 = vld [vmem:[%s4] sm:$0x1]
    %v422 = vlaneseq
    %v423 = vshrl.u32 %v422, 7
    %v424 = vsub.s32 0, %v423
    %v425 = vrot.slane %v420, %v424
    %v427 = vadd.f32 %v416, %v425
    %v428 = vadd.f32 %v417, %v425
    %v429 = vadd.f32 %v418, %v425
    %v430 = vadd.f32 %v419, %v425
    %v431 = vld [vmem:[%s0] sm:$0xf]
    %v432 = vld [vmem:[%s0 + $0x4] sm:$0xf]
    %v433 = vld [vmem:[%s0 + $0x8] sm:$0xf]
    %v434 = vld [vmem:[%s0 + $0xc] sm:$0xf]
    %v435 = vunpack.c.l.bf16 %v431
    %v436 = vunpack.c.l.bf16 %v432
    %v437 = vunpack.c.l.bf16 %v433
    %v438 = vunpack.c.l.bf16 %v434
    %v439 = vadd.f32 %v427, %v435
    %v440 = vadd.f32 %v428, %v436
    %v441 = vadd.f32 %v429, %v437
    %v442 = vadd.f32 %v430, %v438
    %443 = vadd.xlane.f32.xlu0 %v439
    %v444 = vpop.xlane.xlu0 %443
    %445 = vadd.xlane.f32.xlu0 %v440
    %v446 = vpop.xlane.xlu0 %445
    %447 = vadd.xlane.f32.xlu0 %v441
    %v448 = vpop.xlane.xlu0 %447
    %449 = vadd.xlane.f32.xlu0 %v442
    %v450 = vpop.xlane.xlu0 %449
    %v451 = vrcp.pop 128.0
    %v452 = vmul.f32 %v444, %v451
    %v453 = vmul.f32 %v446, %v451
    %v454 = vmul.f32 %v448, %v451
    %v455 = vmul.f32 %v450, %v451
    %v456 = vsub.f32 %v439, %v452
    %v457 = vsub.f32 %v440, %v453
    %v458 = vsub.f32 %v441, %v454
    %v459 = vsub.f32 %v442, %v455
    %v460 = vmul.f32 %v456, %v456
    %v461 = vmul.f32 %v457, %v457
    %v462 = vmul.f32 %v458, %v458
    %v463 = vmul.f32 %v459, %v459
    %464 = vadd.xlane.f32.xlu0 %v460
    %v465 = vpop.xlane.xlu0 %464
    %466 = vadd.xlane.f32.xlu0 %v461
    %v467 = vpop.xlane.xlu0 %466
    %468 = vadd.xlane.f32.xlu0 %v462
    %v469 = vpop.xlane.xlu0 %468
    %470 = vadd.xlane.f32.xlu0 %v463
    %v471 = vpop.xlane.xlu0 %470
    %v472 = vmul.f32 %v465, %v451
    %v473 = vmul.f32 %v467, %v451
    %v474 = vmul.f32 %v469, %v451
    %v475 = vmul.f32 %v471, %v451
    %v476 = vadd.f32 %v472, 1e-05
    %v477 = vadd.f32 %v473, 1e-05
    %v478 = vadd.f32 %v474, 1e-05
    %v479 = vadd.f32 %v475, 1e-05
    %v480 = vrsqrt.pop %v476
    %v481 = vrsqrt.pop %v477
    %v482 = vrsqrt.pop %v478
    %v483 = vrsqrt.pop %v479
    %v484 = vmul.f32 %v456, %v480
    %v485 = vmul.f32 %v457, %v481
    %v486 = vmul.f32 %v458, %v482
    %v487 = vmul.f32 %v459, %v483
    %v488 = vld [vmem:[%s5] sm:$0x1]
    %v490 = vlaneseq
    %v491 = vshrl.u32 %v490, 7
    %v492 = vsub.s32 0, %v491
    %v493 = vrot.slane %v488, %v492
    %v495 = vmul.f32 %v484, %v493
    %v496 = vmul.f32 %v485, %v493
    %v497 = vmul.f32 %v486, %v493
    %v498 = vmul.f32 %v487, %v493
    %v499 = vld [vmem:[%s6] sm:$0x1]
    %v501 = vlaneseq
    %v502 = vshrl.u32 %v501, 7
    %v503 = vsub.s32 0, %v502
    %v504 = vrot.slane %v499, %v503
    %v506 = vadd.f32 %v495, %v504
    %v507 = vadd.f32 %v496, %v504
    %v508 = vadd.f32 %v497, %v504
    %v509 = vadd.f32 %v498, %v504
    %v510 = vpack.c.bf16 %v507, %v506
    %v511 = vpack.c.bf16 %v509, %v508
    %v514 = vunpack.c.l.b16 %v510
    %v515 = vunpack.c.h.b16 %v510
    %v516 = vunpack.c.l.b16 %v511
    %v517 = vunpack.c.h.b16 %v511
    %v518 = vpack.c.b16 %v514, %v514
    %v519 = vpack.c.b16 %v515, %v515
    %v520 = vpack.c.b16 %v516, %v516
    %v521 = vpack.c.b16 %v517, %v517
    %526 = vst [vmem:[%s7] sm:$0xf] %v518
    %527 = vst [vmem:[%s7 + $0x4] sm:$0xf] %v519
    %528 = vst [vmem:[%s7 + $0x8] sm:$0xf] %v520
    %529 = vst [vmem:[%s7 + $0xc] sm:$0xf] %v521
  $region37: #{transformer_forward.14} parent=0 // pred_fallthru
    _
  // Predicated region
  $region38: #{transformer_forward.14} parent=0 // pred_check
    _
  $region39: #{transformer_forward.14} parent=0 // pred_check_branch
    %531 = sbr.rel (0) target = $region41
  $region40: #{transformer_forward.14} parent=0 // pred_region
    _
  $region41: #{transformer_forward.14} parent=0 // pred_fallthru
    _
  // Predicated region
  $region42: #{transformer_forward.14} parent=0 // pred_check
    _
  $region43: #{transformer_forward.14} parent=0 // pred_check_branch
    %533 = sbr.rel (0) target = $region45
  $region44: #{transformer_forward.14} parent=0 // pred_region
    _
  $region45: #{transformer_forward.14} parent=0 // pred_fallthru
    _

// kernel: transformer_forward.19
$region0: #{transformer_forward.19}
  #allocation0 [shape = 'u32[]', space=smem, size = 0x4, offset = 0x4, fixed_abs, tag = 'smem constant byte address 0x4 - core index']
  #allocation1 [shape = 'u32[144,128]{1,0:T(1,128)}', space=vmem, size = 0x12000, scoped, tag = 'internal scratch']
  #allocation2 [shape = 'f32[32,32]{1,0:T(8,128)}', space=vmem, size = 0x4000, scoped, tag = 'scratch operand']
  %s0 = inlined_call_operand.vmem [shape: bf16[32,128], index: 0, kind: input, shape index: {}]
  %s1 = inlined_call_operand.vmem [shape: bf16[128,32], index: 1, kind: input, shape index: {}]
  %s2 = inlined_call_operand.vmem [shape: f32[1,32], index: 2, kind: input, shape index: {}]
  %s3 = inlined_call_operand.hbm [shape: f32[32,32], index: 3, kind: output, shape index: {}]
  %s4 = sld [smem:[#allocation0]]
  $region30: #{transformer_forward.19} parent=0
    _
  %s6 = ssub.s32 1, %s4
  %s7 = scalar_select 0, %s6, %s4
  $region1: #{transformer_forward.19} parent=0
    #allocation3 [shape = 'u8[16384]{0}', space=vmem, size = 0x4000, scoped, tag = 'output window, operand 0, single buffered']
    #allocation4 [shape = 's32[1]{0}', space=sflag, size = 0x4, scoped, tag = 'scoped memory for transformer_forward.19']
    %8 = vsyncpa [#allocation4], 0
    // Predicated region
    $region2: #{transformer_forward.19} parent=1 // pred_check
      _
    $region3: #{transformer_forward.19} parent=1 // pred_check_branch
      %10 = sbr.rel (0) target = $region5
    $region4: #{transformer_forward.19} parent=1 // pred_region
      _
    $region5: #{transformer_forward.19} parent=1 // pred_fallthru
      _
    // Predicated region
    $region6: #{transformer_forward.19} parent=1 // pred_check
      _
    $region7: #{transformer_forward.19} parent=1 // pred_check_branch
      %12 = sbr.rel (0) target = $region9
    $region8: #{transformer_forward.19} parent=1 // pred_region
      _
    $region9: #{transformer_forward.19} parent=1 // pred_fallthru
      _
    // Predicated region
    $region10: #{transformer_forward.19} parent=1 // pred_check
      _
    $region11: #{transformer_forward.19} parent=1 // pred_check_branch
      %14 = sbr.rel (0) target = $region13
    $region12: #{transformer_forward.19} parent=1 // pred_region
      _
    $region13: #{transformer_forward.19} parent=1 // pred_fallthru
      _
    %p16 = scmp.eq.s32.totalorder 0, 0
    // Predicated region
    $region14: #{transformer_forward.19} parent=1 // pred_check
      %p17 = pneg %p16
    $region15: #{transformer_forward.19} parent=1 // pred_check_branch
      %19 = sbr.rel (%p17) target = $region17
    $region16: #{transformer_forward.19} parent=1 // pred_region
      %vm20 = vcmask 261120
      %21 = vst.msk [vmem:[#allocation2] sm:$0xff] %vm20, 0.0
      %22 = vst.msk [vmem:[#allocation2 + $0x8] sm:$0xff] %vm20, 0.0
      %23 = vst.msk [vmem:[#allocation2 + $0x10] sm:$0xff] %vm20, 0.0
      %24 = vst.msk [vmem:[#allocation2 + $0x18] sm:$0xff] %vm20, 0.0
    $region17: #{transformer_forward.19} parent=1 // pred_fallthru
      _
    %v25 = vld [vmem:[#allocation2] sm:$0xff]
    %v26 = vld [vmem:[#allocation2 + $0x8] sm:$0xff]
    %v27 = vld [vmem:[#allocation2 + $0x10] sm:$0xff]
    %v28 = vld [vmem:[#allocation2 + $0x18] sm:$0xff]
    %v29 = vld [vmem:[%s0] sm:$0xf]
    %v30 = vld [vmem:[%s0 + $0x4] sm:$0xf]
    %v31 = vld [vmem:[%s0 + $0x8] sm:$0xf]
    %v32 = vld [vmem:[%s0 + $0xc] sm:$0xf]
    %v33 = vld [vmem:[%s1] sm:$0xf]
    %v34 = vld [vmem:[%s1 + $0x4] sm:$0xf]
    %v35 = vld [vmem:[%s1 + $0x8] sm:$0xf]
    %v36 = vld [vmem:[%s1 + $0xc] sm:$0xf]
    %v37 = vld [vmem:[%s1 + $0x10] sm:$0xf]
    %v38 = vld [vmem:[%s1 + $0x14] sm:$0xf]
    %v39 = vld [vmem:[%s1 + $0x18] sm:$0xf]
    %v40 = vld [vmem:[%s1 + $0x1c] sm:$0xf]
    %v41 = vld [vmem:[%s1 + $0x20] sm:$0xf]
    %v42 = vld [vmem:[%s1 + $0x24] sm:$0xf]
    %v43 = vld [vmem:[%s1 + $0x28] sm:$0xf]
    %v44 = vld [vmem:[%s1 + $0x2c] sm:$0xf]
    %v45 = vld [vmem:[%s1 + $0x30] sm:$0xf]
    %v46 = vld [vmem:[%s1 + $0x34] sm:$0xf]
    %v47 = vld [vmem:[%s1 + $0x38] sm:$0xf]
    %v48 = vld [vmem:[%s1 + $0x3c] sm:$0xf]
    %v53 = vunpack.c.l.b16 %v29
    %v54 = vunpack.c.l.b16 %v30
    %v55 = vunpack.c.l.b16 %v31
    %v56 = vunpack.c.l.b16 %v32
    %v57 = vpack.c.b16 %v54, %v53
    %v58 = vpack.c.b16 %v56, %v55
    %v77 = vunpack.c.l.b16 %v33
    %v78 = vunpack.c.l.b16 %v34
    %v79 = vunpack.c.l.b16 %v35
    %v80 = vunpack.c.l.b16 %v36
    %v81 = vunpack.c.l.b16 %v37
    %v82 = vunpack.c.l.b16 %v38
    %v83 = vunpack.c.l.b16 %v39
    %v84 = vunpack.c.l.b16 %v40
    %v85 = vunpack.c.l.b16 %v41
    %v86 = vunpack.c.l.b16 %v42
    %v87 = vunpack.c.l.b16 %v43
    %v88 = vunpack.c.l.b16 %v44
    %v89 = vunpack.c.l.b16 %v45
    %v90 = vunpack.c.l.b16 %v46
    %v91 = vunpack.c.l.b16 %v47
    %v92 = vunpack.c.l.b16 %v48
    %v93 = vpack.c.b16 %v78, %v77
    %v94 = vpack.c.b16 %v80, %v79
    %v95 = vpack.c.b16 %v82, %v81
    %v96 = vpack.c.b16 %v84, %v83
    %v97 = vpack.c.b16 %v86, %v85
    %v98 = vpack.c.b16 %v88, %v87
    %v99 = vpack.c.b16 %v90, %v89
    %v100 = vpack.c.b16 %v92, %v91
    %109 = vmatprep.subr.bf16.mxu0 0
    %110 = vmatpush1.bf16.msra.mxu0 %v93
    %111 = vmatprep.subr.bf16.mxu0 0
    %112 = vmatpush1.bf16.msra.mxu0 %v94
    %113 = vmatprep.subr.bf16.mxu0 0
    %114 = vmatpush1.bf16.msra.mxu0 %v95
    %115 = vmatprep.subr.bf16.mxu0 0
    %116 = vmatpush1.bf16.msra.mxu0 %v96
    %117 = vmatprep.subr.bf16.mxu0 0
    %118 = vmatpush1.bf16.msra.mxu0 %v97
    %119 = vmatprep.subr.bf16.mxu0 0
    %120 = vmatpush1.bf16.msra.mxu0 %v98
    %121 = vmatprep.subr.bf16.mxu0 0
    %122 = vmatpush1.bf16.msra.mxu0 %v99
    %123 = vmatprep.subr.bf16.mxu0 0
    %124 = vmatpush1.bf16.msra.mxu0 %v100
    %125 = vmatprep.subr.bf16.mxu0 0
    %126 = vmatpush1.bf16.msra.mxu0 0
    %127 = vmatprep.subr.bf16.mxu0 0
    %128 = vmatpush1.bf16.msra.mxu0 0
    %129 = vmatprep.subr.bf16.mxu0 0
    %130 = vmatpush1.bf16.msra.mxu0 0
    %131 = vmatprep.subr.bf16.mxu0 0
    %132 = vmatpush1.bf16.msra.mxu0 0
    %133 = vmatprep.subr.bf16.mxu0 0
    %134 = vmatpush1.bf16.msra.mxu0 0
    %135 = vmatprep.subr.bf16.mxu0 0
    %136 = vmatpush1.bf16.msra.mxu0 0
    %137 = vmatprep.subr.bf16.mxu0 0
    %138 = vmatpush1.bf16.msra.mxu0 0
    %139 = vmatprep.subr.bf16.mxu0 0
    %140 = vmatpush1.bf16.msra.mxu0 0
    %141 = vmatprep.mubr.bf16.mxu0 0
    %142 = vmatmul.mubr.bf16.gmra.mrb[0].mxu0 %v57
    %v143 = vpop.f32.mrb[0].mxu0
    %v144 = vadd.f32 0.0, %v143
    %v145 = vpop.f32.mrb[0].mxu0
    %v146 = vpop.f32.mrb[0].mxu0
    %v147 = vadd.f32 0.0, %v146
    %v148 = vpop.f32.mrb[0].mxu0
    %149 = vmatprep.mubr.bf16.mxu0 0
    %150 = vmatmul.mubr.bf16.gmra.mrb[0].mxu0 %v58
    %v151 = vpop.f32.mrb[0].mxu0
    %v152 = vadd.f32 0.0, %v151
    %v153 = vpop.f32.mrb[0].mxu0
    %v154 = vpop.f32.mrb[0].mxu0
    %v155 = vadd.f32 0.0, %v154
    %v156 = vpop.f32.mrb[0].mxu0
    %157 = vdwg.mxu0
    %v158 = vadd.f32 %v25, %v144
    %v159 = vadd.f32 %v26, %v147
    %v160 = vadd.f32 %v27, %v152
    %v161 = vadd.f32 %v28, %v155
    %vm162 = vcmask 261120
    %163 = vst.msk [vmem:[#allocation2] sm:$0xff] %vm162, %v158
    %164 = vst.msk [vmem:[#allocation2 + $0x8] sm:$0xff] %vm162, %v159
    %165 = vst.msk [vmem:[#allocation2 + $0x10] sm:$0xff] %vm162, %v160
    %166 = vst.msk [vmem:[#allocation2 + $0x18] sm:$0xff] %vm162, %v161
    // Predicated region
    $region18: #{transformer_forward.19} parent=1 // pred_check
      %p167 = pneg %p16
    $region19: #{transformer_forward.19} parent=1 // pred_check_branch
      %169 = sbr.rel (%p167) target = $region21
    $region20: #{transformer_forward.19} parent=1 // pred_region
      %v170 = vld [vmem:[#allocation2] sm:$0xff]
      %v171 = vld [vmem:[#allocation2 + $0x8] sm:$0xff]
      %v172 = vld [vmem:[#allocation2 + $0x10] sm:$0xff]
      %v173 = vld [vmem:[#allocation2 + $0x18] sm:$0xff]
      %v174 = vld [vmem:[%s2] sm:$0x1]
      %v176 = vlaneseq
      %v177 = vshrl.u32 %v176, 7
      %v178 = vsub.s32 0, %v177
      %v179 = vrot.slane %v174, %v178
      %v181 = vadd.f32 %v170, %v179
      %v182 = vadd.f32 %v171, %v179
      %v183 = vadd.f32 %v172, %v179
      %v184 = vadd.f32 %v173, %v179
      %185 = vst.msk [vmem:[#allocation3] sm:$0xff] %vm162, %v181
      %186 = vst.msk [vmem:[#allocation3 + $0x8] sm:$0xff] %vm162, %v182
      %187 = vst.msk [vmem:[#allocation3 + $0x10] sm:$0xff] %vm162, %v183
      %188 = vst.msk [vmem:[#allocation3 + $0x18] sm:$0xff] %vm162, %v184
    $region21: #{transformer_forward.19} parent=1 // pred_fallthru
      _
    // Predicated region
    $region22: #{transformer_forward.19} parent=1 // pred_check
      _
    $region23: #{transformer_forward.19} parent=1 // pred_check_branch
      %190 = sbr.rel (0) target = $region25
    $region24: #{transformer_forward.19} parent=1 // pred_region
      %s192 = ssub.s32 512, 512
      %193 = vsyncadd [#allocation4], %s192
      %s194 = sshll.u32 [#allocation3], 4
      %s195 = int_to_ptr.vmem [resolvable:$true] %s194
      %200 = dma.vmem_to_hbm [thread:$0]  %s195, 512, %s3, [#allocation4], 128, 128, 8
    $region25: #{transformer_forward.19} parent=1 // pred_fallthru
      _
    // Predicated region
    $region26: #{transformer_forward.19} parent=1 // pred_check
      _
    $region27: #{transformer_forward.19} parent=1 // pred_check_branch
      %202 = sbr.rel (0) target = $region29
    $region28: #{transformer_forward.19} parent=1 // pred_region
      %203 = dma.done [#allocation4], 512
    $region29: #{transformer_forward.19} parent=1 // pred_fallthru
      _
    %204 = vsyncpa [#allocation4], 1

// kernel: transformer_forward.12
$region0: #{transformer_forward.12}
  #allocation0 [shape = 'u32[]', space=smem, size = 0x4, offset = 0x4, fixed_abs, tag = 'smem constant byte address 0x4 - core index']
  #allocation1 [shape = 'u32[144,128]{1,0:T(1,128)}', space=vmem, size = 0x12000, scoped, tag = 'internal scratch']
  #allocation2 [shape = 'f32[4,16,1]{2,1,0:T(8,128)}', space=vmem, size = 0x8000, scoped, tag = 'scratch operand']
  #allocation3 [shape = 'f32[4,16,1]{2,1,0:T(8,128)}', space=vmem, size = 0x8000, scoped, tag = 'scratch operand']
  #allocation4 [shape = 'f32[16,128]{1,0:T(8,128)}', space=vmem, size = 0x2000, scoped, tag = 'scratch operand']
  %s0 = inlined_call_operand.vmem [shape: bf16[2,16,384], index: 0, kind: input, shape index: {}, may-alias: {0,1,2}]
  %s1 = inlined_call_operand.vmem [shape: bf16[2,16,384], index: 1, kind: input, shape index: {}, may-alias: {0,1,2}]
  %s2 = inlined_call_operand.vmem [shape: bf16[2,16,384], index: 2, kind: input, shape index: {}, may-alias: {0,1,2}]
  %s3 = inlined_call_operand.vmem [shape: bf16[2,16,128], index: 3, kind: output, shape index: {}]
  %s4 = sld [smem:[#allocation0]]
  $region176: #{transformer_forward.12} parent=0
    _
  %s6 = ssub.s32 1, %s4
  %s7 = scalar_select 0, %s6, %s4
  $region1: #{transformer_forward.12} parent=0
    #allocation5 [shape = 'u8[8192]{0}', space=vmem, size = 0x2000, scoped, tag = 'input window, operand 0']
    #allocation6 [shape = 'u8[8192]{0}', space=vmem, size = 0x2000, scoped, tag = 'input window, operand 1']
    #allocation7 [shape = 'u8[8192]{0}', space=vmem, size = 0x2000, scoped, tag = 'input window, operand 2']
    loop: start=0, step=1, limit=4
    $region2: #{transformer_forward.12} parent=1 // loop_pre_header
      _
    $region3: #{transformer_forward.12} parent=1 // loop_header
      %s9 = sphi 0, %s13
      %p10 = scmp.ge.s32.totalorder %s9, 4
      %s16 = sphi 0, %s35
      %s17 = sphi 0, %s31
      %s18 = sphi 0, %s27
      %s19 = sphi 0, %s16
      %s20 = sphi 0, %s17
      %s21 = sphi 0, %s18
      %s22 = sphi 0, %s19
      %s23 = sphi 0, %s20
      %s24 = sphi 0, %s21
      %s40 = sphi 0, %s42
      %s43 = sphi 0, %s40
      %s44 = sphi 0, %s43
      %s60 = sphi 0, %s44
      %s68 = sphi 0, %s70
      %s71 = sphi 0, %s68
      %s72 = sphi 0, %s71
      %s88 = sphi 0, %s72
      %s96 = sphi 0, %s98
      %s99 = sphi 0, %s96
      %s100 = sphi 0, %s99
      %s116 = sphi 0, %s100
      %s124 = sphi 0, %s126
      %s127 = sphi 0, %s124
      %s128 = sphi 0, %s127
      %s144 = sphi 0, %s128
    $region4: #{transformer_forward.12} parent=1 // loop_header_branch
      %12 = sbr.rel (%p10) target = $region8
    $region5: #{transformer_forward.12} parent=1 // loop_body
      %s14 = ssub.s32 %s9, 1
      %s15 = ssub.s32 %s9, 2
      %s25 = sadd.s32 1, %s18
      %p26 = scmp.ge.s32.totalorder %s25, 1
      %s27 = scalar_select %p26, 0, %s25
      %s28 = sadd.s32 1, %s17
      %s29 = scalar_select %p26, %s28, %s17
      %p30 = scmp.ge.s32.totalorder %s29, 1
      %s31 = scalar_select %p30, 0, %s29
      %s32 = sadd.s32 1, %s16
      %s33 = scalar_select %p30, %s32, %s16
      %p34 = scmp.ge.s32.totalorder %s33, 2
      %s35 = scalar_select %p34, 0, %s33
      %s36 = ssub.s32 %s16, %s35
      %s37 = ssub.s32 %s17, %s31
      %s38 = sor.u32 %s36, %s37
      %p39 = scmp.eq.s32.totalorder %s38, 0
      %s41 = sadd.s32 %s40, 1
      %s42 = scalar_select %p39, %s40, %s41
      %p45 = pneg %p39
      %p46 = scmp.eq.s32.totalorder %s9, 1
      %p47 = por %p45, %p46
      %p48 = scmp.ne.s32.totalorder %s40, %s43
      %p49 = scmp.eq.s32.totalorder %s9, 0
      %p50 = por %p48, %p49
      %p51 = scmp.ne.s32.totalorder %s40, %s43
      %p52 = scmp.eq.s32.totalorder %s14, 1
      %p53 = por %p51, %p52
      %p54 = scmp.ne.s32.totalorder %s43, %s44
      %p55 = scmp.eq.s32.totalorder %s14, 0
      %p56 = por %p54, %p55
      %p57 = scmp.ne.s32.totalorder %s43, %s44
      %p58 = scmp.eq.s32.totalorder %s15, 1
      %p59 = por %p57, %p58
      %p61 = scmp.ne.s32.totalorder %s44, %s60
      %p62 = scmp.eq.s32.totalorder %s15, 0
      %p63 = por %p61, %p62
      %s64 = ssub.s32 %s16, %s35
      %s65 = ssub.s32 %s18, %s27
      %s66 = sor.u32 %s64, %s65
      %p67 = scmp.eq.s32.totalorder %s66, 0
      %s69 = sadd.s32 %s68, 1
      %s70 = scalar_select %p67, %s68, %s69
      %p73 = pneg %p67
      %p74 = scmp.eq.s32.totalorder %s9, 1
      %p75 = por %p73, %p74
      %p76 = scmp.ne.s32.totalorder %s68, %s71
      %p77 = scmp.eq.s32.totalorder %s9, 0
      %p78 = por %p76, %p77
      %p79 = scmp.ne.s32.totalorder %s68, %s71
      %p80 = scmp.eq.s32.totalorder %s14, 1
      %p81 = por %p79, %p80
      %p82 = scmp.ne.s32.totalorder %s71, %s72
      %p83 = scmp.eq.s32.totalorder %s14, 0
      %p84 = por %p82, %p83
      %p85 = scmp.ne.s32.totalorder %s71, %s72
      %p86 = scmp.eq.s32.totalorder %s15, 1
      %p87 = por %p85, %p86
      %p89 = scmp.ne.s32.totalorder %s72, %s88
      %p90 = scmp.eq.s32.totalorder %s15, 0
      %p91 = por %p89, %p90
      %s92 = ssub.s32 %s16, %s35
      %s93 = ssub.s32 %s18, %s27
      %s94 = sor.u32 %s92, %s93
      %p95 = scmp.eq.s32.totalorder %s94, 0
      %s97 = sadd.s32 %s96, 1
      %s98 = scalar_select %p95, %s96, %s97
      %p101 = pneg %p95
      %p102 = scmp.eq.s32.totalorder %s9, 1
      %p103 = por %p101, %p102
      %p104 = scmp.ne.s32.totalorder %s96, %s99
      %p105 = scmp.eq.s32.totalorder %s9, 0
      %p106 = por %p104, %p105
      %p107 = scmp.ne.s32.totalorder %s96, %s99
      %p108 = scmp.eq.s32.totalorder %s14, 1
      %p109 = por %p107, %p108
      %p110 = scmp.ne.s32.totalorder %s99, %s100
      %p111 = scmp.eq.s32.totalorder %s14, 0
      %p112 = por %p110, %p111
      %p113 = scmp.ne.s32.totalorder %s99, %s100
      %p114 = scmp.eq.s32.totalorder %s15, 1
      %p115 = por %p113, %p114
      %p117 = scmp.ne.s32.totalorder %s100, %s116
      %p118 = scmp.eq.s32.totalorder %s15, 0
      %p119 = por %p117, %p118
      %s120 = ssub.s32 %s16, %s35
      %s121 = ssub.s32 %s17, %s31
      %s122 = sor.u32 %s120, %s121
      %p123 = scmp.eq.s32.totalorder %s122, 0
      %s125 = sadd.s32 %s124, 1
      %s126 = scalar_select %p123, %s124, %s125
      %p129 = pneg %p123
      %p130 = scmp.eq.s32.totalorder %s9, 1
      %p131 = por %p129, %p130
      %p132 = scmp.ne.s32.totalorder %s124, %s127
      %p133 = scmp.eq.s32.totalorder %s9, 0
      %p134 = por %p132, %p133
      %p135 = scmp.ne.s32.totalorder %s124, %s127
      %p136 = scmp.eq.s32.totalorder %s14, 1
      %p137 = por %p135, %p136
      %p138 = scmp.ne.s32.totalorder %s127, %s128
      %p139 = scmp.eq.s32.totalorder %s14, 0
      %p140 = por %p138, %p139
      %p141 = scmp.ne.s32.totalorder %s127, %s128
      %p142 = scmp.eq.s32.totalorder %s15, 1
      %p143 = por %p141, %p142
      %p145 = scmp.ne.s32.totalorder %s128, %s144
      %p146 = scmp.eq.s32.totalorder %s15, 0
      %p147 = por %p145, %p146
      %p148 = scmp.le.s32.totalorder 1, %s9
      %p149 = scmp.lt.s32.totalorder %s9, 3
      %p150 = pnand %p148, %p149
      %p151 = pneg %p150
      // Predicated region
      $region9: #{transformer_forward.12} parent=5 // pred_check
        _
      $region10: #{transformer_forward.12} parent=5 // pred_check_branch
        %153 = sbr.rel (%p150) target = $region12
      $region11: #{transformer_forward.12} parent=5 // pred_region
        %s154 = ssub.s32 %s9, 1
      $region12: #{transformer_forward.12} parent=5 // pred_fallthru
        _
      %p155 = scmp.lt.s32.totalorder %s9, 2
      // Predicated region
      $region13: #{transformer_forward.12} parent=5 // pred_check
        %p156 = pneg %p155
      $region14: #{transformer_forward.12} parent=5 // pred_check_branch
        %158 = sbr.rel (%p156) target = $region16
      $region15: #{transformer_forward.12} parent=5 // pred_region
        // Predicated region
        $region17: #{transformer_forward.12} parent=15 // pred_check
          %p159 = pneg %p50
        $region18: #{transformer_forward.12} parent=15 // pred_check_branch
          %161 = sbr.rel (%p159) target = $region20
        $region19: #{transformer_forward.12} parent=15 // pred_region
          %s162 = sand.u32 %s40, 1
          %s163 = sand.u32 %s40, 1
          %s164 = smul.addr %s163, 8
          %s165 = scalar_lea.vmem [#allocation5], %s164
          %s166 = smul.u32 2, %s17
          %s167 = smul.addr %s166, 3
          %s168 = smul.addr %s16, 6
          %s169 = sadd.s32 %s167, %s168
          %s170 = smul.addr %s169, 4
          %s171 = scalar_lea.vmem %s0, %s170
          // Predicated region
          $region21: #{transformer_forward.12} parent=19 // pred_check
            _
          $region22: #{transformer_forward.12} parent=19 // pred_check_branch
            %173 = sbr.rel (0) target = $region24
          $region23: #{transformer_forward.12} parent=19 // pred_region
            // Predicated region
            $region25: #{transformer_forward.12} parent=23 // pred_check
              _
            $region26: #{transformer_forward.12} parent=23 // pred_check_branch
              %175 = sbr.rel target = $region28
            $region27: #{transformer_forward.12} parent=23 // pred_region
              // Predicated region
              $region40: #{transformer_forward.12} parent=27 // pred_check
                _
              $region41: #{transformer_forward.12} parent=27 // pred_check_branch
                %192 = sbr.rel (0) target = $region43
              $region42: #{transformer_forward.12} parent=27 // pred_region
                loop: start=0, step=1, limit=1
                $region44: #{transformer_forward.12} parent=42 // loop_pre_header
                  _
                $region45: #{transformer_forward.12} parent=42 // loop_header
                  %s194 = sphi 0, %s198
                  %p195 = scmp.ge.s32.totalorder %s194, 1
                  %s199 = sphi %s171, %s171
                  %s200 = sphi %s165, %s165
                $region46: #{transformer_forward.12} parent=42 // loop_header_branch
                  %197 = sbr.rel (%p195) target = $region50
                $region47: #{transformer_forward.12} parent=42 // loop_body
                  _
                $region48: #{transformer_forward.12} parent=42 // loop_footer
                  %s198 = sadd.s32 1, %s194
                $region49: #{transformer_forward.12} parent=42 // loop_footer_branch
                  %193 = sbr.rel target = $region45
                $region50: #{transformer_forward.12} parent=42 // loop_exit
                  _
                loop: start=0, step=1, limit=1
                $region51: #{transformer_forward.12} parent=42 // loop_pre_header
                  _
                $region52: #{transformer_forward.12} parent=42 // loop_header
                  %s203 = sphi 0, %s207
                  %p204 = scmp.ge.s32.totalorder %s203, 1
                  %s208 = sphi %s171, %s171
                  %s209 = sphi %s165, %s165
                $region53: #{transformer_forward.12} parent=42 // loop_header_branch
                  %206 = sbr.rel (%p204) target = $region57
                $region54: #{transformer_forward.12} parent=42 // loop_body
                  %v210 = vld [vmem:[%s208] sm:$0xf]
                  %211 = vst [vmem:[%s209] sm:$0xf] %v210
                  %v212 = vld [vmem:[%s208 + $0xc] sm:$0xf]
                  %213 = vst [vmem:[%s209 + $0x4] sm:$0xf] %v212
                $region55: #{transformer_forward.12} parent=42 // loop_footer
                  %s207 = sadd.s32 1, %s203
                $region56: #{transformer_forward.12} parent=42 // loop_footer_branch
                  %202 = sbr.rel target = $region52
                $region57: #{transformer_forward.12} parent=42 // loop_exit
                  _
              $region43: #{transformer_forward.12} parent=27 // pred_fallthru
                _
            $region28: #{transformer_forward.12} parent=23 // pred_fallthru
              _
            // Predicated region
            $region29: #{transformer_forward.12} parent=23 // pred_check
              _
            $region30: #{transformer_forward.12} parent=23 // pred_check_branch
              %177 = sbr.rel (0) target = $region32
            $region31: #{transformer_forward.12} parent=23 // pred_region
              loop: start=0, step=1, limit=1
              $region33: #{transformer_forward.12} parent=31 // loop_pre_header
                _
              $region34: #{transformer_forward.12} parent=31 // loop_header
                %s180 = sphi 0, %s184
                %p181 = scmp.ge.s32.totalorder %s180, 1
                %s185 = sphi %s171, %s171
                %s186 = sphi %s165, %s165
              $region35: #{transformer_forward.12} parent=31 // loop_header_branch
                %183 = sbr.rel (%p181) target = $region39
              $region36: #{transformer_forward.12} parent=31 // loop_body
                %v187 = vld [vmem:[%s185] sm:$0xf]
                %188 = vst [vmem:[%s186] sm:$0xf] %v187
                %v189 = vld [vmem:[%s185 + $0xc] sm:$0xf]
                %190 = vst [vmem:[%s186 + $0x4] sm:$0xf] %v189
              $region37: #{transformer_forward.12} parent=31 // loop_footer
                %s184 = sadd.s32 1, %s180
              $region38: #{transformer_forward.12} parent=31 // loop_footer_branch
                %179 = sbr.rel target = $region34
              $region39: #{transformer_forward.12} parent=31 // loop_exit
                _
            $region32: #{transformer_forward.12} parent=23 // pred_fallthru
              _
          $region24: #{transformer_forward.12} parent=19 // pred_fallthru
            _
          %214 = vnop
        $region20: #{transformer_forward.12} parent=15 // pred_fallthru
          _
        // Predicated region
        $region58: #{transformer_forward.12} parent=15 // pred_check
          %p215 = pneg %p78
        $region59: #{transformer_forward.12} parent=15 // pred_check_branch
          %217 = sbr.rel (%p215) target = $region61
        $region60: #{transformer_forward.12} parent=15 // pred_region
          %s218 = sand.u32 %s68, 1
          %s219 = sand.u32 %s68, 1
          %s220 = smul.addr %s219, 8
          %s221 = scalar_lea.vmem [#allocation6], %s220
          %s222 = smul.u32 2, %s18
          %s223 = smul.addr %s222, 3
          %s224 = sadd.s32 1, %s223
          %s225 = smul.addr %s16, 6
          %s226 = sadd.s32 %s224, %s225
          %s227 = smul.addr %s226, 4
          %s228 = scalar_lea.vmem %s1, %s227
          // Predicated region
          $region62: #{transformer_forward.12} parent=60 // pred_check
            _
          $region63: #{transformer_forward.12} parent=60 // pred_check_branch
            %230 = sbr.rel (0) target = $region65
          $region64: #{transformer_forward.12} parent=60 // pred_region
            // Predicated region
            $region66: #{transformer_forward.12} parent=64 // pred_check
              _
            $region67: #{transformer_forward.12} parent=64 // pred_check_branch
              %232 = sbr.rel target = $region69
            $region68: #{transformer_forward.12} parent=64 // pred_region
              // Predicated region
              $region81: #{transformer_forward.12} parent=68 // pred_check
                _
              $region82: #{transformer_forward.12} parent=68 // pred_check_branch
                %249 = sbr.rel (0) target = $region84
              $region83: #{transformer_forward.12} parent=68 // pred_region
                loop: start=0, step=1, limit=1
                $region85: #{transformer_forward.12} parent=83 // loop_pre_header
                  _
                $region86: #{transformer_forward.12} parent=83 // loop_header
                  %s251 = sphi 0, %s255
                  %p252 = scmp.ge.s32.totalorder %s251, 1
                  %s256 = sphi %s228, %s228
                  %s257 = sphi %s221, %s221
                $region87: #{transformer_forward.12} parent=83 // loop_header_branch
                  %254 = sbr.rel (%p252) target = $region91
                $region88: #{transformer_forward.12} parent=83 // loop_body
                  _
                $region89: #{transformer_forward.12} parent=83 // loop_footer
                  %s255 = sadd.s32 1, %s251
                $region90: #{transformer_forward.12} parent=83 // loop_footer_branch
                  %250 = sbr.rel target = $region86
                $region91: #{transformer_forward.12} parent=83 // loop_exit
                  _
                loop: start=0, step=1, limit=1
                $region92: #{transformer_forward.12} parent=83 // loop_pre_header
                  _
                $region93: #{transformer_forward.12} parent=83 // loop_header
                  %s260 = sphi 0, %s264
                  %p261 = scmp.ge.s32.totalorder %s260, 1
                  %s265 = sphi %s228, %s228
                  %s266 = sphi %s221, %s221
                $region94: #{transformer_forward.12} parent=83 // loop_header_branch
                  %263 = sbr.rel (%p261) target = $region98
                $region95: #{transformer_forward.12} parent=83 // loop_body
                  %v267 = vld [vmem:[%s265] sm:$0xf]
                  %268 = vst [vmem:[%s266] sm:$0xf] %v267
                  %v269 = vld [vmem:[%s265 + $0xc] sm:$0xf]
                  %270 = vst [vmem:[%s266 + $0x4] sm:$0xf] %v269
                $region96: #{transformer_forward.12} parent=83 // loop_footer
                  %s264 = sadd.s32 1, %s260
                $region97: #{transformer_forward.12} parent=83 // loop_footer_branch
                  %259 = sbr.rel target = $region93
                $region98: #{transformer_forward.12} parent=83 // loop_exit
                  _
              $region84: #{transformer_forward.12} parent=68 // pred_fallthru
                _
            $region69: #{transformer_forward.12} parent=64 // pred_fallthru
              _
            // Predicated region
            $region70: #{transformer_forward.12} parent=64 // pred_check
              _
            $region71: #{transformer_forward.12} parent=64 // pred_check_branch
              %234 = sbr.rel (0) target = $region73
            $region72: #{transformer_forward.12} parent=64 // pred_region
              loop: start=0, step=1, limit=1
              $region74: #{transformer_forward.12} parent=72 // loop_pre_header
                _
              $region75: #{transformer_forward.12} parent=72 // loop_header
                %s237 = sphi 0, %s241
                %p238 = scmp.ge.s32.totalorder %s237, 1
                %s242 = sphi %s228, %s228
                %s243 = sphi %s221, %s221
              $region76: #{transformer_forward.12} parent=72 // loop_header_branch
                %240 = sbr.rel (%p238) target = $region80
              $region77: #{transformer_forward.12} parent=72 // loop_body
                %v244 = vld [vmem:[%s242] sm:$0xf]
                %245 = vst [vmem:[%s243] sm:$0xf] %v244
                %v246 = vld [vmem:[%s242 + $0xc] sm:$0xf]
                %247 = vst [vmem:[%s243 + $0x4] sm:$0xf] %v246
              $region78: #{transformer_forward.12} parent=72 // loop_footer
                %s241 = sadd.s32 1, %s237
              $region79: #{transformer_forward.12} parent=72 // loop_footer_branch
                %236 = sbr.rel target = $region75
              $region80: #{transformer_forward.12} parent=72 // loop_exit
                _
            $region73: #{transformer_forward.12} parent=64 // pred_fallthru
              _
          $region65: #{transformer_forward.12} parent=60 // pred_fallthru
            _
          %271 = vnop
        $region61: #{transformer_forward.12} parent=15 // pred_fallthru
          _
        // Predicated region
        $region99: #{transformer_forward.12} parent=15 // pred_check
          %p272 = pneg %p106
        $region100: #{transformer_forward.12} parent=15 // pred_check_branch
          %274 = sbr.rel (%p272) target = $region102
        $region101: #{transformer_forward.12} parent=15 // pred_region
          %s275 = sand.u32 %s96, 1
          %s276 = sand.u32 %s96, 1
          %s277 = smul.addr %s276, 8
          %s278 = scalar_lea.vmem [#allocation7], %s277
          %s279 = smul.u32 2, %s18
          %s280 = smul.addr %s279, 3
          %s281 = sadd.s32 2, %s280
          %s282 = smul.addr %s16, 6
          %s283 = sadd.s32 %s281, %s282
          %s284 = smul.addr %s283, 4
          %s285 = scalar_lea.vmem %s2, %s284
          // Predicated region
          $region103: #{transformer_forward.12} parent=101 // pred_check
            _
          $region104: #{transformer_forward.12} parent=101 // pred_check_branch
            %287 = sbr.rel (0) target = $region106
          $region105: #{transformer_forward.12} parent=101 // pred_region
            // Predicated region
            $region107: #{transformer_forward.12} parent=105 // pred_check
              _
            $region108: #{transformer_forward.12} parent=105 // pred_check_branch
              %289 = sbr.rel target = $region110
            $region109: #{transformer_forward.12} parent=105 // pred_region
              // Predicated region
              $region122: #{transformer_forward.12} parent=109 // pred_check
                _
              $region123: #{transformer_forward.12} parent=109 // pred_check_branch
                %306 = sbr.rel (0) target = $region125
              $region124: #{transformer_forward.12} parent=109 // pred_region
                loop: start=0, step=1, limit=1
                $region126: #{transformer_forward.12} parent=124 // loop_pre_header
                  _
                $region127: #{transformer_forward.12} parent=124 // loop_header
                  %s308 = sphi 0, %s312
                  %p309 = scmp.ge.s32.totalorder %s308, 1
                  %s313 = sphi %s285, %s285
                  %s314 = sphi %s278, %s278
                $region128: #{transformer_forward.12} parent=124 // loop_header_branch
                  %311 = sbr.rel (%p309) target = $region132
                $region129: #{transformer_forward.12} parent=124 // loop_body
                  _
                $region130: #{transformer_forward.12} parent=124 // loop_footer
                  %s312 = sadd.s32 1, %s308
                $region131: #{transformer_forward.12} parent=124 // loop_footer_branch
                  %307 = sbr.rel target = $region127
                $region132: #{transformer_forward.12} parent=124 // loop_exit
                  _
                loop: start=0, step=1, limit=1
                $region133: #{transformer_forward.12} parent=124 // loop_pre_header
                  _
                $region134: #{transformer_forward.12} parent=124 // loop_header
                  %s317 = sphi 0, %s321
                  %p318 = scmp.ge.s32.totalorder %s317, 1
                  %s322 = sphi %s285, %s285
                  %s323 = sphi %s278, %s278
                $region135: #{transformer_forward.12} parent=124 // loop_header_branch
                  %320 = sbr.rel (%p318) target = $region139
                $region136: #{transformer_forward.12} parent=124 // loop_body
                  %v324 = vld [vmem:[%s322] sm:$0xf]
                  %325 = vst [vmem:[%s323] sm:$0xf] %v324
                  %v326 = vld [vmem:[%s322 + $0xc] sm:$0xf]
                  %327 = vst [vmem:[%s323 + $0x4] sm:$0xf] %v326
                $region137: #{transformer_forward.12} parent=124 // loop_footer
                  %s321 = sadd.s32 1, %s317
                $region138: #{transformer_forward.12} parent=124 // loop_footer_branch
                  %316 = sbr.rel target = $region134
                $region139: #{transformer_forward.12} parent=124 // loop_exit
                  _
              $region125: #{transformer_forward.12} parent=109 // pred_fallthru
                _
            $region110: #{transformer_forward.12} parent=105 // pred_fallthru
              _
            // Predicated region
            $region111: #{transformer_forward.12} parent=105 // pred_check
              _
            $region112: #{transformer_forward.12} parent=105 // pred_check_branch
              %291 = sbr.rel (0) target = $region114
            $region113: #{transformer_forward.12} parent=105 // pred_region
              loop: start=0, step=1, limit=1
              $region115: #{transformer_forward.12} parent=113 // loop_pre_header
                _
              $region116: #{transformer_forward.12} parent=113 // loop_header
                %s294 = sphi 0, %s298
                %p295 = scmp.ge.s32.totalorder %s294, 1
                %s299 = sphi %s285, %s285
                %s300 = sphi %s278, %s278
              $region117: #{transformer_forward.12} parent=113 // loop_header_branch
                %297 = sbr.rel (%p295) target = $region121
              $region118: #{transformer_forward.12} parent=113 // loop_body
                %v301 = vld [vmem:[%s299] sm:$0xf]
                %302 = vst [vmem:[%s300] sm:$0xf] %v301
                %v303 = vld [vmem:[%s299 + $0xc] sm:$0xf]
                %304 = vst [vmem:[%s300 + $0x4] sm:$0xf] %v303
              $region119: #{transformer_forward.12} parent=113 // loop_footer
                %s298 = sadd.s32 1, %s294
              $region120: #{transformer_forward.12} parent=113 // loop_footer_branch
                %293 = sbr.rel target = $region116
              $region121: #{transformer_forward.12} parent=113 // loop_exit
                _
            $region114: #{transformer_forward.12} parent=105 // pred_fallthru
              _
          $region106: #{transformer_forward.12} parent=101 // pred_fallthru
            _
          %328 = vnop
        $region102: #{transformer_forward.12} parent=15 // pred_fallthru
          _
      $region16: #{transformer_forward.12} parent=5 // pred_fallthru
        _
      %p329 = scmp.le.s32.totalorder 1, %s9
      %p330 = scmp.lt.s32.totalorder %s9, 3
      %p331 = pnand %p329, %p330
      %p332 = pneg %p331
      // Predicated region
      $region140: #{transformer_forward.12} parent=5 // pred_check
        _
      $region141: #{transformer_forward.12} parent=5 // pred_check_branch
        %334 = sbr.rel (%p331) target = $region143
      $region142: #{transformer_forward.12} parent=5 // pred_region
        %s335 = ssub.s32 %s9, 1
        %s336 = sand.u32 %s43, 1
        %s337 = sand.u32 %s43, 1
        %s338 = smul.addr %s337, 8
        %s339 = scalar_lea.vmem [#allocation5], %s338
        // Predicated region
        $region144: #{transformer_forward.12} parent=142 // pred_check
          %p340 = pneg %p56
        $region145: #{transformer_forward.12} parent=142 // pred_check_branch
          %342 = sbr.rel (%p340) target = $region147
        $region146: #{transformer_forward.12} parent=142 // pred_region
          _
        $region147: #{transformer_forward.12} parent=142 // pred_fallthru
          _
        %s343 = sand.u32 %s71, 1
        %s344 = sand.u32 %s71, 1
        %s345 = smul.addr %s344, 8
        %s346 = scalar_lea.vmem [#allocation6], %s345
        // Predicated region
        $region148: #{transformer_forward.12} parent=142 // pred_check
          %p347 = pneg %p84
        $region149: #{transformer_forward.12} parent=142 // pred_check_branch
          %349 = sbr.rel (%p347) target = $region151
        $region150: #{transformer_forward.12} parent=142 // pred_region
          _
        $region151: #{transformer_forward.12} parent=142 // pred_fallthru
          _
        %s350 = sand.u32 %s99, 1
        %s351 = sand.u32 %s99, 1
        %s352 = smul.addr %s351, 8
        %s353 = scalar_lea.vmem [#allocation7], %s352
        // Predicated region
        $region152: #{transformer_forward.12} parent=142 // pred_check
          %p354 = pneg %p112
        $region153: #{transformer_forward.12} parent=142 // pred_check_branch
          %356 = sbr.rel (%p354) target = $region155
        $region154: #{transformer_forward.12} parent=142 // pred_region
          _
        $region155: #{transformer_forward.12} parent=142 // pred_fallthru
          _
        %s357 = sand.u32 %s43, 1
        %s358 = sand.u32 %s43, 1
        %s359 = smul.addr %s358, 8
        %s360 = scalar_lea.vmem [#allocation5], %s359
        %p361 = pneg %p56
        %p362 = pneg %p53
        %s363 = sand.u32 %s71, 1
        %s364 = sand.u32 %s71, 1
        %s365 = smul.addr %s364, 8
        %s366 = scalar_lea.vmem [#allocation6], %s365
        %p367 = pneg %p84
        %p368 = pneg %p81
        %s369 = sand.u32 %s99, 1
        %s370 = sand.u32 %s99, 1
        %s371 = smul.addr %s370, 8
        %s372 = scalar_lea.vmem [#allocation7], %s371
        %p373 = pneg %p112
        %p374 = pneg %p109
        %p375 = pneg %p140
        %p376 = pneg %p137
        %s377 = smul.u32 2, %s20
        %p378 = scmp.lt.s32.totalorder %s19, 1
        %s379 = scalar_select %p378, %s19, 1
        %p380 = scmp.lt.s32.totalorder %s377, 1
        %s381 = scalar_select %p380, %s377, 1
        %s382 = smul.addr %s379, 2
        %s383 = sadd.s32 %s381, %s382
        %s384 = smul.addr %s383, 4
        %s385 = scalar_lea.vmem %s3, %s384
        %s386 = smul.u32 2, %s20
        %s387 = smul.u32 2, %s21
        %s388 = smul.u32 2, %s21
        %s389 = smul.u32 2, %s20
        %p390 = scmp.lt.s32.totalorder %s19, 1
        %s391 = scalar_select %p390, %s19, 1
        %p392 = scmp.lt.s32.totalorder %s389, 1
        %s393 = scalar_select %p392, %s389, 1
        %s394 = smul.addr %s391, 2
        %s395 = sadd.s32 %s393, %s394
        %s396 = smul.addr %s395, 4
        %s397 = scalar_lea.vmem %s3, %s396
        %s398 = smul.u32 2, %s20
        %p400 = scmp.eq.s32.totalorder %s21, 0
        // Predicated region
        $region156: #{transformer_forward.12} parent=142 // pred_check
          %p401 = pneg %p400
        $region157: #{transformer_forward.12} parent=142 // pred_check_branch
          %403 = sbr.rel (%p401) target = $region159
        $region158: #{transformer_forward.12} parent=142 // pred_region
          %vm404 = vcmask 7168
          %405 = vst.msk [vmem:[#allocation2] sm:$0xff] %vm404, -inf
          %406 = vst.msk [vmem:[#allocation2 + $0x8] sm:$0xff] %vm404, -inf
          %407 = vst.msk [vmem:[#allocation2 + $0x10] sm:$0xff] %vm404, -inf
          %408 = vst.msk [vmem:[#allocation2 + $0x18] sm:$0xff] %vm404, -inf
          %409 = vst.msk [vmem:[#allocation2 + $0x20] sm:$0xff] %vm404, -inf
          %410 = vst.msk [vmem:[#allocation2 + $0x28] sm:$0xff] %vm404, -inf
          %411 = vst.msk [vmem:[#allocation2 + $0x30] sm:$0xff] %vm404, -inf
          %412 = vst.msk [vmem:[#allocation2 + $0x38] sm:$0xff] %vm404, -inf
          %413 = vst.msk [vmem:[#allocation3] sm:$0xff] %vm404, 0.0
          %414 = vst.msk [vmem:[#allocation3 + $0x8] sm:$0xff] %vm404, 0.0
          %415 = vst.msk [vmem:[#allocation3 + $0x10] sm:$0xff] %vm404, 0.0
          %416 = vst.msk [vmem:[#allocation3 + $0x18] sm:$0xff] %vm404, 0.0
          %417 = vst.msk [vmem:[#allocation3 + $0x20] sm:$0xff] %vm404, 0.0
          %418 = vst.msk [vmem:[#allocation3 + $0x28] sm:$0xff] %vm404, 0.0
          %419 = vst.msk [vmem:[#allocation3 + $0x30] sm:$0xff] %vm404, 0.0
          %420 = vst.msk [vmem:[#allocation3 + $0x38] sm:$0xff] %vm404, 0.0
          %421 = vst [vmem:[#allocation4] sm:$0xff] 0.0
          %422 = vst [vmem:[#allocation4 + $0x8] sm:$0xff] 0.0
        $region159: #{transformer_forward.12} parent=142 // pred_fallthru
          _
        %v423 = vld [vmem:[%s339] sm:$0xf]
        %v424 = vld [vmem:[%s339 + $0x4] sm:$0xf]
        %v425 = vld [vmem:[%s346] sm:$0xf]
        %v426 = vld [vmem:[%s346 + $0x4] sm:$0xf]
        %v427 = vld [vmem:[%s353] sm:$0xf]
        %v428 = vld [vmem:[%s353 + $0x4] sm:$0xf]
        %v431 = vunpack.c.l.b16 %v423
        %v432 = vunpack.c.l.b16 %v424
        %v433 = vpack.c.b16 %v432, %v431
        %v436 = vunpack.c.l.b16 %v425
        %v437 = vunpack.c.l.b16 %v426
        %v438 = vpack.c.b16 %v437, %v436
        %vm439 = vcmask 261120
        %v441 = vsel %vm439, %v433, 0
        %v444 = vsel %vm439, %v438, 0
        %446 = vmatprep.subr.bf16.mxu0 0
        %447 = vmatpush1.bf16.xpose.msra.mxu0 %v444
        %448 = vmatprep.subr.bf16.mxu0 0
        %449 = vmatpush1.bf16.xpose.msra.mxu0 0
        %450 = vmatprep.subr.bf16.mxu0 0
        %451 = vmatpush1.bf16.xpose.msra.mxu0 0
        %452 = vmatprep.subr.bf16.mxu0 0
        %453 = vmatpush1.bf16.xpose.msra.mxu0 0
        %454 = vmatprep.subr.bf16.mxu0 0
        %455 = vmatpush1.bf16.xpose.msra.mxu0 0
        %456 = vmatprep.subr.bf16.mxu0 0
        %457 = vmatpush1.bf16.xpose.msra.mxu0 0
        %458 = vmatprep.subr.bf16.mxu0 0
        %459 = vmatpush1.bf16.xpose.msra.mxu0 0
        %460 = vmatprep.subr.bf16.mxu0 0
        %461 = vmatpush1.bf16.xpose.msra.mxu0 0
        %462 = vmatprep.subr.bf16.mxu0 0
        %463 = vmatpush1.bf16.xpose.msra.mxu0 0
        %464 = vmatprep.subr.bf16.mxu0 0
        %465 = vmatpush1.bf16.xpose.msra.mxu0 0
        %466 = vmatprep.subr.bf16.mxu0 0
        %467 = vmatpush1.bf16.xpose.msra.mxu0 0
        %468 = vmatprep.subr.bf16.mxu0 0
        %469 = vmatpush1.bf16.xpose.msra.mxu0 0
        %470 = vmatprep.subr.bf16.mxu0 0
        %471 = vmatpush1.bf16.xpose.msra.mxu0 0
        %472 = vmatprep.subr.bf16.mxu0 0
        %473 = vmatpush1.bf16.xpose.msra.mxu0 0
        %474 = vmatprep.subr.bf16.mxu0 0
        %475 = vmatpush1.bf16.xpose.msra.mxu0 0
        %476 = vmatprep.subr.bf16.mxu0 0
        %477 = vmatpush1.bf16.xpose.msra.mxu0 0
        %478 = vmatprep.mubr.bf16.mxu0 0
        %479 = vmatmul.mubr.bf16.gmra.mrb[0].mxu0 %v441
        %v480 = vpop.f32.mrb[0].mxu0
        %v481 = vadd.f32 0.0, %v480
        %v482 = vpop.f32.mrb[0].mxu0
        %v483 = vpop.f32.mrb[0].mxu0
        %v484 = vadd.f32 0.0, %v483
        %v485 = vpop.f32.mrb[0].mxu0
        %486 = vdwg.mxu0
        %v487 = vmul.f32 %v481, 0.17677669
        %v488 = vmul.f32 %v484, 0.17677669
        %v489 = vld [vmem:[#allocation2] sm:$0xff]
        %v490 = vld [vmem:[#allocation2 + $0x8] sm:$0xff]
        %vm491 = vcmask 130048
        %v492 = vsel %vm491, %v487, -inf
        %493 = vmax.xlane.f32.xlu0 %v492
        %v494 = vpop.xlane.xlu0 %493
        %v495 = vsel %vm491, %v488, -inf
        %496 = vmax.xlane.f32.xlu0 %v495
        %v497 = vpop.xlane.xlu0 %496
        %v498 = vmax.f32 %v489, %v494
        %v499 = vmax.f32 %v490, %v497
        %v500 = vsub.f32 %v489, %v498
        %v501 = vsub.f32 %v490, %v499
        %v502 = vmul.f32 %v500, 1.442695
        %v503 = vpow.pop %v502
        %v504 = vmul.f32 %v501, 1.442695
        %v505 = vpow.pop %v504
        %507 = vset.pattern.permute.xlu0 0
        %508 = vperm.xlu0 %507, %v498
        %v509 = vpop.permute.xlu0 %508
        %512 = vset.pattern.permute.xlu0 0
        %513 = vperm.xlu0 %512, %v499
        %v514 = vpop.permute.xlu0 %513
        %v516 = vsub.f32 %v487, %v509
        %v517 = vsub.f32 %v488, %v514
        %v518 = vmul.f32 %v516, 1.442695
        %v519 = vpow.pop %v518
        %v520 = vmul.f32 %v517, 1.442695
        %v521 = vpow.pop %v520
        %v522 = vld [vmem:[#allocation3] sm:$0xff]
        %v523 = vld [vmem:[#allocation3 + $0x8] sm:$0xff]
        %v524 = vmul.f32 %v503, %v522
        %v525 = vmul.f32 %v505, %v523
        %v526 = vsel %vm491, %v519, 0.0
        %527 = vadd.xlane.f32.xlu0 %v526
        %v528 = vpop.xlane.xlu0 %527
        %v529 = vsel %vm491, %v521, 0.0
        %530 = vadd.xlane.f32.xlu0 %v529
        %v531 = vpop.xlane.xlu0 %530
        %v532 = vadd.f32 %v524, %v528
        %v533 = vadd.f32 %v525, %v531
        %vm534 = vcmask 7168
        %535 = vst.msk [vmem:[#allocation3] sm:$0xff] %vm534, %v532
        %536 = vst.msk [vmem:[#allocation3 + $0x8] sm:$0xff] %vm534, %v533
        %v537 = vld [vmem:[#allocation4] sm:$0xff]
        %v538 = vld [vmem:[#allocation4 + $0x8] sm:$0xff]
        %540 = vset.pattern.permute.xlu0 0
        %541 = vperm.xlu0 %540, %v503
        %v542 = vpop.permute.xlu0 %541
        %545 = vset.pattern.permute.xlu0 0
        %546 = vperm.xlu0 %545, %v505
        %v547 = vpop.permute.xlu0 %546
        %v549 = vmul.f32 %v542, %v537
        %v550 = vmul.f32 %v547, %v538
        %v551 = vpack.c.bf16 %v521, %v519
        %v554 = vunpack.c.l.b16 %v427
        %v555 = vunpack.c.l.b16 %v428
        %v556 = vpack.c.b16 %v555, %v554
        %v559 = vsel %vm491, %v551, 0
        %561 = vmatprep.subr.bf16.mxu0 0
        %562 = vmatpush1.bf16.msra.mxu0 %v556
        %563 = vmatprep.subr.bf16.mxu0 0
        %564 = vmatpush1.bf16.msra.mxu0 0
        %565 = vmatprep.subr.bf16.mxu0 0
        %566 = vmatpush1.bf16.msra.mxu0 0
        %567 = vmatprep.subr.bf16.mxu0 0
        %568 = vmatpush1.bf16.msra.mxu0 0
        %569 = vmatprep.subr.bf16.mxu0 0
        %570 = vmatpush1.bf16.msra.mxu0 0
        %571 = vmatprep.subr.bf16.mxu0 0
        %572 = vmatpush1.bf16.msra.mxu0 0
        %573 = vmatprep.subr.bf16.mxu0 0
        %574 = vmatpush1.bf16.msra.mxu0 0
        %575 = vmatprep.subr.bf16.mxu0 0
        %576 = vmatpush1.bf16.msra.mxu0 0
        %577 = vmatprep.subr.bf16.mxu0 0
        %578 = vmatpush1.bf16.msra.mxu0 0
        %579 = vmatprep.subr.bf16.mxu0 0
        %580 = vmatpush1.bf16.msra.mxu0 0
        %581 = vmatprep.subr.bf16.mxu0 0
        %582 = vmatpush1.bf16.msra.mxu0 0
        %583 = vmatprep.subr.bf16.mxu0 0
        %584 = vmatpush1.bf16.msra.mxu0 0
        %585 = vmatprep.subr.bf16.mxu0 0
        %586 = vmatpush1.bf16.msra.mxu0 0
        %587 = vmatprep.subr.bf16.mxu0 0
        %588 = vmatpush1.bf16.msra.mxu0 0
        %589 = vmatprep.subr.bf16.mxu0 0
        %590 = vmatpush1.bf16.msra.mxu0 0
        %591 = vmatprep.subr.bf16.mxu0 0
        %592 = vmatpush1.bf16.msra.mxu0 0
        %593 = vmatprep.mubr.bf16.mxu0 0
        %594 = vmatmul.mubr.bf16.gmra.mrb[0].mxu0 %v559
        %v595 = vpop.f32.mrb[0].mxu0
        %v596 = vadd.f32 0.0, %v595
        %v597 = vpop.f32.mrb[0].mxu0
        %v598 = vpop.f32.mrb[0].mxu0
        %v599 = vadd.f32 0.0, %v598
        %v600 = vpop.f32.mrb[0].mxu0
        %601 = vdwg.mxu0
        %v602 = vadd.f32 %v549, %v596
        %v603 = vadd.f32 %v550, %v599
        %604 = vst.msk [vmem:[#allocation4] sm:$0xff] %vm439, %v602
        %605 = vst.msk [vmem:[#allocation4 + $0x8] sm:$0xff] %vm439, %v603
        %606 = vst.msk [vmem:[#allocation2] sm:$0xff] %vm534, %v498
        %607 = vst.msk [vmem:[#allocation2 + $0x8] sm:$0xff] %vm534, %v499
        %608 = vrot.lane.b32.xlu0 %v433, 96
        %v609 = vpop.permute.xlu0 %608
        %610 = vrot.lane.b32.xlu0 %v438, 96
        %v611 = vpop.permute.xlu0 %610
        %v613 = vsel %vm439, %v609, 0
        %v616 = vsel %vm439, %v611, 0
        %618 = vmatprep.subr.bf16.mxu0 0
        %619 = vmatpush1.bf16.xpose.msra.mxu0 %v616
        %620 = vmatprep.subr.bf16.mxu0 0
        %621 = vmatpush1.bf16.xpose.msra.mxu0 0
        %622 = vmatprep.subr.bf16.mxu0 0
        %623 = vmatpush1.bf16.xpose.msra.mxu0 0
        %624 = vmatprep.subr.bf16.mxu0 0
        %625 = vmatpush1.bf16.xpose.msra.mxu0 0
        %626 = vmatprep.subr.bf16.mxu0 0
        %627 = vmatpush1.bf16.xpose.msra.mxu0 0
        %628 = vmatprep.subr.bf16.mxu0 0
        %629 = vmatpush1.bf16.xpose.msra.mxu0 0
        %630 = vmatprep.subr.bf16.mxu0 0
        %631 = vmatpush1.bf16.xpose.msra.mxu0 0
        %632 = vmatprep.subr.bf16.mxu0 0
        %633 = vmatpush1.bf16.xpose.msra.mxu0 0
        %634 = vmatprep.subr.bf16.mxu0 0
        %635 = vmatpush1.bf16.xpose.msra.mxu0 0
        %636 = vmatprep.subr.bf16.mxu0 0
        %637 = vmatpush1.bf16.xpose.msra.mxu0 0
        %638 = vmatprep.subr.bf16.mxu0 0
        %639 = vmatpush1.bf16.xpose.msra.mxu0 0
        %640 = vmatprep.subr.bf16.mxu0 0
        %641 = vmatpush1.bf16.xpose.msra.mxu0 0
        %642 = vmatprep.subr.bf16.mxu0 0
        %643 = vmatpush1.bf16.xpose.msra.mxu0 0
        %644 = vmatprep.subr.bf16.mxu0 0
        %645 = vmatpush1.bf16.xpose.msra.mxu0 0
        %646 = vmatprep.subr.bf16.mxu0 0
        %647 = vmatpush1.bf16.xpose.msra.mxu0 0
        %648 = vmatprep.subr.bf16.mxu0 0
        %649 = vmatpush1.bf16.xpose.msra.mxu0 0
        %650 = vmatprep.mubr.bf16.mxu0 0
        %651 = vmatmul.mubr.bf16.gmra.mrb[0].mxu0 %v613
        %v652 = vpop.f32.mrb[0].mxu0
        %v653 = vadd.f32 0.0, %v652
        %v654 = vpop.f32.mrb[0].mxu0
        %v655 = vpop.f32.mrb[0].mxu0
        %v656 = vadd.f32 0.0, %v655
        %v657 = vpop.f32.mrb[0].mxu0
        %658 = vdwg.mxu0
        %v659 = vmul.f32 %v653, 0.17677669
        %v660 = vmul.f32 %v656, 0.17677669
        %s661 = scalar_lea.vmem [#allocation2], 16
        %v662 = vld [vmem:[%s661] sm:$0xff]
        %v663 = vld [vmem:[%s661 + $0x8] sm:$0xff]
        %v664 = vsel %vm491, %v659, -inf
        %665 = vmax.xlane.f32.xlu0 %v664
        %v666 = vpop.xlane.xlu0 %665
        %v667 = vsel %vm491, %v660, -inf
        %668 = vmax.xlane.f32.xlu0 %v667
        %v669 = vpop.xlane.xlu0 %668
        %v670 = vmax.f32 %v662, %v666
        %v671 = vmax.f32 %v663, %v669
        %v672 = vsub.f32 %v662, %v670
        %v673 = vsub.f32 %v663, %v671
        %v674 = vmul.f32 %v672, 1.442695
        %v675 = vpow.pop %v674
        %v676 = vmul.f32 %v673, 1.442695
        %v677 = vpow.pop %v676
        %679 = vset.pattern.permute.xlu0 0
        %680 = vperm.xlu0 %679, %v670
        %v681 = vpop.permute.xlu0 %680
        %684 = vset.pattern.permute.xlu0 0
        %685 = vperm.xlu0 %684, %v671
        %v686 = vpop.permute.xlu0 %685
        %v688 = vsub.f32 %v659, %v681
        %v689 = vsub.f32 %v660, %v686
        %v690 = vmul.f32 %v688, 1.442695
        %v691 = vpow.pop %v690
        %v692 = vmul.f32 %v689, 1.442695
        %v693 = vpow.pop %v692
        %s694 = scalar_lea.vmem [#allocation3], 16
        %v695 = vld [vmem:[%s694] sm:$0xff]
        %v696 = vld [vmem:[%s694 + $0x8] sm:$0xff]
        %v697 = vmul.f32 %v675, %v695
        %v698 = vmul.f32 %v677, %v696
        %v699 = vsel %vm491, %v691, 0.0
        %700 = vadd.xlane.f32.xlu0 %v699
        %v701 = vpop.xlane.xlu0 %700
        %v702 = vsel %vm491, %v693, 0.0
        %703 = vadd.xlane.f32.xlu0 %v702
        %v704 = vpop.xlane.xlu0 %703
        %v705 = vadd.f32 %v697, %v701
        %v706 = vadd.f32 %v698, %v704
        %707 = vst.msk [vmem:[%s694] sm:$0xff] %vm534, %v705
        %708 = vst.msk [vmem:[%s694 + $0x8] sm:$0xff] %vm534, %v706
        %v709 = vld [vmem:[#allocation4] sm:$0xff]
        %v710 = vld [vmem:[#allocation4 + $0x8] sm:$0xff]
        %712 = vset.pattern.permute.xlu0 0
        %713 = vperm.xlu0 %712, %v675
        %v714 = vpop.permute.xlu0 %713
        %717 = vset.pattern.permute.xlu0 0
        %718 = vperm.xlu0 %717, %v677
        %v719 = vpop.permute.xlu0 %718
        %v721 = vmul.f32 %v714, %v709
        %v722 = vmul.f32 %v719, %v710
        %v723 = vpack.c.bf16 %v693, %v691
        %724 = vrot.lane.b32.xlu0 %v556, 96
        %v725 = vpop.permute.xlu0 %724
        %v728 = vsel %vm491, %v723, 0
        %730 = vmatprep.subr.bf16.mxu0 0
        %731 = vmatpush1.bf16.msra.mxu0 %v725
        %732 = vmatprep.subr.bf16.mxu0 0
        %733 = vmatpush1.bf16.msra.mxu0 0
        %734 = vmatprep.subr.bf16.mxu0 0
        %735 = vmatpush1.bf16.msra.mxu0 0
        %736 = vmatprep.subr.bf16.mxu0 0
        %737 = vmatpush1.bf16.msra.mxu0 0
        %738 = vmatprep.subr.bf16.mxu0 0
        %739 = vmatpush1.bf16.msra.mxu0 0
        %740 = vmatprep.subr.bf16.mxu0 0
        %741 = vmatpush1.bf16.msra.mxu0 0
        %742 = vmatprep.subr.bf16.mxu0 0
        %743 = vmatpush1.bf16.msra.mxu0 0
        %744 = vmatprep.subr.bf16.mxu0 0
        %745 = vmatpush1.bf16.msra.mxu0 0
        %746 = vmatprep.subr.bf16.mxu0 0
        %747 = vmatpush1.bf16.msra.mxu0 0
        %748 = vmatprep.subr.bf16.mxu0 0
        %749 = vmatpush1.bf16.msra.mxu0 0
        %750 = vmatprep.subr.bf16.mxu0 0
        %751 = vmatpush1.bf16.msra.mxu0 0
        %752 = vmatprep.subr.bf16.mxu0 0
        %753 = vmatpush1.bf16.msra.mxu0 0
        %754 = vmatprep.subr.bf16.mxu0 0
        %755 = vmatpush1.bf16.msra.mxu0 0
        %756 = vmatprep.subr.bf16.mxu0 0
        %757 = vmatpush1.bf16.msra.mxu0 0
        %758 = vmatprep.subr.bf16.mxu0 0
        %759 = vmatpush1.bf16.msra.mxu0 0
        %760 = vmatprep.subr.bf16.mxu0 0
        %761 = vmatpush1.bf16.msra.mxu0 0
        %762 = vmatprep.mubr.bf16.mxu0 0
        %763 = vmatmul.mubr.bf16.gmra.mrb[0].mxu0 %v728
        %v764 = vpop.f32.mrb[0].mxu0
        %v765 = vadd.f32 0.0, %v764
        %v766 = vpop.f32.mrb[0].mxu0
        %v767 = vpop.f32.mrb[0].mxu0
        %v768 = vadd.f32 0.0, %v767
        %v769 = vpop.f32.mrb[0].mxu0
        %770 = vdwg.mxu0
        %773 = vrot.lane.b32.xlu0 %v765, 32
        %v774 = vpop.permute.xlu0 %773
        %775 = vrot.lane.b32.xlu0 %v768, 32
        %v776 = vpop.permute.xlu0 %775
        %v779 = vadd.f32 %v721, %v774
        %v780 = vadd.f32 %v722, %v776
        %vm781 = vcmask 523520
        %782 = vst.msk [vmem:[#allocation4] sm:$0xff] %vm781, %v779
        %783 = vst.msk [vmem:[#allocation4 + $0x8] sm:$0xff] %vm781, %v780
        %784 = vst.msk [vmem:[%s661] sm:$0xff] %vm534, %v670
        %785 = vst.msk [vmem:[%s661 + $0x8] sm:$0xff] %vm534, %v671
        %786 = vrot.lane.b32.xlu0 %v433, 64
        %v787 = vpop.permute.xlu0 %786
        %788 = vrot.lane.b32.xlu0 %v438, 64
        %v789 = vpop.permute.xlu0 %788
        %v791 = vsel %vm439, %v787, 0
        %v794 = vsel %vm439, %v789, 0
        %796 = vmatprep.subr.bf16.mxu0 0
        %797 = vmatpush1.bf16.xpose.msra.mxu0 %v794
        %798 = vmatprep.subr.bf16.mxu0 0
        %799 = vmatpush1.bf16.xpose.msra.mxu0 0
        %800 = vmatprep.subr.bf16.mxu0 0
        %801 = vmatpush1.bf16.xpose.msra.mxu0 0
        %802 = vmatprep.subr.bf16.mxu0 0
        %803 = vmatpush1.bf16.xpose.msra.mxu0 0
        %804 = vmatprep.subr.bf16.mxu0 0
        %805 = vmatpush1.bf16.xpose.msra.mxu0 0
        %806 = vmatprep.subr.bf16.mxu0 0
        %807 = vmatpush1.bf16.xpose.msra.mxu0 0
        %808 = vmatprep.subr.bf16.mxu0 0
        %809 = vmatpush1.bf16.xpose.msra.mxu0 0
        %810 = vmatprep.subr.bf16.mxu0 0
        %811 = vmatpush1.bf16.xpose.msra.mxu0 0
        %812 = vmatprep.subr.bf16.mxu0 0
        %813 = vmatpush1.bf16.xpose.msra.mxu0 0
        %814 = vmatprep.subr.bf16.mxu0 0
        %815 = vmatpush1.bf16.xpose.msra.mxu0 0
        %816 = vmatprep.subr.bf16.mxu0 0
        %817 = vmatpush1.bf16.xpose.msra.mxu0 0
        %818 = vmatprep.subr.bf16.mxu0 0
        %819 = vmatpush1.bf16.xpose.msra.mxu0 0
        %820 = vmatprep.subr.bf16.mxu0 0
        %821 = vmatpush1.bf16.xpose.msra.mxu0 0
        %822 = vmatprep.subr.bf16.mxu0 0
        %823 = vmatpush1.bf16.xpose.msra.mxu0 0
        %824 = vmatprep.subr.bf16.mxu0 0
        %825 = vmatpush1.bf16.xpose.msra.mxu0 0
        %826 = vmatprep.subr.bf16.mxu0 0
        %827 = vmatpush1.bf16.xpose.msra.mxu0 0
        %828 = vmatprep.mubr.bf16.mxu0 0
        %829 = vmatmul.mubr.bf16.gmra.mrb[0].mxu0 %v791
        %v830 = vpop.f32.mrb[0].mxu0
        %v831 = vadd.f32 0.0, %v830
        %v832 = vpop.f32.mrb[0].mxu0
        %v833 = vpop.f32.mrb[0].mxu0
        %v834 = vadd.f32 0.0, %v833
        %v835 = vpop.f32.mrb[0].mxu0
        %836 = vdwg.mxu0
        %v837 = vmul.f32 %v831, 0.17677669
        %v838 = vmul.f32 %v834, 0.17677669
        %s839 = scalar_lea.vmem [#allocation2], 32
        %v840 = vld [vmem:[%s839] sm:$0xff]
        %v841 = vld [vmem:[%s839 + $0x8] sm:$0xff]
        %v842 = vsel %vm491, %v837, -inf
        %843 = vmax.xlane.f32.xlu0 %v842
        %v844 = vpop.xlane.xlu0 %843
        %v845 = vsel %vm491, %v838, -inf
        %846 = vmax.xlane.f32.xlu0 %v845
        %v847 = vpop.xlane.xlu0 %846
        %v848 = vmax.f32 %v840, %v844
        %v849 = vmax.f32 %v841, %v847
        %v850 = vsub.f32 %v840, %v848
        %v851 = vsub.f32 %v841, %v849
        %v852 = vmul.f32 %v850, 1.442695
        %v853 = vpow.pop %v852
        %v854 = vmul.f32 %v851, 1.442695
        %v855 = vpow.pop %v854
        %857 = vset.pattern.permute.xlu0 0
        %858 = vperm.xlu0 %857, %v848
        %v859 = vpop.permute.xlu0 %858
        %862 = vset.pattern.permute.xlu0 0
        %863 = vperm.xlu0 %862, %v849
        %v864 = vpop.permute.xlu0 %863
        %v866 = vsub.f32 %v837, %v859
        %v867 = vsub.f32 %v838, %v864
        %v868 = vmul.f32 %v866, 1.442695
        %v869 = vpow.pop %v868
        %v870 = vmul.f32 %v867, 1.442695
        %v871 = vpow.pop %v870
        %s872 = scalar_lea.vmem [#allocation3], 32
        %v873 = vld [vmem:[%s872] sm:$0xff]
        %v874 = vld [vmem:[%s872 + $0x8] sm:$0xff]
        %v875 = vmul.f32 %v853, %v873
        %v876 = vmul.f32 %v855, %v874
        %v877 = vsel %vm491, %v869, 0.0
        %878 = vadd.xlane.f32.xlu0 %v877
        %v879 = vpop.xlane.xlu0 %878
        %v880 = vsel %vm491, %v871, 0.0
        %881 = vadd.xlane.f32.xlu0 %v880
        %v882 = vpop.xlane.xlu0 %881
        %v883 = vadd.f32 %v875, %v879
        %v884 = vadd.f32 %v876, %v882
        %885 = vst.msk [vmem:[%s872] sm:$0xff] %vm534, %v883
        %886 = vst.msk [vmem:[%s872 + $0x8] sm:$0xff] %vm534, %v884
        %v887 = vld [vmem:[#allocation4] sm:$0xff]
        %v888 = vld [vmem:[#allocation4 + $0x8] sm:$0xff]
        %890 = vset.pattern.permute.xlu0 0
        %891 = vperm.xlu0 %890, %v853
        %v892 = vpop.permute.xlu0 %891
        %895 = vset.pattern.permute.xlu0 0
        %896 = vperm.xlu0 %895, %v855
        %v897 = vpop.permute.xlu0 %896
        %v899 = vmul.f32 %v892, %v887
        %v900 = vmul.f32 %v897, %v888
        %v901 = vpack.c.bf16 %v871, %v869
        %902 = vrot.lane.b32.xlu0 %v556, 64
        %v903 = vpop.permute.xlu0 %902
        %v906 = vsel %vm491, %v901, 0
        %908 = vmatprep.subr.bf16.mxu0 0
        %909 = vmatpush1.bf16.msra.mxu0 %v903
        %910 = vmatprep.subr.bf16.mxu0 0
        %911 = vmatpush1.bf16.msra.mxu0 0
        %912 = vmatprep.subr.bf16.mxu0 0
        %913 = vmatpush1.bf16.msra.mxu0 0
        %914 = vmatprep.subr.bf16.mxu0 0
        %915 = vmatpush1.bf16.msra.mxu0 0
        %916 = vmatprep.subr.bf16.mxu0 0
        %917 = vmatpush1.bf16.msra.mxu0 0
        %918 = vmatprep.subr.bf16.mxu0 0
        %919 = vmatpush1.bf16.msra.mxu0 0
        %920 = vmatprep.subr.bf16.mxu0 0
        %921 = vmatpush1.bf16.msra.mxu0 0
        %922 = vmatprep.subr.bf16.mxu0 0
        %923 = vmatpush1.bf16.msra.mxu0 0
        %924 = vmatprep.subr.bf16.mxu0 0
        %925 = vmatpush1.bf16.msra.mxu0 0
        %926 = vmatprep.subr.bf16.mxu0 0
        %927 = vmatpush1.bf16.msra.mxu0 0
        %928 = vmatprep.subr.bf16.mxu0 0
        %929 = vmatpush1.bf16.msra.mxu0 0
        %930 = vmatprep.subr.bf16.mxu0 0
        %931 = vmatpush1.bf16.msra.mxu0 0
        %932 = vmatprep.subr.bf16.mxu0 0
        %933 = vmatpush1.bf16.msra.mxu0 0
        %934 = vmatprep.subr.bf16.mxu0 0
        %935 = vmatpush1.bf16.msra.mxu0 0
        %936 = vmatprep.subr.bf16.mxu0 0
        %937 = vmatpush1.bf16.msra.mxu0 0
        %938 = vmatprep.subr.bf16.mxu0 0
        %939 = vmatpush1.bf16.msra.mxu0 0
        %940 = vmatprep.mubr.bf16.mxu0 0
        %941 = vmatmul.mubr.bf16.gmra.mrb[0].mxu0 %v906
        %v942 = vpop.f32.mrb[0].mxu0
        %v943 = vadd.f32 0.0, %v942
        %v944 = vpop.f32.mrb[0].mxu0
        %v945 = vpop.f32.mrb[0].mxu0
        %v946 = vadd.f32 0.0, %v945
        %v947 = vpop.f32.mrb[0].mxu0
        %948 = vdwg.mxu0
        %951 = vrot.lane.b32.xlu0 %v943, 64
        %v952 = vpop.permute.xlu0 %951
        %953 = vrot.lane.b32.xlu0 %v946, 64
        %v954 = vpop.permute.xlu0 %953
        %v957 = vadd.f32 %v899, %v952
        %v958 = vadd.f32 %v900, %v954
        %vm959 = vcmask 785920
        %960 = vst.msk [vmem:[#allocation4] sm:$0xff] %vm959, %v957
        %961 = vst.msk [vmem:[#allocation4 + $0x8] sm:$0xff] %vm959, %v958
        %962 = vst.msk [vmem:[%s839] sm:$0xff] %vm534, %v848
        %963 = vst.msk [vmem:[%s839 + $0x8] sm:$0xff] %vm534, %v849
        %964 = vrot.lane.b32.xlu0 %v433, 32
        %v965 = vpop.permute.xlu0 %964
        %966 = vrot.lane.b32.xlu0 %v438, 32
        %v967 = vpop.permute.xlu0 %966
        %v969 = vsel %vm439, %v965, 0
        %v972 = vsel %vm439, %v967, 0
        %974 = vmatprep.subr.bf16.mxu0 0
        %975 = vmatpush1.bf16.xpose.msra.mxu0 %v972
        %976 = vmatprep.subr.bf16.mxu0 0
        %977 = vmatpush1.bf16.xpose.msra.mxu0 0
        %978 = vmatprep.subr.bf16.mxu0 0
        %979 = vmatpush1.bf16.xpose.msra.mxu0 0
        %980 = vmatprep.subr.bf16.mxu0 0
        %981 = vmatpush1.bf16.xpose.msra.mxu0 0
        %982 = vmatprep.subr.bf16.mxu0 0
        %983 = vmatpush1.bf16.xpose.msra.mxu0 0
        %984 = vmatprep.subr.bf16.mxu0 0
        %985 = vmatpush1.bf16.xpose.msra.mxu0 0
        %986 = vmatprep.subr.bf16.mxu0 0
        %987 = vmatpush1.bf16.xpose.msra.mxu0 0
        %988 = vmatprep.subr.bf16.mxu0 0
        %989 = vmatpush1.bf16.xpose.msra.mxu0 0
        %990 = vmatprep.subr.bf16.mxu0 0
        %991 = vmatpush1.bf16.xpose.msra.mxu0 0
        %992 = vmatprep.subr.bf16.mxu0 0
        %993 = vmatpush1.bf16.xpose.msra.mxu0 0
        %994 = vmatprep.subr.bf16.mxu0 0
        %995 = vmatpush1.bf16.xpose.msra.mxu0 0
        %996 = vmatprep.subr.bf16.mxu0 0
        %997 = vmatpush1.bf16.xpose.msra.mxu0 0
        %998 = vmatprep.subr.bf16.mxu0 0
        %999 = vmatpush1.bf16.xpose.msra.mxu0 0
        %1000 = vmatprep.subr.bf16.mxu0 0
        %1001 = vmatpush1.bf16.xpose.msra.mxu0 0
        %1002 = vmatprep.subr.bf16.mxu0 0
        %1003 = vmatpush1.bf16.xpose.msra.mxu0 0
        %1004 = vmatprep.subr.bf16.mxu0 0
        %1005 = vmatpush1.bf16.xpose.msra.mxu0 0
        %1006 = vmatprep.mubr.bf16.mxu0 0
        %1007 = vmatmul.mubr.bf16.gmra.mrb[0].mxu0 %v969
        %v1008 = vpop.f32.mrb[0].mxu0
        %v1009 = vadd.f32 0.0, %v1008
        %v1010 = vpop.f32.mrb[0].mxu0
        %v1011 = vpop.f32.mrb[0].mxu0
        %v1012 = vadd.f32 0.0, %v1011
        %v1013 = vpop.f32.mrb[0].mxu0
        %1014 = vdwg.mxu0
        %v1015 = vmul.f32 %v1009, 0.17677669
        %v1016 = vmul.f32 %v1012, 0.17677669
        %s1017 = scalar_lea.vmem [#allocation2], 48
        %v1018 = vld [vmem:[%s1017] sm:$0xff]
        %v1019 = vld [vmem:[%s1017 + $0x8] sm:$0xff]
        %v1020 = vsel %vm491, %v1015, -inf
        %1021 = vmax.xlane.f32.xlu0 %v1020
        %v1022 = vpop.xlane.xlu0 %1021
        %v1023 = vsel %vm491, %v1016, -inf
        %1024 = vmax.xlane.f32.xlu0 %v1023
        %v1025 = vpop.xlane.xlu0 %1024
        %v1026 = vmax.f32 %v1018, %v1022
        %v1027 = vmax.f32 %v1019, %v1025
        %v1028 = vsub.f32 %v1018, %v1026
        %v1029 = vsub.f32 %v1019, %v1027
        %v1030 = vmul.f32 %v1028, 1.442695
        %v1031 = vpow.pop %v1030
        %v1032 = vmul.f32 %v1029, 1.442695
        %v1033 = vpow.pop %v1032
        %1035 = vset.pattern.permute.xlu0 0
        %1036 = vperm.xlu0 %1035, %v1026
        %v1037 = vpop.permute.xlu0 %1036
        %1040 = vset.pattern.permute.xlu0 0
        %1041 = vperm.xlu0 %1040, %v1027
        %v1042 = vpop.permute.xlu0 %1041
        %v1044 = vsub.f32 %v1015, %v1037
        %v1045 = vsub.f32 %v1016, %v1042
        %v1046 = vmul.f32 %v1044, 1.442695
        %v1047 = vpow.pop %v1046
        %v1048 = vmul.f32 %v1045, 1.442695
        %v1049 = vpow.pop %v1048
        %s1050 = scalar_lea.vmem [#allocation3], 48
        %v1051 = vld [vmem:[%s1050] sm:$0xff]
        %v1052 = vld [vmem:[%s1050 + $0x8] sm:$0xff]
        %v1053 = vmul.f32 %v1031, %v1051
        %v1054 = vmul.f32 %v1033, %v1052
        %v1055 = vsel %vm491, %v1047, 0.0
        %1056 = vadd.xlane.f32.xlu0 %v1055
        %v1057 = vpop.xlane.xlu0 %1056
        %v1058 = vsel %vm491, %v1049, 0.0
        %1059 = vadd.xlane.f32.xlu0 %v1058
        %v1060 = vpop.xlane.xlu0 %1059
        %v1061 = vadd.f32 %v1053, %v1057
        %v1062 = vadd.f32 %v1054, %v1060
        %1063 = vst.msk [vmem:[%s1050] sm:$0xff] %vm534, %v1061
        %1064 = vst.msk [vmem:[%s1050 + $0x8] sm:$0xff] %vm534, %v1062
        %v1065 = vld [vmem:[#allocation4] sm:$0xff]
        %v1066 = vld [vmem:[#allocation4 + $0x8] sm:$0xff]
        %1068 = vset.pattern.permute.xlu0 0
        %1069 = vperm.xlu0 %1068, %v1031
        %v1070 = vpop.permute.xlu0 %1069
        %1073 = vset.pattern.permute.xlu0 0
        %1074 = vperm.xlu0 %1073, %v1033
        %v1075 = vpop.permute.xlu0 %1074
        %v1077 = vmul.f32 %v1070, %v1065
        %v1078 = vmul.f32 %v1075, %v1066
        %v1079 = vpack.c.bf16 %v1049, %v1047
        %1080 = vrot.lane.b32.xlu0 %v556, 32
        %v1081 = vpop.permute.xlu0 %1080
        %v1084 = vsel %vm491, %v1079, 0
        %1086 = vmatprep.subr.bf16.mxu0 0
        %1087 = vmatpush1.bf16.msra.mxu0 %v1081
        %1088 = vmatprep.subr.bf16.mxu0 0
        %1089 = vmatpush1.bf16.msra.mxu0 0
        %1090 = vmatprep.subr.bf16.mxu0 0
        %1091 = vmatpush1.bf16.msra.mxu0 0
        %1092 = vmatprep.subr.bf16.mxu0 0
        %1093 = vmatpush1.bf16.msra.mxu0 0
        %1094 = vmatprep.subr.bf16.mxu0 0
        %1095 = vmatpush1.bf16.msra.mxu0 0
        %1096 = vmatprep.subr.bf16.mxu0 0
        %1097 = vmatpush1.bf16.msra.mxu0 0
        %1098 = vmatprep.subr.bf16.mxu0 0
        %1099 = vmatpush1.bf16.msra.mxu0 0
        %1100 = vmatprep.subr.bf16.mxu0 0
        %1101 = vmatpush1.bf16.msra.mxu0 0
        %1102 = vmatprep.subr.bf16.mxu0 0
        %1103 = vmatpush1.bf16.msra.mxu0 0
        %1104 = vmatprep.subr.bf16.mxu0 0
        %1105 = vmatpush1.bf16.msra.mxu0 0
        %1106 = vmatprep.subr.bf16.mxu0 0
        %1107 = vmatpush1.bf16.msra.mxu0 0
        %1108 = vmatprep.subr.bf16.mxu0 0
        %1109 = vmatpush1.bf16.msra.mxu0 0
        %1110 = vmatprep.subr.bf16.mxu0 0
        %1111 = vmatpush1.bf16.msra.mxu0 0
        %1112 = vmatprep.subr.bf16.mxu0 0
        %1113 = vmatpush1.bf16.msra.mxu0 0
        %1114 = vmatprep.subr.bf16.mxu0 0
        %1115 = vmatpush1.bf16.msra.mxu0 0
        %1116 = vmatprep.subr.bf16.mxu0 0
        %1117 = vmatpush1.bf16.msra.mxu0 0
        %1118 = vmatprep.mubr.bf16.mxu0 0
        %1119 = vmatmul.mubr.bf16.gmra.mrb[0].mxu0 %v1084
        %v1120 = vpop.f32.mrb[0].mxu0
        %v1121 = vadd.f32 0.0, %v1120
        %v1122 = vpop.f32.mrb[0].mxu0
        %v1123 = vpop.f32.mrb[0].mxu0
        %v1124 = vadd.f32 0.0, %v1123
        %v1125 = vpop.f32.mrb[0].mxu0
        %1126 = vdwg.mxu0
        %1129 = vrot.lane.b32.xlu0 %v1121, 96
        %v1130 = vpop.permute.xlu0 %1129
        %1131 = vrot.lane.b32.xlu0 %v1124, 96
        %v1132 = vpop.permute.xlu0 %1131
        %v1135 = vadd.f32 %v1077, %v1130
        %v1136 = vadd.f32 %v1078, %v1132
        %vm1137 = vcmask 1048320
        %1138 = vst.msk [vmem:[#allocation4] sm:$0xff] %vm1137, %v1135
        %1139 = vst.msk [vmem:[#allocation4 + $0x8] sm:$0xff] %vm1137, %v1136
        %1140 = vst.msk [vmem:[%s1017] sm:$0xff] %vm534, %v1026
        %1141 = vst.msk [vmem:[%s1017 + $0x8] sm:$0xff] %vm534, %v1027
        // Predicated region
        $region160: #{transformer_forward.12} parent=142 // pred_check
          %p1142 = pneg %p400
        $region161: #{transformer_forward.12} parent=142 // pred_check_branch
          %1144 = sbr.rel (%p1142) target = $region163
        $region162: #{transformer_forward.12} parent=142 // pred_region
          %v1145 = vld [vmem:[#allocation3] sm:$0xff]
          %v1146 = vld [vmem:[#allocation3 + $0x8] sm:$0xff]
          %v1147 = vrcp.pop %v1145
          %v1148 = vrcp.pop %v1146
          %v1149 = vld [vmem:[#allocation4] sm:$0xff]
          %v1150 = vld [vmem:[#allocation4 + $0x8] sm:$0xff]
          %1152 = vset.pattern.permute.xlu0 0
          %1153 = vperm.xlu0 %1152, %v1147
          %v1154 = vpop.permute.xlu0 %1153
          %1157 = vset.pattern.permute.xlu0 0
          %1158 = vperm.xlu0 %1157, %v1148
          %v1159 = vpop.permute.xlu0 %1158
          %v1161 = vmul.f32 %v1149, %v1154
          %v1162 = vmul.f32 %v1150, %v1159
          %1163 = vst.msk [vmem:[#allocation4] sm:$0xff] %vm439, %v1161
          %1164 = vst.msk [vmem:[#allocation4 + $0x8] sm:$0xff] %vm439, %v1162
          %v1165 = vld [vmem:[%s694] sm:$0xff]
          %v1166 = vld [vmem:[%s694 + $0x8] sm:$0xff]
          %v1167 = vrcp.pop %v1165
          %v1168 = vrcp.pop %v1166
          %v1169 = vld [vmem:[#allocation4] sm:$0xff]
          %v1170 = vld [vmem:[#allocation4 + $0x8] sm:$0xff]
          %1172 = vset.pattern.permute.xlu0 0
          %1173 = vperm.xlu0 %1172, %v1167
          %v1174 = vpop.permute.xlu0 %1173
          %1177 = vset.pattern.permute.xlu0 0
          %1178 = vperm.xlu0 %1177, %v1168
          %v1179 = vpop.permute.xlu0 %1178
          %v1181 = vmul.f32 %v1169, %v1174
          %v1182 = vmul.f32 %v1170, %v1179
          %1183 = vst.msk [vmem:[#allocation4] sm:$0xff] %vm781, %v1181
          %1184 = vst.msk [vmem:[#allocation4 + $0x8] sm:$0xff] %vm781, %v1182
          %v1185 = vld [vmem:[%s872] sm:$0xff]
          %v1186 = vld [vmem:[%s872 + $0x8] sm:$0xff]
          %v1187 = vrcp.pop %v1185
          %v1188 = vrcp.pop %v1186
          %v1189 = vld [vmem:[#allocation4] sm:$0xff]
          %v1190 = vld [vmem:[#allocation4 + $0x8] sm:$0xff]
          %1192 = vset.pattern.permute.xlu0 0
          %1193 = vperm.xlu0 %1192, %v1187
          %v1194 = vpop.permute.xlu0 %1193
          %1197 = vset.pattern.permute.xlu0 0
          %1198 = vperm.xlu0 %1197, %v1188
          %v1199 = vpop.permute.xlu0 %1198
          %v1201 = vmul.f32 %v1189, %v1194
          %v1202 = vmul.f32 %v1190, %v1199
          %1203 = vst.msk [vmem:[#allocation4] sm:$0xff] %vm959, %v1201
          %1204 = vst.msk [vmem:[#allocation4 + $0x8] sm:$0xff] %vm959, %v1202
          %v1205 = vld [vmem:[%s1050] sm:$0xff]
          %v1206 = vld [vmem:[%s1050 + $0x8] sm:$0xff]
          %v1207 = vrcp.pop %v1205
          %v1208 = vrcp.pop %v1206
          %v1209 = vld [vmem:[#allocation4] sm:$0xff]
          %v1210 = vld [vmem:[#allocation4 + $0x8] sm:$0xff]
          %1212 = vset.pattern.permute.xlu0 0
          %1213 = vperm.xlu0 %1212, %v1207
          %v1214 = vpop.permute.xlu0 %1213
          %1217 = vset.pattern.permute.xlu0 0
          %1218 = vperm.xlu0 %1217, %v1208
          %v1219 = vpop.permute.xlu0 %1218
          %v1221 = vmul.f32 %v1209, %v1214
          %v1222 = vmul.f32 %v1210, %v1219
          %1223 = vst.msk [vmem:[#allocation4] sm:$0xff] %vm1137, %v1221
          %1224 = vst.msk [vmem:[#allocation4 + $0x8] sm:$0xff] %vm1137, %v1222
          %v1225 = vld [vmem:[#allocation4] sm:$0xff]
          %v1226 = vld [vmem:[#allocation4 + $0x8] sm:$0xff]
          %v1227 = vpack.c.bf16 %v1226, %v1225
          %v1229 = vunpack.c.l.b16 %v1227
          %v1230 = vunpack.c.h.b16 %v1227
          %v1231 = vpack.c.b16 %v1229, %v1229
          %v1232 = vpack.c.b16 %v1230, %v1230
          %1235 = vst [vmem:[%s397] sm:$0xf] %v1231
          %1236 = vst [vmem:[%s397 + $0x4] sm:$0xf] %v1232
        $region163: #{transformer_forward.12} parent=142 // pred_fallthru
          _
        %s1237 = smul.u32 2, %s20
        %p1238 = scmp.lt.s32.totalorder %s19, 1
        %s1239 = scalar_select %p1238, %s19, 1
        %p1240 = scmp.lt.s32.totalorder %s1237, 1
        %s1241 = scalar_select %p1240, %s1237, 1
        %s1242 = smul.addr %s1239, 2
        %s1243 = sadd.s32 %s1241, %s1242
        %s1244 = smul.addr %s1243, 4
        %s1245 = scalar_lea.vmem %s3, %s1244
        // Predicated region
        $region164: #{transformer_forward.12} parent=142 // pred_check
          %p1246 = pneg %p137
        $region165: #{transformer_forward.12} parent=142 // pred_check_branch
          %1248 = sbr.rel (%p1246) target = $region167
        $region166: #{transformer_forward.12} parent=142 // pred_region
          %s1249 = smul.u32 2, %s20
        $region167: #{transformer_forward.12} parent=142 // pred_fallthru
          _
      $region143: #{transformer_forward.12} parent=5 // pred_fallthru
        _
      %p1250 = scmp.le.s32.totalorder 2, %s9
      // Predicated region
      $region168: #{transformer_forward.12} parent=5 // pred_check
        %p1251 = pneg %p1250
      $region169: #{transformer_forward.12} parent=5 // pred_check_branch
        %1253 = sbr.rel (%p1251) target = $region171
      $region170: #{transformer_forward.12} parent=5 // pred_region
        %s1254 = ssub.s32 %s9, 2
        // Predicated region
        $region172: #{transformer_forward.12} parent=170 // pred_check
          %p1255 = pneg %p143
        $region173: #{transformer_forward.12} parent=170 // pred_check_branch
          %1257 = sbr.rel (%p1255) target = $region175
        $region174: #{transformer_forward.12} parent=170 // pred_region
          %s1258 = smul.u32 2, %s23
          %p1259 = scmp.lt.s32.totalorder %s22, 1
          %s1260 = scalar_select %p1259, %s22, 1
          %p1261 = scmp.lt.s32.totalorder %s1258, 1
          %s1262 = scalar_select %p1261, %s1258, 1
          %s1263 = smul.addr %s1260, 2
          %s1264 = sadd.s32 %s1262, %s1263
          %s1265 = smul.addr %s1264, 4
          %s1266 = scalar_lea.vmem %s3, %s1265
        $region175: #{transformer_forward.12} parent=170 // pred_fallthru
          _
      $region171: #{transformer_forward.12} parent=5 // pred_fallthru
        _
    $region6: #{transformer_forward.12} parent=1 // loop_footer
      %s13 = sadd.s32 1, %s9
    $region7: #{transformer_forward.12} parent=1 // loop_footer_branch
      %8 = sbr.rel target = $region3
    $region8: #{transformer_forward.12} parent=1 // loop_exit
      _

</llo_original>
